<compile_context>
chip_gen: v7x
topology: tpu7x:2x2x1
jax: 0.10.0
libtpu: 0.0.40
codegen_flags: <defaults>
</compile_context>

<pallas_src>
import functools

import jax
import jax.numpy as jnp
import numpy as np
from jax.experimental import pallas as pl
from jax.experimental.pallas import tpu as pltpu

_LANES = 128
_VMEM_LIMIT = 48 * 1024 * 1024  # safe on v5e/v6e (128 MiB) and v7x (64 MiB physical)


def _round_up(x, m):
    return (x + m - 1) // m * m


def _pick_band_height(h, w, target_rows=1024):
    """Band height TH: divides H, TH*W multiple of 8 (sublane), prefer >=2 bands."""
    cands = [t for t in range(1, h) if h % t == 0 and (t * w) % 8 == 0]
    if not cands:
        cands = [t for t in range(1, h + 1) if h % t == 0 and (t * w) % 8 == 0]
    if not cands:
        return h
    return min(cands, key=lambda t: abs(t * w - target_rows))


def _make_bands(a_nhwc, th):
    """[N,H,W,C] -> [N*(H//th), th+2, W+2, C] halo'd row bands ('same' zero pad)."""
    n, h, w, c = a_nhwc.shape
    ap = jnp.pad(a_nhwc, ((0, 0), (1, 1), (1, 1), (0, 0)))
    num_ht = h // th
    bands = jnp.stack([ap[:, i * th:i * th + th + 2] for i in range(num_ht)], axis=1)
    return bands.reshape(n * num_ht, th + 2, w + 2, c)


# ----------------------------- Pass 1: conv + per-tile channel stats ----------


def _conv_stats_kernel(x_ref, w_ref, y_ref, stats_ref, *, th, wd, cin, cp):
    # x_ref:     [1, TH+2, W+2, Cin]  bf16 halo'd input band
    # w_ref:     [9, Cin, CP]         bf16 taps (zero-padded out channels), VMEM-resident
    # y_ref:     [TH*W, CP]           f32 raw conv output tile (lane-dense)
    # stats_ref: [1, 2, CP]           f32 per-tile (sum, sum-of-squares) over rows
    rows = th * wd
    x = x_ref[0]                                            # [TH+2, W+2, Cin]
    acc = jnp.zeros((rows, cp), jnp.float32)
    for dy in range(3):
        for dx in range(3):
            xs = x[dy:dy + th, dx:dx + wd, :].reshape(rows, cin)   # bf16 [rows, Cin]
            acc = acc + jnp.dot(xs, w_ref[3 * dy + dx],
                                preferred_element_type=jnp.float32)
    y_ref[...] = acc
    s = jnp.sum(acc, axis=0, keepdims=True)                  # [1, CP]
    q = jnp.sum(acc * acc, axis=0, keepdims=True)            # [1, CP]
    stats_ref[0, :, :] = jnp.concatenate([s, q], axis=0)     # [2, CP]


def _conv_stats_pallas(xb, w_taps, *, th, wd, cin, cp):
    t = xb.shape[0]                 # number of (batch, band) tiles
    rows = th * wd
    m = t * rows
    kern = functools.partial(_conv_stats_kernel, th=th, wd=wd, cin=cin, cp=cp)
    cost = pl.CostEstimate(
        flops=2 * m * 9 * cin * cp,
        transcendentals=0,
        bytes_accessed=int(xb.size) * 2 + int(w_taps.size) * 2
        + m * cp * 4 + t * 2 * cp * 4,
    )
    return pl.pallas_call(
        kern,
        out_shape=(
            jax.ShapeDtypeStruct((m, cp), jnp.float32),          # raw conv out
            jax.ShapeDtypeStruct((t, 2, cp), jnp.float32),       # per-tile stats
        ),
        grid=(t,),
        in_specs=[
            pl.BlockSpec((1, th + 2, wd + 2, cin), lambda i: (i, 0, 0, 0)),
            pl.BlockSpec((9, cin, cp), lambda i: (0, 0, 0)),     # VMEM-resident weights
        ],
        out_specs=(
            pl.BlockSpec((rows, cp), lambda i: (i, 0)),
            pl.BlockSpec((1, 2, cp), lambda i: (i, 0, 0)),
        ),
        compiler_params=pltpu.CompilerParams(
            dimension_semantics=("parallel",),
            vmem_limit_bytes=_VMEM_LIMIT,
        ),
        cost_estimate=cost,
    )(xb, w_taps)


# ----------------------------- Pass 2: fused BN affine + ReLU -----------------


def _bn_relu_kernel(y_ref, s_ref, b_ref, o_ref):
    # y: [TB, CP] f32, s/b: [1, CP] f32 (scale = g*rsqrt(var+eps), bias = beta - mean*scale)
    o_ref[...] = jnp.maximum(y_ref[...] * s_ref[...] + b_ref[...], 0.0)


def _bn_relu_pallas(y, scale, bias, *, tb):
    m, cp = y.shape
    cost = pl.CostEstimate(flops=3 * m * cp, transcendentals=0,
                           bytes_accessed=2 * m * cp * 4 + 2 * cp * 4)
    return pl.pallas_call(
        _bn_relu_kernel,
        out_shape=jax.ShapeDtypeStruct((m, cp), jnp.float32),
        grid=(m // tb,),
        in_specs=[
            pl.BlockSpec((tb, cp), lambda i: (i, 0)),
            pl.BlockSpec((1, cp), lambda i: (0, 0)),
            pl.BlockSpec((1, cp), lambda i: (0, 0)),
        ],
        out_specs=pl.BlockSpec((tb, cp), lambda i: (i, 0)),
        compiler_params=pltpu.CompilerParams(
            dimension_semantics=("parallel",),
            vmem_limit_bytes=_VMEM_LIMIT,
        ),
        cost_estimate=cost,
    )(y, scale, bias)


# ----------------------------- One Conv->BN->ReLU stage -----------------------


def _conv_bn_relu_stage(a_nhwc, w_taps, gamma, beta, eps):
    """Conv(3x3, 'same', no bias) -> BatchNorm(batch stats) -> ReLU.

    a_nhwc: [N,H,W,Cin] f32; w_taps: [9,Cin,Cout] f32 (tap index = 3*dy+dx);
    gamma/beta: [Cout].  Returns [N,H,W,Cout] f32.
    """
    n, h, w, cin = a_nhwc.shape
    cout = w_taps.shape[-1]
    cp = _round_up(cout, _LANES)
    th = _pick_band_height(h, w)
    assert h % th == 0 and (th * w) % 8 == 0, (h, w, th)
    m = n * h * w

    xb = _make_bands(a_nhwc, th).astype(jnp.bfloat16)            # halo'd bands, bf16
    wp = jnp.zeros((9, cin, cp), jnp.float32).at[:, :, :cout].set(w_taps)
    wp = wp.astype(jnp.bfloat16)                                 # lane-padded bf16 taps

    # Pass 1: raw conv output (pre-BN) + per-tile channel sum / sum-of-squares.
    y, stats = _conv_stats_pallas(xb, wp, th=th, wd=w, cin=cin, cp=cp)

    # Tiny per-channel reduction + folding BN into scale/bias (biased variance,
    # exactly nn.BatchNorm2d train-mode forward).  Padded channels fold to 0.
    tot = jnp.sum(stats, axis=0)                                 # [2, CP]
    mean = tot[0] / m
    var = jnp.maximum(tot[1] / m - mean * mean, 0.0)
    gp = jnp.zeros((cp,), jnp.float32).at[:cout].set(gamma)
    bp = jnp.zeros((cp,), jnp.float32).at[:cout].set(beta)
    scale = gp * jax.lax.rsqrt(var + eps)
    bias = bp - mean * scale

    # Pass 2: fused y*scale + bias, ReLU (tiled, lane-dense).
    z = _bn_relu_pallas(y, scale.reshape(1, cp), bias.reshape(1, cp), tb=th * w)
    return z[:, :cout].reshape(n, h, w, cout)


def conv_block_forward(x_nchw, params, eps=1e-5):
    """ConvBlock forward. x: [N,Cin,H,W] f32 -> [N,Cout,H,W] f32."""
    w1, g1, b1, w2, g2, b2 = params          # w*: [3,3,Ci,Co] HWIO; g/b: [Co]
    n, cin, h, w = x_nchw.shape
    cout = w1.shape[-1]
    x = jnp.transpose(x_nchw, (0, 2, 3, 1))                      # NHWC
    a1 = _conv_bn_relu_stage(x, w1.reshape(9, cin, cout), g1, b1, eps)
    a2 = _conv_bn_relu_stage(a1, w2.reshape(9, cout, cout), g2, b2, eps)
    return jnp.transpose(a2, (0, 3, 1, 2))                       # back to NCHW


# ----------------------------- Pure-JAX reference ------------------------------


def _reference_forward(x_nchw, params, eps=1e-5):
    w1, g1, b1, w2, g2, b2 = params
    dn = ("NHWC", "HWIO", "NHWC")

    def stage(x, w, g, b):
        y = jax.lax.conv_general_dilated(
            x, w, window_strides=(1, 1), padding="SAME", dimension_numbers=dn)
        mean = jnp.mean(y, axis=(0, 1, 2), keepdims=True)
        var = jnp.mean(jnp.square(y - mean), axis=(0, 1, 2), keepdims=True)
        y = (y - mean) * jax.lax.rsqrt(var + eps)
        y = y * g.reshape(1, 1, 1, -1) + b.reshape(1, 1, 1, -1)
        return jnp.maximum(y, 0.0)

    x = jnp.transpose(x_nchw, (0, 2, 3, 1))
    x = stage(x, w1, g1, b1)
    x = stage(x, w2, g2, b2)
    return jnp.transpose(x, (0, 3, 1, 2))


if __name__ == "__main__":
    key = jax.random.PRNGKey(0)
    N, Cin, H, W = 2, 4, 16, 16
    Cout = 8
    k_x, k_w1, k_w2 = jax.random.split(key, 3)

    x = jax.random.normal(k_x, (N, Cin, H, W), dtype=jnp.float32)

    # Deterministic synthetic params: conv weights HWIO, BN gamma=1 / beta=0.
    w1 = jax.random.normal(k_w1, (3, 3, Cin, Cout), dtype=jnp.float32) * (
        1.0 / np.sqrt(9 * Cin))
    w2 = jax.random.normal(k_w2, (3, 3, Cout, Cout), dtype=jnp.float32) * (
        1.0 / np.sqrt(9 * Cout))
    g1 = jnp.ones((Cout,), jnp.float32)
    b1 = jnp.zeros((Cout,), jnp.float32)
    g2 = jnp.ones((Cout,), jnp.float32)
    b2 = jnp.zeros((Cout,), jnp.float32)
    params = (w1, g1, b1, w2, g2, b2)

    out = jax.block_until_ready(jax.jit(conv_block_forward)(x, params))
    ref = jax.block_until_ready(jax.jit(_reference_forward)(x, params))

    assert out.shape == (N, Cout, H, W), out.shape
    # bf16 MXU operands (f32 accumulation) vs f32 reference -> loosened tolerance.
    np.testing.assert_allclose(np.asarray(out), np.asarray(ref), rtol=5e-2, atol=5e-2)

    print("KERNEL_OK")
</pallas_src>

<mosaic_0001>
module attributes {stable_mosaic.version = 11 : i64} {
  func.func @_bn_relu_kernel(%arg0: i32, %arg1: memref<128x128xf32, #tpu.memory_space<vmem>>, %arg2: memref<1x128xf32, #tpu.memory_space<vmem>>, %arg3: memref<1x128xf32, #tpu.memory_space<vmem>>, %arg4: memref<128x128xf32, #tpu.memory_space<vmem>>) attributes {dimension_semantics = [#tpu.dimension_semantics<parallel>], iteration_bounds = array<i64: 4>, scalar_prefetch = 0 : i64, scratch_operands = 0 : i64, tpu.core_type = #tpu.core_type<tc>, window_params = [{transform_indices = @transform_0, window_bounds = array<i64: 128, 128>}, {pipeline_mode = #tpu.pipeline_mode<synchronous>, transform_indices = @transform_1, window_bounds = array<i64: 1, 128>}, {pipeline_mode = #tpu.pipeline_mode<synchronous>, transform_indices = @transform_2, window_bounds = array<i64: 1, 128>}, {transform_indices = @transform_3, window_bounds = array<i64: 128, 128>}]} {
    %c0 = arith.constant 0 : index
    %c0_0 = arith.constant 0 : index
    %0 = vector.load %arg1[%c0, %c0_0] : memref<128x128xf32, #tpu.memory_space<vmem>>, vector<128x128xf32>
    %c0_1 = arith.constant 0 : index
    %c0_2 = arith.constant 0 : index
    %1 = vector.load %arg2[%c0_1, %c0_2] : memref<1x128xf32, #tpu.memory_space<vmem>>, vector<1x128xf32>
    %2 = vector.broadcast %1 : vector<1x128xf32> to vector<128x128xf32>
    %3 = arith.mulf %0, %2 : vector<128x128xf32>
    %c0_3 = arith.constant 0 : index
    %c0_4 = arith.constant 0 : index
    %4 = vector.load %arg3[%c0_3, %c0_4] : memref<1x128xf32, #tpu.memory_space<vmem>>, vector<1x128xf32>
    %5 = vector.broadcast %4 : vector<1x128xf32> to vector<128x128xf32>
    %6 = arith.addf %3, %5 : vector<128x128xf32>
    %cst = arith.constant 0.000000e+00 : f32
    %7 = vector.broadcast %cst : f32 to vector<128x128xf32>
    %8 = arith.maximumf %6, %7 : vector<128x128xf32>
    %c0_5 = arith.constant 0 : index
    %c0_6 = arith.constant 0 : index
    %9 = vector.load %arg4[%c0_5, %c0_6] : memref<128x128xf32, #tpu.memory_space<vmem>>, vector<128x128xf32>
    tpu.vector_store %arg4[%c0_5, %c0_6], %8 {strides = array<i32>} : memref<128x128xf32, #tpu.memory_space<vmem>>, vector<128x128xf32>,
    return
  }
  func.func @transform_0(%arg0: i32) -> (i32, i32) {
    %c0_i32 = arith.constant 0 : i32
    %c0_i32_0 = arith.constant 0 : i32
    return %arg0, %c0_i32 : i32, i32
  }
  func.func @transform_1(%arg0: i32) -> (i32, i32) {
    %c0_i32 = arith.constant 0 : i32
    %c0_i32_0 = arith.constant 0 : i32
    %c0_i32_1 = arith.constant 0 : i32
    return %c0_i32, %c0_i32_0 : i32, i32
  }
  func.func @transform_2(%arg0: i32) -> (i32, i32) {
    %c0_i32 = arith.constant 0 : i32
    %c0_i32_0 = arith.constant 0 : i32
    %c0_i32_1 = arith.constant 0 : i32
    return %c0_i32, %c0_i32_0 : i32, i32
  }
  func.func @transform_3(%arg0: i32) -> (i32, i32) {
    %c0_i32 = arith.constant 0 : i32
    %c0_i32_0 = arith.constant 0 : i32
    return %arg0, %c0_i32 : i32, i32
  }
}

module attributes {stable_mosaic.version = 11 : i64} {
  func.func @_conv_stats_kernel(%arg0: i32, %arg1: memref<1x10x18x4xbf16, #tpu.memory_space<vmem>>, %arg2: memref<9x4x128xbf16, #tpu.memory_space<vmem>>, %arg3: memref<128x128xf32, #tpu.memory_space<vmem>>, %arg4: memref<1x2x128xf32, #tpu.memory_space<vmem>>) attributes {dimension_semantics = [#tpu.dimension_semantics<parallel>], iteration_bounds = array<i64: 4>, scalar_prefetch = 0 : i64, scratch_operands = 0 : i64, tpu.core_type = #tpu.core_type<tc>, window_params = [{transform_indices = @transform_0, window_bounds = array<i64: 1, 10, 18, 4>}, {pipeline_mode = #tpu.pipeline_mode<synchronous>, transform_indices = @transform_1, window_bounds = array<i64: 9, 4, 128>}, {transform_indices = @transform_2, window_bounds = array<i64: 128, 128>}, {transform_indices = @transform_3, window_bounds = array<i64: 1, 2, 128>}]} {
    %c0 = arith.constant 0 : index
    %c0_0 = arith.constant 0 : index
    %c0_1 = arith.constant 0 : index
    %c0_2 = arith.constant 0 : index
    %0 = vector.load %arg1[%c0, %c0_0, %c0_1, %c0_2] : memref<1x10x18x4xbf16, #tpu.memory_space<vmem>>, vector<1x10x18x4xbf16>
    %1 = vector.shape_cast %0 : vector<1x10x18x4xbf16> to vector<10x18x4xbf16>
    %cst = arith.constant 0.000000e+00 : f32
    %2 = vector.broadcast %cst : f32 to vector<128x128xf32>
    %3 = vector.extract_strided_slice %1 {offsets = [0, 0, 0], sizes = [8, 16, 4], strides = [1, 1, 1]} : vector<10x18x4xbf16> to vector<8x16x4xbf16>
    %4 = vector.shape_cast %3 : vector<8x16x4xbf16> to vector<128x4xbf16>
    %c0_3 = arith.constant 0 : index
    %c0_4 = arith.constant 0 : index
    %c0_5 = arith.constant 0 : index
    %5 = vector.load %arg2[%c0_3, %c0_4, %c0_5] : memref<9x4x128xbf16, #tpu.memory_space<vmem>>, vector<1x4x128xbf16>
    %6 = vector.shape_cast %5 : vector<1x4x128xbf16> to vector<4x128xbf16>
    %cst_6 = arith.constant dense<0.000000e+00> : vector<128x128xf32>
    %7 = tpu.matmul %4, %6, %cst_6 {dimension_numbers = #tpu.dot_dimension_numbers<[1], [0], [0], [1], [0, 0, 1, 1], [], []>} : vector<128x4xbf16>, vector<4x128xbf16>, vector<128x128xf32> -> vector<128x128xf32>
    %8 = arith.addf %2, %7 : vector<128x128xf32>
    %9 = vector.extract_strided_slice %1 {offsets = [0, 1, 0], sizes = [8, 16, 4], strides = [1, 1, 1]} : vector<10x18x4xbf16> to vector<8x16x4xbf16>
    %10 = vector.shape_cast %9 : vector<8x16x4xbf16> to vector<128x4xbf16>
    %c1 = arith.constant 1 : index
    %c0_7 = arith.constant 0 : index
    %c0_8 = arith.constant 0 : index
    %11 = vector.load %arg2[%c1, %c0_7, %c0_8] : memref<9x4x128xbf16, #tpu.memory_space<vmem>>, vector<1x4x128xbf16>
    %12 = vector.shape_cast %11 : vector<1x4x128xbf16> to vector<4x128xbf16>
    %cst_9 = arith.constant dense<0.000000e+00> : vector<128x128xf32>
    %13 = tpu.matmul %10, %12, %cst_9 {dimension_numbers = #tpu.dot_dimension_numbers<[1], [0], [0], [1], [0, 0, 1, 1], [], []>} : vector<128x4xbf16>, vector<4x128xbf16>, vector<128x128xf32> -> vector<128x128xf32>
    %14 = arith.addf %8, %13 : vector<128x128xf32>
    %15 = vector.extract_strided_slice %1 {offsets = [0, 2, 0], sizes = [8, 16, 4], strides = [1, 1, 1]} : vector<10x18x4xbf16> to vector<8x16x4xbf16>
    %16 = vector.shape_cast %15 : vector<8x16x4xbf16> to vector<128x4xbf16>
    %c2 = arith.constant 2 : index
    %c0_10 = arith.constant 0 : index
    %c0_11 = arith.constant 0 : index
    %17 = vector.load %arg2[%c2, %c0_10, %c0_11] : memref<9x4x128xbf16, #tpu.memory_space<vmem>>, vector<1x4x128xbf16>
    %18 = vector.shape_cast %17 : vector<1x4x128xbf16> to vector<4x128xbf16>
    %cst_12 = arith.constant dense<0.000000e+00> : vector<128x128xf32>
    %19 = tpu.matmul %16, %18, %cst_12 {dimension_numbers = #tpu.dot_dimension_numbers<[1], [0], [0], [1], [0, 0, 1, 1], [], []>} : vector<128x4xbf16>, vector<4x128xbf16>, vector<128x128xf32> -> vector<128x128xf32>
    %20 = arith.addf %14, %19 : vector<128x128xf32>
    %21 = vector.extract_strided_slice %1 {offsets = [1, 0, 0], sizes = [8, 16, 4], strides = [1, 1, 1]} : vector<10x18x4xbf16> to vector<8x16x4xbf16>
    %22 = vector.shape_cast %21 : vector<8x16x4xbf16> to vector<128x4xbf16>
    %c3 = arith.constant 3 : index
    %c0_13 = arith.constant 0 : index
    %c0_14 = arith.constant 0 : index
    %23 = vector.load %arg2[%c3, %c0_13, %c0_14] : memref<9x4x128xbf16, #tpu.memory_space<vmem>>, vector<1x4x128xbf16>
    %24 = vector.shape_cast %23 : vector<1x4x128xbf16> to vector<4x128xbf16>
    %cst_15 = arith.constant dense<0.000000e+00> : vector<128x128xf32>
    %25 = tpu.matmul %22, %24, %cst_15 {dimension_numbers = #tpu.dot_dimension_numbers<[1], [0], [0], [1], [0, 0, 1, 1], [], []>} : vector<128x4xbf16>, vector<4x128xbf16>, vector<128x128xf32> -> vector<128x128xf32>
    %26 = arith.addf %20, %25 : vector<128x128xf32>
    %27 = vector.extract_strided_slice %1 {offsets = [1, 1, 0], sizes = [8, 16, 4], strides = [1, 1, 1]} : vector<10x18x4xbf16> to vector<8x16x4xbf16>
    %28 = vector.shape_cast %27 : vector<8x16x4xbf16> to vector<128x4xbf16>
    %c4 = arith.constant 4 : index
    %c0_16 = arith.constant 0 : index
    %c0_17 = arith.constant 0 : index
    %29 = vector.load %arg2[%c4, %c0_16, %c0_17] : memref<9x4x128xbf16, #tpu.memory_space<vmem>>, vector<1x4x128xbf16>
    %30 = vector.shape_cast %29 : vector<1x4x128xbf16> to vector<4x128xbf16>
    %cst_18 = arith.constant dense<0.000000e+00> : vector<128x128xf32>
    %31 = tpu.matmul %28, %30, %cst_18 {dimension_numbers = #tpu.dot_dimension_numbers<[1], [0], [0], [1], [0, 0, 1, 1], [], []>} : vector<128x4xbf16>, vector<4x128xbf16>, vector<128x128xf32> -> vector<128x128xf32>
    %32 = arith.addf %26, %31 : vector<128x128xf32>
    %33 = vector.extract_strided_slice %1 {offsets = [1, 2, 0], sizes = [8, 16, 4], strides = [1, 1, 1]} : vector<10x18x4xbf16> to vector<8x16x4xbf16>
    %34 = vector.shape_cast %33 : vector<8x16x4xbf16> to vector<128x4xbf16>
    %c5 = arith.constant 5 : index
    %c0_19 = arith.constant 0 : index
    %c0_20 = arith.constant 0 : index
    %35 = vector.load %arg2[%c5, %c0_19, %c0_20] : memref<9x4x128xbf16, #tpu.memory_space<vmem>>, vector<1x4x128xbf16>
    %36 = vector.shape_cast %35 : vector<1x4x128xbf16> to vector<4x128xbf16>
    %cst_21 = arith.constant dense<0.000000e+00> : vector<128x128xf32>
    %37 = tpu.matmul %34, %36, %cst_21 {dimension_numbers = #tpu.dot_dimension_numbers<[1], [0], [0], [1], [0, 0, 1, 1], [], []>} : vector<128x4xbf16>, vector<4x128xbf16>, vector<128x128xf32> -> vector<128x128xf32>
    %38 = arith.addf %32, %37 : vector<128x128xf32>
    %39 = vector.extract_strided_slice %1 {offsets = [2, 0, 0], sizes = [8, 16, 4], strides = [1, 1, 1]} : vector<10x18x4xbf16> to vector<8x16x4xbf16>
    %40 = vector.shape_cast %39 : vector<8x16x4xbf16> to vector<128x4xbf16>
    %c6 = arith.constant 6 : index
    %c0_22 = arith.constant 0 : index
    %c0_23 = arith.constant 0 : index
    %41 = vector.load %arg2[%c6, %c0_22, %c0_23] : memref<9x4x128xbf16, #tpu.memory_space<vmem>>, vector<1x4x128xbf16>
    %42 = vector.shape_cast %41 : vector<1x4x128xbf16> to vector<4x128xbf16>
    %cst_24 = arith.constant dense<0.000000e+00> : vector<128x128xf32>
    %43 = tpu.matmul %40, %42, %cst_24 {dimension_numbers = #tpu.dot_dimension_numbers<[1], [0], [0], [1], [0, 0, 1, 1], [], []>} : vector<128x4xbf16>, vector<4x128xbf16>, vector<128x128xf32> -> vector<128x128xf32>
    %44 = arith.addf %38, %43 : vector<128x128xf32>
    %45 = vector.extract_strided_slice %1 {offsets = [2, 1, 0], sizes = [8, 16, 4], strides = [1, 1, 1]} : vector<10x18x4xbf16> to vector<8x16x4xbf16>
    %46 = vector.shape_cast %45 : vector<8x16x4xbf16> to vector<128x4xbf16>
    %c7 = arith.constant 7 : index
    %c0_25 = arith.constant 0 : index
    %c0_26 = arith.constant 0 : index
    %47 = vector.load %arg2[%c7, %c0_25, %c0_26] : memref<9x4x128xbf16, #tpu.memory_space<vmem>>, vector<1x4x128xbf16>
    %48 = vector.shape_cast %47 : vector<1x4x128xbf16> to vector<4x128xbf16>
    %cst_27 = arith.constant dense<0.000000e+00> : vector<128x128xf32>
    %49 = tpu.matmul %46, %48, %cst_27 {dimension_numbers = #tpu.dot_dimension_numbers<[1], [0], [0], [1], [0, 0, 1, 1], [], []>} : vector<128x4xbf16>, vector<4x128xbf16>, vector<128x128xf32> -> vector<128x128xf32>
    %50 = arith.addf %44, %49 : vector<128x128xf32>
    %51 = vector.extract_strided_slice %1 {offsets = [2, 2, 0], sizes = [8, 16, 4], strides = [1, 1, 1]} : vector<10x18x4xbf16> to vector<8x16x4xbf16>
    %52 = vector.shape_cast %51 : vector<8x16x4xbf16> to vector<128x4xbf16>
    %c8 = arith.constant 8 : index
    %c0_28 = arith.constant 0 : index
    %c0_29 = arith.constant 0 : index
    %53 = vector.load %arg2[%c8, %c0_28, %c0_29] : memref<9x4x128xbf16, #tpu.memory_space<vmem>>, vector<1x4x128xbf16>
    %54 = vector.shape_cast %53 : vector<1x4x128xbf16> to vector<4x128xbf16>
    %cst_30 = arith.constant dense<0.000000e+00> : vector<128x128xf32>
    %55 = tpu.matmul %52, %54, %cst_30 {dimension_numbers = #tpu.dot_dimension_numbers<[1], [0], [0], [1], [0, 0, 1, 1], [], []>} : vector<128x4xbf16>, vector<4x128xbf16>, vector<128x128xf32> -> vector<128x128xf32>
    %56 = arith.addf %50, %55 : vector<128x128xf32>
    %c0_31 = arith.constant 0 : index
    %c0_32 = arith.constant 0 : index
    %57 = vector.load %arg3[%c0_31, %c0_32] : memref<128x128xf32, #tpu.memory_space<vmem>>, vector<128x128xf32>
    tpu.vector_store %arg3[%c0_31, %c0_32], %56 {strides = array<i32>} : memref<128x128xf32, #tpu.memory_space<vmem>>, vector<128x128xf32>,
    %cst_33 = arith.constant dense<0.000000e+00> : vector<128xf32>
    %58 = vector.multi_reduction <add>, %56, %cst_33 [0] : vector<128x128xf32> to vector<128xf32>
    %59 = vector.shape_cast %58 : vector<128xf32> to vector<1x128xf32>
    %60 = arith.mulf %56, %56 : vector<128x128xf32>
    %cst_34 = arith.constant dense<0.000000e+00> : vector<128xf32>
    %61 = vector.multi_reduction <add>, %60, %cst_34 [0] : vector<128x128xf32> to vector<128xf32>
    %62 = vector.shape_cast %61 : vector<128xf32> to vector<1x128xf32>
    %63 = tpu.concatenate %59, %62 in 0 : vector<1x128xf32>, vector<1x128xf32> -> vector<2x128xf32>
    %c0_35 = arith.constant 0 : index
    %c0_36 = arith.constant 0 : index
    %c0_37 = arith.constant 0 : index
    %64 = vector.load %arg4[%c0_35, %c0_36, %c0_37] : memref<1x2x128xf32, #tpu.memory_space<vmem>>, vector<1x2x128xf32>
    %65 = vector.shape_cast %64 : vector<1x2x128xf32> to vector<2x128xf32>
    %66 = vector.shape_cast %63 : vector<2x128xf32> to vector<1x2x128xf32>
    tpu.vector_store %arg4[%c0_35, %c0_36, %c0_37], %66 {strides = array<i32>} : memref<1x2x128xf32, #tpu.memory_space<vmem>>, vector<1x2x128xf32>,
    return
  }
  func.func @transform_0(%arg0: i32) -> (i32, i32, i32, i32) {
    %c0_i32 = arith.constant 0 : i32
    %c0_i32_0 = arith.constant 0 : i32
    %c0_i32_1 = arith.constant 0 : i32
    %c0_i32_2 = arith.constant 0 : i32
    return %arg0, %c0_i32, %c0_i32_0, %c0_i32_1 : i32, i32, i32, i32
  }
  func.func @transform_1(%arg0: i32) -> (i32, i32, i32) {
    %c0_i32 = arith.constant 0 : i32
    %c0_i32_0 = arith.constant 0 : i32
    %c0_i32_1 = arith.constant 0 : i32
    %c0_i32_2 = arith.constant 0 : i32
    return %c0_i32, %c0_i32_0, %c0_i32_1 : i32, i32, i32
  }
  func.func @transform_2(%arg0: i32) -> (i32, i32) {
    %c0_i32 = arith.constant 0 : i32
    %c0_i32_0 = arith.constant 0 : i32
    return %arg0, %c0_i32 : i32, i32
  }
  func.func @transform_3(%arg0: i32) -> (i32, i32, i32) {
    %c0_i32 = arith.constant 0 : i32
    %c0_i32_0 = arith.constant 0 : i32
    %c0_i32_1 = arith.constant 0 : i32
    return %arg0, %c0_i32, %c0_i32_0 : i32, i32, i32
  }
}

module attributes {stable_mosaic.version = 11 : i64} {
  func.func @_conv_stats_kernel(%arg0: i32, %arg1: memref<1x10x18x8xbf16, #tpu.memory_space<vmem>>, %arg2: memref<9x8x128xbf16, #tpu.memory_space<vmem>>, %arg3: memref<128x128xf32, #tpu.memory_space<vmem>>, %arg4: memref<1x2x128xf32, #tpu.memory_space<vmem>>) attributes {dimension_semantics = [#tpu.dimension_semantics<parallel>], iteration_bounds = array<i64: 4>, scalar_prefetch = 0 : i64, scratch_operands = 0 : i64, tpu.core_type = #tpu.core_type<tc>, window_params = [{transform_indices = @transform_0, window_bounds = array<i64: 1, 10, 18, 8>}, {pipeline_mode = #tpu.pipeline_mode<synchronous>, transform_indices = @transform_1, window_bounds = array<i64: 9, 8, 128>}, {transform_indices = @transform_2, window_bounds = array<i64: 128, 128>}, {transform_indices = @transform_3, window_bounds = array<i64: 1, 2, 128>}]} {
    %c0 = arith.constant 0 : index
    %c0_0 = arith.constant 0 : index
    %c0_1 = arith.constant 0 : index
    %c0_2 = arith.constant 0 : index
    %0 = vector.load %arg1[%c0, %c0_0, %c0_1, %c0_2] : memref<1x10x18x8xbf16, #tpu.memory_space<vmem>>, vector<1x10x18x8xbf16>
    %1 = vector.shape_cast %0 : vector<1x10x18x8xbf16> to vector<10x18x8xbf16>
    %cst = arith.constant 0.000000e+00 : f32
    %2 = vector.broadcast %cst : f32 to vector<128x128xf32>
    %3 = vector.extract_strided_slice %1 {offsets = [0, 0, 0], sizes = [8, 16, 8], strides = [1, 1, 1]} : vector<10x18x8xbf16> to vector<8x16x8xbf16>
    %4 = vector.shape_cast %3 : vector<8x16x8xbf16> to vector<128x8xbf16>
    %c0_3 = arith.constant 0 : index
    %c0_4 = arith.constant 0 : index
    %c0_5 = arith.constant 0 : index
    %5 = vector.load %arg2[%c0_3, %c0_4, %c0_5] : memref<9x8x128xbf16, #tpu.memory_space<vmem>>, vector<1x8x128xbf16>
    %6 = vector.shape_cast %5 : vector<1x8x128xbf16> to vector<8x128xbf16>
    %cst_6 = arith.constant dense<0.000000e+00> : vector<128x128xf32>
    %7 = tpu.matmul %4, %6, %cst_6 {dimension_numbers = #tpu.dot_dimension_numbers<[1], [0], [0], [1], [0, 0, 1, 1], [], []>} : vector<128x8xbf16>, vector<8x128xbf16>, vector<128x128xf32> -> vector<128x128xf32>
    %8 = arith.addf %2, %7 : vector<128x128xf32>
    %9 = vector.extract_strided_slice %1 {offsets = [0, 1, 0], sizes = [8, 16, 8], strides = [1, 1, 1]} : vector<10x18x8xbf16> to vector<8x16x8xbf16>
    %10 = vector.shape_cast %9 : vector<8x16x8xbf16> to vector<128x8xbf16>
    %c1 = arith.constant 1 : index
    %c0_7 = arith.constant 0 : index
    %c0_8 = arith.constant 0 : index
    %11 = vector.load %arg2[%c1, %c0_7, %c0_8] : memref<9x8x128xbf16, #tpu.memory_space<vmem>>, vector<1x8x128xbf16>
    %12 = vector.shape_cast %11 : vector<1x8x128xbf16> to vector<8x128xbf16>
    %cst_9 = arith.constant dense<0.000000e+00> : vector<128x128xf32>
    %13 = tpu.matmul %10, %12, %cst_9 {dimension_numbers = #tpu.dot_dimension_numbers<[1], [0], [0], [1], [0, 0, 1, 1], [], []>} : vector<128x8xbf16>, vector<8x128xbf16>, vector<128x128xf32> -> vector<128x128xf32>
    %14 = arith.addf %8, %13 : vector<128x128xf32>
    %15 = vector.extract_strided_slice %1 {offsets = [0, 2, 0], sizes = [8, 16, 8], strides = [1, 1, 1]} : vector<10x18x8xbf16> to vector<8x16x8xbf16>
    %16 = vector.shape_cast %15 : vector<8x16x8xbf16> to vector<128x8xbf16>
    %c2 = arith.constant 2 : index
    %c0_10 = arith.constant 0 : index
    %c0_11 = arith.constant 0 : index
    %17 = vector.load %arg2[%c2, %c0_10, %c0_11] : memref<9x8x128xbf16, #tpu.memory_space<vmem>>, vector<1x8x128xbf16>
    %18 = vector.shape_cast %17 : vector<1x8x128xbf16> to vector<8x128xbf16>
    %cst_12 = arith.constant dense<0.000000e+00> : vector<128x128xf32>
    %19 = tpu.matmul %16, %18, %cst_12 {dimension_numbers = #tpu.dot_dimension_numbers<[1], [0], [0], [1], [0, 0, 1, 1], [], []>} : vector<128x8xbf16>, vector<8x128xbf16>, vector<128x128xf32> -> vector<128x128xf32>
    %20 = arith.addf %14, %19 : vector<128x128xf32>
    %21 = vector.extract_strided_slice %1 {offsets = [1, 0, 0], sizes = [8, 16, 8], strides = [1, 1, 1]} : vector<10x18x8xbf16> to vector<8x16x8xbf16>
    %22 = vector.shape_cast %21 : vector<8x16x8xbf16> to vector<128x8xbf16>
    %c3 = arith.constant 3 : index
    %c0_13 = arith.constant 0 : index
    %c0_14 = arith.constant 0 : index
    %23 = vector.load %arg2[%c3, %c0_13, %c0_14] : memref<9x8x128xbf16, #tpu.memory_space<vmem>>, vector<1x8x128xbf16>
    %24 = vector.shape_cast %23 : vector<1x8x128xbf16> to vector<8x128xbf16>
    %cst_15 = arith.constant dense<0.000000e+00> : vector<128x128xf32>
    %25 = tpu.matmul %22, %24, %cst_15 {dimension_numbers = #tpu.dot_dimension_numbers<[1], [0], [0], [1], [0, 0, 1, 1], [], []>} : vector<128x8xbf16>, vector<8x128xbf16>, vector<128x128xf32> -> vector<128x128xf32>
    %26 = arith.addf %20, %25 : vector<128x128xf32>
    %27 = vector.extract_strided_slice %1 {offsets = [1, 1, 0], sizes = [8, 16, 8], strides = [1, 1, 1]} : vector<10x18x8xbf16> to vector<8x16x8xbf16>
    %28 = vector.shape_cast %27 : vector<8x16x8xbf16> to vector<128x8xbf16>
    %c4 = arith.constant 4 : index
    %c0_16 = arith.constant 0 : index
    %c0_17 = arith.constant 0 : index
    %29 = vector.load %arg2[%c4, %c0_16, %c0_17] : memref<9x8x128xbf16, #tpu.memory_space<vmem>>, vector<1x8x128xbf16>
    %30 = vector.shape_cast %29 : vector<1x8x128xbf16> to vector<8x128xbf16>
    %cst_18 = arith.constant dense<0.000000e+00> : vector<128x128xf32>
    %31 = tpu.matmul %28, %30, %cst_18 {dimension_numbers = #tpu.dot_dimension_numbers<[1], [0], [0], [1], [0, 0, 1, 1], [], []>} : vector<128x8xbf16>, vector<8x128xbf16>, vector<128x128xf32> -> vector<128x128xf32>
    %32 = arith.addf %26, %31 : vector<128x128xf32>
    %33 = vector.extract_strided_slice %1 {offsets = [1, 2, 0], sizes = [8, 16, 8], strides = [1, 1, 1]} : vector<10x18x8xbf16> to vector<8x16x8xbf16>
    %34 = vector.shape_cast %33 : vector<8x16x8xbf16> to vector<128x8xbf16>
    %c5 = arith.constant 5 : index
    %c0_19 = arith.constant 0 : index
    %c0_20 = arith.constant 0 : index
    %35 = vector.load %arg2[%c5, %c0_19, %c0_20] : memref<9x8x128xbf16, #tpu.memory_space<vmem>>, vector<1x8x128xbf16>
    %36 = vector.shape_cast %35 : vector<1x8x128xbf16> to vector<8x128xbf16>
    %cst_21 = arith.constant dense<0.000000e+00> : vector<128x128xf32>
    %37 = tpu.matmul %34, %36, %cst_21 {dimension_numbers = #tpu.dot_dimension_numbers<[1], [0], [0], [1], [0, 0, 1, 1], [], []>} : vector<128x8xbf16>, vector<8x128xbf16>, vector<128x128xf32> -> vector<128x128xf32>
    %38 = arith.addf %32, %37 : vector<128x128xf32>
    %39 = vector.extract_strided_slice %1 {offsets = [2, 0, 0], sizes = [8, 16, 8], strides = [1, 1, 1]} : vector<10x18x8xbf16> to vector<8x16x8xbf16>
    %40 = vector.shape_cast %39 : vector<8x16x8xbf16> to vector<128x8xbf16>
    %c6 = arith.constant 6 : index
    %c0_22 = arith.constant 0 : index
    %c0_23 = arith.constant 0 : index
    %41 = vector.load %arg2[%c6, %c0_22, %c0_23] : memref<9x8x128xbf16, #tpu.memory_space<vmem>>, vector<1x8x128xbf16>
    %42 = vector.shape_cast %41 : vector<1x8x128xbf16> to vector<8x128xbf16>
    %cst_24 = arith.constant dense<0.000000e+00> : vector<128x128xf32>
    %43 = tpu.matmul %40, %42, %cst_24 {dimension_numbers = #tpu.dot_dimension_numbers<[1], [0], [0], [1], [0, 0, 1, 1], [], []>} : vector<128x8xbf16>, vector<8x128xbf16>, vector<128x128xf32> -> vector<128x128xf32>
    %44 = arith.addf %38, %43 : vector<128x128xf32>
    %45 = vector.extract_strided_slice %1 {offsets = [2, 1, 0], sizes = [8, 16, 8], strides = [1, 1, 1]} : vector<10x18x8xbf16> to vector<8x16x8xbf16>
    %46 = vector.shape_cast %45 : vector<8x16x8xbf16> to vector<128x8xbf16>
    %c7 = arith.constant 7 : index
    %c0_25 = arith.constant 0 : index
    %c0_26 = arith.constant 0 : index
    %47 = vector.load %arg2[%c7, %c0_25, %c0_26] : memref<9x8x128xbf16, #tpu.memory_space<vmem>>, vector<1x8x128xbf16>
    %48 = vector.shape_cast %47 : vector<1x8x128xbf16> to vector<8x128xbf16>
    %cst_27 = arith.constant dense<0.000000e+00> : vector<128x128xf32>
    %49 = tpu.matmul %46, %48, %cst_27 {dimension_numbers = #tpu.dot_dimension_numbers<[1], [0], [0], [1], [0, 0, 1, 1], [], []>} : vector<128x8xbf16>, vector<8x128xbf16>, vector<128x128xf32> -> vector<128x128xf32>
    %50 = arith.addf %44, %49 : vector<128x128xf32>
    %51 = vector.extract_strided_slice %1 {offsets = [2, 2, 0], sizes = [8, 16, 8], strides = [1, 1, 1]} : vector<10x18x8xbf16> to vector<8x16x8xbf16>
    %52 = vector.shape_cast %51 : vector<8x16x8xbf16> to vector<128x8xbf16>
    %c8 = arith.constant 8 : index
    %c0_28 = arith.constant 0 : index
    %c0_29 = arith.constant 0 : index
    %53 = vector.load %arg2[%c8, %c0_28, %c0_29] : memref<9x8x128xbf16, #tpu.memory_space<vmem>>, vector<1x8x128xbf16>
    %54 = vector.shape_cast %53 : vector<1x8x128xbf16> to vector<8x128xbf16>
    %cst_30 = arith.constant dense<0.000000e+00> : vector<128x128xf32>
    %55 = tpu.matmul %52, %54, %cst_30 {dimension_numbers = #tpu.dot_dimension_numbers<[1], [0], [0], [1], [0, 0, 1, 1], [], []>} : vector<128x8xbf16>, vector<8x128xbf16>, vector<128x128xf32> -> vector<128x128xf32>
    %56 = arith.addf %50, %55 : vector<128x128xf32>
    %c0_31 = arith.constant 0 : index
    %c0_32 = arith.constant 0 : index
    %57 = vector.load %arg3[%c0_31, %c0_32] : memref<128x128xf32, #tpu.memory_space<vmem>>, vector<128x128xf32>
    tpu.vector_store %arg3[%c0_31, %c0_32], %56 {strides = array<i32>} : memref<128x128xf32, #tpu.memory_space<vmem>>, vector<128x128xf32>,
    %cst_33 = arith.constant dense<0.000000e+00> : vector<128xf32>
    %58 = vector.multi_reduction <add>, %56, %cst_33 [0] : vector<128x128xf32> to vector<128xf32>
    %59 = vector.shape_cast %58 : vector<128xf32> to vector<1x128xf32>
    %60 = arith.mulf %56, %56 : vector<128x128xf32>
    %cst_34 = arith.constant dense<0.000000e+00> : vector<128xf32>
    %61 = vector.multi_reduction <add>, %60, %cst_34 [0] : vector<128x128xf32> to vector<128xf32>
    %62 = vector.shape_cast %61 : vector<128xf32> to vector<1x128xf32>
    %63 = tpu.concatenate %59, %62 in 0 : vector<1x128xf32>, vector<1x128xf32> -> vector<2x128xf32>
    %c0_35 = arith.constant 0 : index
    %c0_36 = arith.constant 0 : index
    %c0_37 = arith.constant 0 : index
    %64 = vector.load %arg4[%c0_35, %c0_36, %c0_37] : memref<1x2x128xf32, #tpu.memory_space<vmem>>, vector<1x2x128xf32>
    %65 = vector.shape_cast %64 : vector<1x2x128xf32> to vector<2x128xf32>
    %66 = vector.shape_cast %63 : vector<2x128xf32> to vector<1x2x128xf32>
    tpu.vector_store %arg4[%c0_35, %c0_36, %c0_37], %66 {strides = array<i32>} : memref<1x2x128xf32, #tpu.memory_space<vmem>>, vector<1x2x128xf32>,
    return
  }
  func.func @transform_0(%arg0: i32) -> (i32, i32, i32, i32) {
    %c0_i32 = arith.constant 0 : i32
    %c0_i32_0 = arith.constant 0 : i32
    %c0_i32_1 = arith.constant 0 : i32
    %c0_i32_2 = arith.constant 0 : i32
    return %arg0, %c0_i32, %c0_i32_0, %c0_i32_1 : i32, i32, i32, i32
  }
  func.func @transform_1(%arg0: i32) -> (i32, i32, i32) {
    %c0_i32 = arith.constant 0 : i32
    %c0_i32_0 = arith.constant 0 : i32
    %c0_i32_1 = arith.constant 0 : i32
    %c0_i32_2 = arith.constant 0 : i32
    return %c0_i32, %c0_i32_0, %c0_i32_1 : i32, i32, i32
  }
  func.func @transform_2(%arg0: i32) -> (i32, i32) {
    %c0_i32 = arith.constant 0 : i32
    %c0_i32_0 = arith.constant 0 : i32
    return %arg0, %c0_i32 : i32, i32
  }
  func.func @transform_3(%arg0: i32) -> (i32, i32, i32) {
    %c0_i32 = arith.constant 0 : i32
    %c0_i32_0 = arith.constant 0 : i32
    %c0_i32_1 = arith.constant 0 : i32
    return %arg0, %c0_i32, %c0_i32_0 : i32, i32, i32
  }
}

</mosaic_0001>

<llo_original>
// kernel: conv_block_forward.5
$region0: #{conv_block_forward.5}
  #allocation0 [shape = 'u32[]', space=smem, size = 0x4, offset = 0x4, fixed_abs, tag = 'smem constant byte address 0x4 - core index']
  #allocation1 [shape = 'u32[144,128]{1,0:T(1,128)}', space=vmem, size = 0x12000, scoped, tag = 'internal scratch']
  %s0 = inlined_call_operand.vmem [shape: f32[512,128], index: 0, kind: input, shape index: {}]
  %s1 = inlined_call_operand.vmem [shape: f32[1,128], index: 1, kind: input, shape index: {}]
  %s2 = inlined_call_operand.vmem [shape: f32[1,128], index: 2, kind: input, shape index: {}]
  %s3 = inlined_call_operand.vmem [shape: f32[512,128], index: 3, kind: output, shape index: {}]
  %s4 = sld [smem:[#allocation0]]
  $region45: #{conv_block_forward.5} parent=0
    _
  %s6 = ssub.s32 1, %s4
  %s7 = scalar_select 0, %s6, %s4
  loop: start=0, step=1, limit=6
  $region2: #{conv_block_forward.5} parent=0 // loop_pre_header
    _
  $region3: #{conv_block_forward.5} parent=0 // loop_header
    %s9 = sphi 0, %s13
    %p10 = scmp.ge.s32.totalorder %s9, 6
    %s19 = sphi 0, %s21
    %s22 = sphi 0, %s19
    %s23 = sphi 0, %s22
    %s39 = sphi 0, %s23
    %s43 = sphi 0, %s43
    %s45 = sphi 0, %s43
    %s46 = sphi 0, %s45
    %s60 = sphi 0, %s46
    %s64 = sphi 0, %s64
    %s66 = sphi 0, %s64
    %s67 = sphi 0, %s66
    %s81 = sphi 0, %s67
    %s87 = sphi 0, %s89
    %s90 = sphi 0, %s87
    %s91 = sphi 0, %s90
    %s107 = sphi 0, %s91
  $region4: #{conv_block_forward.5} parent=0 // loop_header_branch
    %12 = sbr.rel (%p10) target = $region8
  $region5: #{conv_block_forward.5} parent=0 // loop_body
    %s14 = ssub.s32 %s9, 1
    %s15 = ssub.s32 %s9, 2
    %s16 = sadd.s32 %s9, 1
    %s17 = ssub.s32 %s9, %s16
    %p18 = scmp.eq.s32.totalorder %s17, 0
    %s20 = sadd.s32 %s19, 1
    %s21 = scalar_select %p18, %s19, %s20
    %p24 = pneg %p18
    %p25 = scmp.eq.s32.totalorder %s9, 3
    %p26 = por %p24, %p25
    %p27 = scmp.ne.s32.totalorder %s19, %s22
    %p28 = scmp.eq.s32.totalorder %s9, 0
    %p29 = por %p27, %p28
    %p30 = scmp.ne.s32.totalorder %s19, %s22
    %p31 = scmp.eq.s32.totalorder %s14, 3
    %p32 = por %p30, %p31
    %p33 = scmp.ne.s32.totalorder %s22, %s23
    %p34 = scmp.eq.s32.totalorder %s14, 0
    %p35 = por %p33, %p34
    %p36 = scmp.ne.s32.totalorder %s22, %s23
    %p37 = scmp.eq.s32.totalorder %s15, 3
    %p38 = por %p36, %p37
    %p40 = scmp.ne.s32.totalorder %s23, %s39
    %p41 = scmp.eq.s32.totalorder %s15, 0
    %p42 = por %p40, %p41
    %s44 = sadd.s32 %s43, 1
    %p47 = scmp.eq.s32.totalorder %s9, 3
    %p48 = scmp.ne.s32.totalorder %s43, %s45
    %p49 = scmp.eq.s32.totalorder %s9, 0
    %p50 = por %p48, %p49
    %p51 = scmp.ne.s32.totalorder %s43, %s45
    %p52 = scmp.eq.s32.totalorder %s14, 3
    %p53 = por %p51, %p52
    %p54 = scmp.ne.s32.totalorder %s45, %s46
    %p55 = scmp.eq.s32.totalorder %s14, 0
    %p56 = por %p54, %p55
    %p57 = scmp.ne.s32.totalorder %s45, %s46
    %p58 = scmp.eq.s32.totalorder %s15, 3
    %p59 = por %p57, %p58
    %p61 = scmp.ne.s32.totalorder %s46, %s60
    %p62 = scmp.eq.s32.totalorder %s15, 0
    %p63 = por %p61, %p62
    %s65 = sadd.s32 %s64, 1
    %p68 = scmp.eq.s32.totalorder %s9, 3
    %p69 = scmp.ne.s32.totalorder %s64, %s66
    %p70 = scmp.eq.s32.totalorder %s9, 0
    %p71 = por %p69, %p70
    %p72 = scmp.ne.s32.totalorder %s64, %s66
    %p73 = scmp.eq.s32.totalorder %s14, 3
    %p74 = por %p72, %p73
    %p75 = scmp.ne.s32.totalorder %s66, %s67
    %p76 = scmp.eq.s32.totalorder %s14, 0
    %p77 = por %p75, %p76
    %p78 = scmp.ne.s32.totalorder %s66, %s67
    %p79 = scmp.eq.s32.totalorder %s15, 3
    %p80 = por %p78, %p79
    %p82 = scmp.ne.s32.totalorder %s67, %s81
    %p83 = scmp.eq.s32.totalorder %s15, 0
    %p84 = por %p82, %p83
    %s85 = ssub.s32 %s9, %s16
    %p86 = scmp.eq.s32.totalorder %s85, 0
    %s88 = sadd.s32 %s87, 1
    %s89 = scalar_select %p86, %s87, %s88
    %p92 = pneg %p86
    %p93 = scmp.eq.s32.totalorder %s9, 3
    %p94 = por %p92, %p93
    %p95 = scmp.ne.s32.totalorder %s87, %s90
    %p96 = scmp.eq.s32.totalorder %s9, 0
    %p97 = por %p95, %p96
    %p98 = scmp.ne.s32.totalorder %s87, %s90
    %p99 = scmp.eq.s32.totalorder %s14, 3
    %p100 = por %p98, %p99
    %p101 = scmp.ne.s32.totalorder %s90, %s91
    %p102 = scmp.eq.s32.totalorder %s14, 0
    %p103 = por %p101, %p102
    %p104 = scmp.ne.s32.totalorder %s90, %s91
    %p105 = scmp.eq.s32.totalorder %s15, 3
    %p106 = por %p104, %p105
    %p108 = scmp.ne.s32.totalorder %s91, %s107
    %p109 = scmp.eq.s32.totalorder %s15, 0
    %p110 = por %p108, %p109
    %p111 = scmp.le.s32.totalorder 1, %s9
    %p112 = scmp.lt.s32.totalorder %s9, 5
    %p113 = pnand %p111, %p112
    %p114 = pneg %p113
    // Predicated region
    $region9: #{conv_block_forward.5} parent=5 // pred_check
      _
    $region10: #{conv_block_forward.5} parent=5 // pred_check_branch
      %116 = sbr.rel (%p113) target = $region12
    $region11: #{conv_block_forward.5} parent=5 // pred_region
      %s117 = ssub.s32 %s9, 1
      // Predicated region
      $region13: #{conv_block_forward.5} parent=11 // pred_check
        %p118 = pneg %p56
      $region14: #{conv_block_forward.5} parent=11 // pred_check_branch
        %120 = sbr.rel (%p118) target = $region16
      $region15: #{conv_block_forward.5} parent=11 // pred_region
        _
      $region16: #{conv_block_forward.5} parent=11 // pred_fallthru
        _
      // Predicated region
      $region17: #{conv_block_forward.5} parent=11 // pred_check
        %p121 = pneg %p77
      $region18: #{conv_block_forward.5} parent=11 // pred_check_branch
        %123 = sbr.rel (%p121) target = $region20
      $region19: #{conv_block_forward.5} parent=11 // pred_region
        _
      $region20: #{conv_block_forward.5} parent=11 // pred_fallthru
        _
    $region12: #{conv_block_forward.5} parent=5 // pred_fallthru
      _
    %p124 = scmp.lt.s32.totalorder %s9, 4
    // Predicated region
    $region21: #{conv_block_forward.5} parent=5 // pred_check
      %p125 = pneg %p124
    $region22: #{conv_block_forward.5} parent=5 // pred_check_branch
      %127 = sbr.rel (%p125) target = $region24
    $region23: #{conv_block_forward.5} parent=5 // pred_region
      // Predicated region
      $region25: #{conv_block_forward.5} parent=23 // pred_check
        %p128 = pneg %p29
      $region26: #{conv_block_forward.5} parent=23 // pred_check_branch
        %130 = sbr.rel (%p128) target = $region28
      $region27: #{conv_block_forward.5} parent=23 // pred_region
        %s131 = smul.u32 16, %s9
        %p132 = scmp.lt.s32.totalorder %s131, 63
        %s133 = scalar_select %p132, %s131, 63
        %s134 = smul.addr %s133, 8
        %s135 = scalar_lea.vmem %s0, %s134
        %s136 = smul.u32 16, %s9
      $region28: #{conv_block_forward.5} parent=23 // pred_fallthru
        _
    $region24: #{conv_block_forward.5} parent=5 // pred_fallthru
      _
    %p137 = scmp.le.s32.totalorder 1, %s9
    %p138 = scmp.lt.s32.totalorder %s9, 5
    %p139 = pnand %p137, %p138
    %p140 = pneg %p139
    // Predicated region
    $region29: #{conv_block_forward.5} parent=5 // pred_check
      _
    $region30: #{conv_block_forward.5} parent=5 // pred_check_branch
      %142 = sbr.rel (%p139) target = $region32
    $region31: #{conv_block_forward.5} parent=5 // pred_region
      %s143 = ssub.s32 %s9, 1
      %s144 = smul.u32 16, %s14
      %p145 = scmp.lt.s32.totalorder %s144, 63
      %s146 = scalar_select %p145, %s144, 63
      %s147 = smul.addr %s146, 8
      %s148 = scalar_lea.vmem %s0, %s147
      %p149 = pneg %p35
      %p150 = pneg %p32
      %p151 = pneg %p56
      %p152 = pneg %p53
      %p153 = pneg %p77
      %p154 = pneg %p74
      %p155 = pneg %p103
      %p156 = pneg %p100
      %s157 = smul.u32 16, %s14
      %p158 = scmp.lt.s32.totalorder %s157, 63
      %s159 = scalar_select %p158, %s157, 63
      %s160 = smul.addr %s159, 8
      %s161 = scalar_lea.vmem %s3, %s160
      %s162 = smul.u32 16, %s14
      %p163 = scmp.lt.s32.totalorder %s162, 63
      %s164 = scalar_select %p163, %s162, 63
      %s165 = smul.addr %s164, 8
      %s166 = scalar_lea.vmem %s0, %s165
      %s167 = smul.u32 16, %s14
      %s168 = smul.u32 16, %s14
      %p169 = scmp.lt.s32.totalorder %s168, 63
      %s170 = scalar_select %p169, %s168, 63
      %s171 = smul.addr %s170, 8
      %s172 = scalar_lea.vmem %s3, %s171
      %s173 = smul.u32 16, %s14
      %v174 = vld [vmem:[%s166] sm:$0xff]
      %v175 = vld [vmem:[%s166 + $0x8] sm:$0xff]
      %v176 = vld [vmem:[%s166 + $0x10] sm:$0xff]
      %v177 = vld [vmem:[%s166 + $0x18] sm:$0xff]
      %v178 = vld [vmem:[%s166 + $0x20] sm:$0xff]
      %v179 = vld [vmem:[%s166 + $0x28] sm:$0xff]
      %v180 = vld [vmem:[%s166 + $0x30] sm:$0xff]
      %v181 = vld [vmem:[%s166 + $0x38] sm:$0xff]
      %v182 = vld [vmem:[%s166 + $0x40] sm:$0xff]
      %v183 = vld [vmem:[%s166 + $0x48] sm:$0xff]
      %v184 = vld [vmem:[%s166 + $0x50] sm:$0xff]
      %v185 = vld [vmem:[%s166 + $0x58] sm:$0xff]
      %v186 = vld [vmem:[%s166 + $0x60] sm:$0xff]
      %v187 = vld [vmem:[%s166 + $0x68] sm:$0xff]
      %v188 = vld [vmem:[%s166 + $0x70] sm:$0xff]
      %v189 = vld [vmem:[%s166 + $0x78] sm:$0xff]
      %v190 = vld [vmem:[%s1] sm:$0x1]
      %v192 = vlaneseq
      %v193 = vshrl.u32 %v192, 7
      %v194 = vsub.s32 0, %v193
      %v195 = vrot.slane %v190, %v194
      %v197 = vmul.f32 %v174, %v195
      %v198 = vmul.f32 %v175, %v195
      %v199 = vmul.f32 %v176, %v195
      %v200 = vmul.f32 %v177, %v195
      %v201 = vmul.f32 %v178, %v195
      %v202 = vmul.f32 %v179, %v195
      %v203 = vmul.f32 %v180, %v195
      %v204 = vmul.f32 %v181, %v195
      %v205 = vmul.f32 %v182, %v195
      %v206 = vmul.f32 %v183, %v195
      %v207 = vmul.f32 %v184, %v195
      %v208 = vmul.f32 %v185, %v195
      %v209 = vmul.f32 %v186, %v195
      %v210 = vmul.f32 %v187, %v195
      %v211 = vmul.f32 %v188, %v195
      %v212 = vmul.f32 %v189, %v195
      %v213 = vld [vmem:[%s2] sm:$0x1]
      %v215 = vlaneseq
      %v216 = vshrl.u32 %v215, 7
      %v217 = vsub.s32 0, %v216
      %v218 = vrot.slane %v213, %v217
      %v220 = vadd.f32 %v197, %v218
      %v221 = vadd.f32 %v198, %v218
      %v222 = vadd.f32 %v199, %v218
      %v223 = vadd.f32 %v200, %v218
      %v224 = vadd.f32 %v201, %v218
      %v225 = vadd.f32 %v202, %v218
      %v226 = vadd.f32 %v203, %v218
      %v227 = vadd.f32 %v204, %v218
      %v228 = vadd.f32 %v205, %v218
      %v229 = vadd.f32 %v206, %v218
      %v230 = vadd.f32 %v207, %v218
      %v231 = vadd.f32 %v208, %v218
      %v232 = vadd.f32 %v209, %v218
      %v233 = vadd.f32 %v210, %v218
      %v234 = vadd.f32 %v211, %v218
      %v235 = vadd.f32 %v212, %v218
      %v236 = vmax.f32 %v220, 0.0
      %v237 = vmax.f32 %v221, 0.0
      %v238 = vmax.f32 %v222, 0.0
      %v239 = vmax.f32 %v223, 0.0
      %v240 = vmax.f32 %v224, 0.0
      %v241 = vmax.f32 %v225, 0.0
      %v242 = vmax.f32 %v226, 0.0
      %v243 = vmax.f32 %v227, 0.0
      %v244 = vmax.f32 %v228, 0.0
      %v245 = vmax.f32 %v229, 0.0
      %v246 = vmax.f32 %v230, 0.0
      %v247 = vmax.f32 %v231, 0.0
      %v248 = vmax.f32 %v232, 0.0
      %v249 = vmax.f32 %v233, 0.0
      %v250 = vmax.f32 %v234, 0.0
      %v251 = vmax.f32 %v235, 0.0
      %252 = vst [vmem:[%s172] sm:$0xff] %v236
      %253 = vst [vmem:[%s172 + $0x8] sm:$0xff] %v237
      %254 = vst [vmem:[%s172 + $0x10] sm:$0xff] %v238
      %255 = vst [vmem:[%s172 + $0x18] sm:$0xff] %v239
      %256 = vst [vmem:[%s172 + $0x20] sm:$0xff] %v240
      %257 = vst [vmem:[%s172 + $0x28] sm:$0xff] %v241
      %258 = vst [vmem:[%s172 + $0x30] sm:$0xff] %v242
      %259 = vst [vmem:[%s172 + $0x38] sm:$0xff] %v243
      %260 = vst [vmem:[%s172 + $0x40] sm:$0xff] %v244
      %261 = vst [vmem:[%s172 + $0x48] sm:$0xff] %v245
      %262 = vst [vmem:[%s172 + $0x50] sm:$0xff] %v246
      %263 = vst [vmem:[%s172 + $0x58] sm:$0xff] %v247
      %264 = vst [vmem:[%s172 + $0x60] sm:$0xff] %v248
      %265 = vst [vmem:[%s172 + $0x68] sm:$0xff] %v249
      %266 = vst [vmem:[%s172 + $0x70] sm:$0xff] %v250
      %267 = vst [vmem:[%s172 + $0x78] sm:$0xff] %v251
      %s268 = smul.u32 16, %s14
      %p269 = scmp.lt.s32.totalorder %s268, 63
      %s270 = scalar_select %p269, %s268, 63
      %s271 = smul.addr %s270, 8
      %s272 = scalar_lea.vmem %s3, %s271
      // Predicated region
      $region33: #{conv_block_forward.5} parent=31 // pred_check
        %p273 = pneg %p100
      $region34: #{conv_block_forward.5} parent=31 // pred_check_branch
        %275 = sbr.rel (%p273) target = $region36
      $region35: #{conv_block_forward.5} parent=31 // pred_region
        %s276 = smul.u32 16, %s14
      $region36: #{conv_block_forward.5} parent=31 // pred_fallthru
        _
    $region32: #{conv_block_forward.5} parent=5 // pred_fallthru
      _
    %p277 = scmp.le.s32.totalorder 2, %s9
    // Predicated region
    $region37: #{conv_block_forward.5} parent=5 // pred_check
      %p278 = pneg %p277
    $region38: #{conv_block_forward.5} parent=5 // pred_check_branch
      %280 = sbr.rel (%p278) target = $region40
    $region39: #{conv_block_forward.5} parent=5 // pred_region
      %s281 = ssub.s32 %s9, 2
      // Predicated region
      $region41: #{conv_block_forward.5} parent=39 // pred_check
        %p282 = pneg %p106
      $region42: #{conv_block_forward.5} parent=39 // pred_check_branch
        %284 = sbr.rel (%p282) target = $region44
      $region43: #{conv_block_forward.5} parent=39 // pred_region
        %s285 = smul.u32 16, %s15
        %p286 = scmp.lt.s32.totalorder %s285, 63
        %s287 = scalar_select %p286, %s285, 63
        %s288 = smul.addr %s287, 8
        %s289 = scalar_lea.vmem %s3, %s288
      $region44: #{conv_block_forward.5} parent=39 // pred_fallthru
        _
    $region40: #{conv_block_forward.5} parent=5 // pred_fallthru
      _
  $region6: #{conv_block_forward.5} parent=0 // loop_footer
    %s13 = sadd.s32 1, %s9
  $region7: #{conv_block_forward.5} parent=0 // loop_footer_branch
    %8 = sbr.rel target = $region3
  $region8: #{conv_block_forward.5} parent=0 // loop_exit
    _

// kernel: conv_block_forward.4
$region0: #{conv_block_forward.4}
  #allocation0 [shape = 'u32[]', space=smem, size = 0x4, offset = 0x4, fixed_abs, tag = 'smem constant byte address 0x4 - core index']
  #allocation1 [shape = 'u32[144,128]{1,0:T(1,128)}', space=vmem, size = 0x12000, scoped, tag = 'internal scratch']
  %s0 = inlined_call_operand.vmem [shape: bf16[4,10,18,4], index: 0, kind: input, shape index: {}]
  %s1 = inlined_call_operand.vmem [shape: bf16[9,4,128], index: 1, kind: input, shape index: {}]
  %s2 = inlined_call_operand.vmem [shape: f32[512,128], index: 2, kind: output, shape index: {0}]
  %s3 = inlined_call_operand.vmem [shape: f32[4,2,128], index: 3, kind: output, shape index: {1}]
  %4 = xla_tuple %s2, %s3
  %s5 = sld [smem:[#allocation0]]
  $region49: #{conv_block_forward.4} parent=0
    _
  %s7 = ssub.s32 1, %s5
  %s8 = scalar_select 0, %s7, %s5
  loop: start=0, step=1, limit=6
  $region2: #{conv_block_forward.4} parent=0 // loop_pre_header
    _
  $region3: #{conv_block_forward.4} parent=0 // loop_header
    %s10 = sphi 0, %s14
    %p11 = scmp.ge.s32.totalorder %s10, 6
    %s20 = sphi 0, %s22
    %s23 = sphi 0, %s20
    %s24 = sphi 0, %s23
    %s40 = sphi 0, %s24
    %s44 = sphi 0, %s44
    %s46 = sphi 0, %s44
    %s47 = sphi 0, %s46
    %s61 = sphi 0, %s47
    %s67 = sphi 0, %s69
    %s70 = sphi 0, %s67
    %s71 = sphi 0, %s70
    %s87 = sphi 0, %s71
    %s93 = sphi 0, %s95
    %s96 = sphi 0, %s93
    %s97 = sphi 0, %s96
    %s113 = sphi 0, %s97
  $region4: #{conv_block_forward.4} parent=0 // loop_header_branch
    %13 = sbr.rel (%p11) target = $region8
  $region5: #{conv_block_forward.4} parent=0 // loop_body
    %s15 = ssub.s32 %s10, 1
    %s16 = ssub.s32 %s10, 2
    %s17 = sadd.s32 %s10, 1
    %s18 = ssub.s32 %s10, %s17
    %p19 = scmp.eq.s32.totalorder %s18, 0
    %s21 = sadd.s32 %s20, 1
    %s22 = scalar_select %p19, %s20, %s21
    %p25 = pneg %p19
    %p26 = scmp.eq.s32.totalorder %s10, 3
    %p27 = por %p25, %p26
    %p28 = scmp.ne.s32.totalorder %s20, %s23
    %p29 = scmp.eq.s32.totalorder %s10, 0
    %p30 = por %p28, %p29
    %p31 = scmp.ne.s32.totalorder %s20, %s23
    %p32 = scmp.eq.s32.totalorder %s15, 3
    %p33 = por %p31, %p32
    %p34 = scmp.ne.s32.totalorder %s23, %s24
    %p35 = scmp.eq.s32.totalorder %s15, 0
    %p36 = por %p34, %p35
    %p37 = scmp.ne.s32.totalorder %s23, %s24
    %p38 = scmp.eq.s32.totalorder %s16, 3
    %p39 = por %p37, %p38
    %p41 = scmp.ne.s32.totalorder %s24, %s40
    %p42 = scmp.eq.s32.totalorder %s16, 0
    %p43 = por %p41, %p42
    %s45 = sadd.s32 %s44, 1
    %p48 = scmp.eq.s32.totalorder %s10, 3
    %p49 = scmp.ne.s32.totalorder %s44, %s46
    %p50 = scmp.eq.s32.totalorder %s10, 0
    %p51 = por %p49, %p50
    %p52 = scmp.ne.s32.totalorder %s44, %s46
    %p53 = scmp.eq.s32.totalorder %s15, 3
    %p54 = por %p52, %p53
    %p55 = scmp.ne.s32.totalorder %s46, %s47
    %p56 = scmp.eq.s32.totalorder %s15, 0
    %p57 = por %p55, %p56
    %p58 = scmp.ne.s32.totalorder %s46, %s47
    %p59 = scmp.eq.s32.totalorder %s16, 3
    %p60 = por %p58, %p59
    %p62 = scmp.ne.s32.totalorder %s47, %s61
    %p63 = scmp.eq.s32.totalorder %s16, 0
    %p64 = por %p62, %p63
    %s65 = ssub.s32 %s10, %s17
    %p66 = scmp.eq.s32.totalorder %s65, 0
    %s68 = sadd.s32 %s67, 1
    %s69 = scalar_select %p66, %s67, %s68
    %p72 = pneg %p66
    %p73 = scmp.eq.s32.totalorder %s10, 3
    %p74 = por %p72, %p73
    %p75 = scmp.ne.s32.totalorder %s67, %s70
    %p76 = scmp.eq.s32.totalorder %s10, 0
    %p77 = por %p75, %p76
    %p78 = scmp.ne.s32.totalorder %s67, %s70
    %p79 = scmp.eq.s32.totalorder %s15, 3
    %p80 = por %p78, %p79
    %p81 = scmp.ne.s32.totalorder %s70, %s71
    %p82 = scmp.eq.s32.totalorder %s15, 0
    %p83 = por %p81, %p82
    %p84 = scmp.ne.s32.totalorder %s70, %s71
    %p85 = scmp.eq.s32.totalorder %s16, 3
    %p86 = por %p84, %p85
    %p88 = scmp.ne.s32.totalorder %s71, %s87
    %p89 = scmp.eq.s32.totalorder %s16, 0
    %p90 = por %p88, %p89
    %s91 = ssub.s32 %s10, %s17
    %p92 = scmp.eq.s32.totalorder %s91, 0
    %s94 = sadd.s32 %s93, 1
    %s95 = scalar_select %p92, %s93, %s94
    %p98 = pneg %p92
    %p99 = scmp.eq.s32.totalorder %s10, 3
    %p100 = por %p98, %p99
    %p101 = scmp.ne.s32.totalorder %s93, %s96
    %p102 = scmp.eq.s32.totalorder %s10, 0
    %p103 = por %p101, %p102
    %p104 = scmp.ne.s32.totalorder %s93, %s96
    %p105 = scmp.eq.s32.totalorder %s15, 3
    %p106 = por %p104, %p105
    %p107 = scmp.ne.s32.totalorder %s96, %s97
    %p108 = scmp.eq.s32.totalorder %s15, 0
    %p109 = por %p107, %p108
    %p110 = scmp.ne.s32.totalorder %s96, %s97
    %p111 = scmp.eq.s32.totalorder %s16, 3
    %p112 = por %p110, %p111
    %p114 = scmp.ne.s32.totalorder %s97, %s113
    %p115 = scmp.eq.s32.totalorder %s16, 0
    %p116 = por %p114, %p115
    %p117 = scmp.le.s32.totalorder 1, %s10
    %p118 = scmp.lt.s32.totalorder %s10, 5
    %p119 = pnand %p117, %p118
    %p120 = pneg %p119
    // Predicated region
    $region9: #{conv_block_forward.4} parent=5 // pred_check
      _
    $region10: #{conv_block_forward.4} parent=5 // pred_check_branch
      %122 = sbr.rel (%p119) target = $region12
    $region11: #{conv_block_forward.4} parent=5 // pred_region
      %s123 = ssub.s32 %s10, 1
      // Predicated region
      $region13: #{conv_block_forward.4} parent=11 // pred_check
        %p124 = pneg %p57
      $region14: #{conv_block_forward.4} parent=11 // pred_check_branch
        %126 = sbr.rel (%p124) target = $region16
      $region15: #{conv_block_forward.4} parent=11 // pred_region
        _
      $region16: #{conv_block_forward.4} parent=11 // pred_fallthru
        _
    $region12: #{conv_block_forward.4} parent=5 // pred_fallthru
      _
    %p127 = scmp.lt.s32.totalorder %s10, 4
    // Predicated region
    $region17: #{conv_block_forward.4} parent=5 // pred_check
      %p128 = pneg %p127
    $region18: #{conv_block_forward.4} parent=5 // pred_check_branch
      %130 = sbr.rel (%p128) target = $region20
    $region19: #{conv_block_forward.4} parent=5 // pred_region
      // Predicated region
      $region21: #{conv_block_forward.4} parent=19 // pred_check
        %p131 = pneg %p30
      $region22: #{conv_block_forward.4} parent=19 // pred_check_branch
        %133 = sbr.rel (%p131) target = $region24
      $region23: #{conv_block_forward.4} parent=19 // pred_region
        %p134 = scmp.lt.s32.totalorder %s10, 3
        %s135 = scalar_select %p134, %s10, 3
        %s136 = smul.addr %s135, 30
        %s137 = smul.addr %s136, 4
        %s138 = scalar_lea.vmem %s0, %s137
      $region24: #{conv_block_forward.4} parent=19 // pred_fallthru
        _
    $region20: #{conv_block_forward.4} parent=5 // pred_fallthru
      _
    %p139 = scmp.le.s32.totalorder 1, %s10
    %p140 = scmp.lt.s32.totalorder %s10, 5
    %p141 = pnand %p139, %p140
    %p142 = pneg %p141
    // Predicated region
    $region25: #{conv_block_forward.4} parent=5 // pred_check
      _
    $region26: #{conv_block_forward.4} parent=5 // pred_check_branch
      %144 = sbr.rel (%p141) target = $region28
    $region27: #{conv_block_forward.4} parent=5 // pred_region
      %s145 = ssub.s32 %s10, 1
      %p146 = scmp.lt.s32.totalorder %s15, 3
      %s147 = scalar_select %p146, %s15, 3
      %s148 = smul.addr %s147, 30
      %s149 = smul.addr %s148, 4
      %s150 = scalar_lea.vmem %s0, %s149
      %p151 = pneg %p36
      %p152 = pneg %p33
      %p153 = pneg %p57
      %p154 = pneg %p54
      %p155 = pneg %p83
      %p156 = pneg %p80
      %s157 = smul.u32 16, %s15
      %p158 = scmp.lt.s32.totalorder %s157, 63
      %s159 = scalar_select %p158, %s157, 63
      %s160 = smul.addr %s159, 8
      %s161 = scalar_lea.vmem %s2, %s160
      %p162 = pneg %p109
      %p163 = pneg %p106
      %p164 = scmp.lt.s32.totalorder %s15, 3
      %s165 = scalar_select %p164, %s15, 3
      %s166 = smul.addr %s165, 2
      %s167 = scalar_lea.vmem %s3, %s166
      %p168 = scmp.lt.s32.totalorder %s15, 3
      %s169 = scalar_select %p168, %s15, 3
      %s170 = smul.addr %s169, 30
      %s171 = smul.addr %s170, 4
      %s172 = scalar_lea.vmem %s0, %s171
      %s173 = smul.u32 16, %s15
      %p174 = scmp.lt.s32.totalorder %s173, 63
      %s175 = scalar_select %p174, %s173, 63
      %s176 = smul.addr %s175, 8
      %s177 = scalar_lea.vmem %s2, %s176
      %s178 = smul.u32 16, %s15
      %p179 = scmp.lt.s32.totalorder %s15, 3
      %s180 = scalar_select %p179, %s15, 3
      %s181 = smul.addr %s180, 2
      %s182 = scalar_lea.vmem %s3, %s181
      %v184 = vld [vmem:[%s172] sm:$0xf]
      %v185 = vld [vmem:[%s172 + $0x4] sm:$0xf]
      %v186 = vld [vmem:[%s172 + $0x8] sm:$0x1]
      %v187 = vld [vmem:[%s172 + $0xc] sm:$0xf]
      %v188 = vld [vmem:[%s172 + $0x10] sm:$0xf]
      %v189 = vld [vmem:[%s172 + $0x14] sm:$0x1]
      %v190 = vld [vmem:[%s172 + $0x18] sm:$0xf]
      %v191 = vld [vmem:[%s172 + $0x1c] sm:$0xf]
      %v192 = vld [vmem:[%s172 + $0x20] sm:$0x1]
      %v193 = vld [vmem:[%s172 + $0x24] sm:$0xf]
      %v194 = vld [vmem:[%s172 + $0x28] sm:$0xf]
      %v195 = vld [vmem:[%s172 + $0x2c] sm:$0x1]
      %v196 = vld [vmem:[%s172 + $0x30] sm:$0xf]
      %v197 = vld [vmem:[%s172 + $0x34] sm:$0xf]
      %v198 = vld [vmem:[%s172 + $0x38] sm:$0x1]
      %v199 = vld [vmem:[%s172 + $0x3c] sm:$0xf]
      %v200 = vld [vmem:[%s172 + $0x40] sm:$0xf]
      %v201 = vld [vmem:[%s172 + $0x44] sm:$0x1]
      %v202 = vld [vmem:[%s172 + $0x48] sm:$0xf]
      %v203 = vld [vmem:[%s172 + $0x4c] sm:$0xf]
      %v204 = vld [vmem:[%s172 + $0x50] sm:$0x1]
      %v205 = vld [vmem:[%s172 + $0x54] sm:$0xf]
      %v206 = vld [vmem:[%s172 + $0x58] sm:$0xf]
      %v207 = vld [vmem:[%s172 + $0x5c] sm:$0x1]
      %v208 = vld [vmem:[%s172 + $0x60] sm:$0xf]
      %v209 = vld [vmem:[%s172 + $0x64] sm:$0xf]
      %v210 = vld [vmem:[%s172 + $0x68] sm:$0x1]
      %v211 = vld [vmem:[%s172 + $0x6c] sm:$0xf]
      %v212 = vld [vmem:[%s172 + $0x70] sm:$0xf]
      %v213 = vld [vmem:[%s172 + $0x74] sm:$0x1]
      %v214 = vld [vmem:[%s1] sm:$0x3]
      %vm215 = vsmask.f32 3328
      %vm216 = vsmask.f32 7440
      %vm217 = vmor %vm215, %vm216
      %v219 = vshrl.u32 %v184, 16
      %v221 = vrot.slane %v219, 4
      %v222 = vshll.u32 %v184, 16
      %v224 = vrot.slane %v222, 5
      %v225 = vor.u32 %v221, %v224
      %v226 = vrot.slane %v225, 4
      %v228 = vshll.u32 %v185, 16
      %v230 = vrot.slane %v228, 5
      %v231 = vsel %vm217, %v226, %v230
      %v232 = vshrl.u32 %v185, 16
      %v234 = vrot.slane %v232, 4
      %v235 = vor.u32 %v234, %v230
      %v236 = vrot.slane %v235, 4
      %v238 = vshll.u32 %v186, 16
      %v240 = vrot.slane %v238, 5
      %v241 = vsel %vm217, %v236, %v240
      %v243 = vshrl.u32 %v187, 16
      %v245 = vrot.slane %v243, 4
      %v246 = vshll.u32 %v187, 16
      %v248 = vrot.slane %v246, 5
      %v249 = vor.u32 %v245, %v248
      %v250 = vrot.slane %v249, 4
      %v252 = vshll.u32 %v188, 16
      %v254 = vrot.slane %v252, 5
      %v255 = vsel %vm217, %v250, %v254
      %v256 = vshrl.u32 %v188, 16
      %v258 = vrot.slane %v256, 4
      %v259 = vor.u32 %v258, %v254
      %v260 = vrot.slane %v259, 4
      %v262 = vshll.u32 %v189, 16
      %v264 = vrot.slane %v262, 5
      %v265 = vsel %vm217, %v260, %v264
      %v267 = vshrl.u32 %v190, 16
      %v269 = vrot.slane %v267, 4
      %v270 = vshll.u32 %v190, 16
      %v272 = vrot.slane %v270, 5
      %v273 = vor.u32 %v269, %v272
      %v274 = vrot.slane %v273, 4
      %v276 = vshll.u32 %v191, 16
      %v278 = vrot.slane %v276, 5
      %v279 = vsel %vm217, %v274, %v278
      %v280 = vshrl.u32 %v191, 16
      %v282 = vrot.slane %v280, 4
      %v283 = vor.u32 %v282, %v278
      %v284 = vrot.slane %v283, 4
      %v286 = vshll.u32 %v192, 16
      %v288 = vrot.slane %v286, 5
      %v289 = vsel %vm217, %v284, %v288
      %v291 = vshrl.u32 %v193, 16
      %v293 = vrot.slane %v291, 4
      %v294 = vshll.u32 %v193, 16
      %v296 = vrot.slane %v294, 5
      %v297 = vor.u32 %v293, %v296
      %v298 = vrot.slane %v297, 4
      %v300 = vshll.u32 %v194, 16
      %v302 = vrot.slane %v300, 5
      %v303 = vsel %vm217, %v298, %v302
      %v304 = vshrl.u32 %v194, 16
      %v306 = vrot.slane %v304, 4
      %v307 = vor.u32 %v306, %v302
      %v308 = vrot.slane %v307, 4
      %v310 = vshll.u32 %v195, 16
      %v312 = vrot.slane %v310, 5
      %v313 = vsel %vm217, %v308, %v312
      %v315 = vshrl.u32 %v196, 16
      %v317 = vrot.slane %v315, 4
      %v318 = vshll.u32 %v196, 16
      %v320 = vrot.slane %v318, 5
      %v321 = vor.u32 %v317, %v320
      %v322 = vrot.slane %v321, 4
      %v324 = vshll.u32 %v197, 16
      %v326 = vrot.slane %v324, 5
      %v327 = vsel %vm217, %v322, %v326
      %v328 = vshrl.u32 %v197, 16
      %v330 = vrot.slane %v328, 4
      %v331 = vor.u32 %v330, %v326
      %v332 = vrot.slane %v331, 4
      %v334 = vshll.u32 %v198, 16
      %v336 = vrot.slane %v334, 5
      %v337 = vsel %vm217, %v332, %v336
      %v339 = vshrl.u32 %v199, 16
      %v341 = vrot.slane %v339, 4
      %v342 = vshll.u32 %v199, 16
      %v344 = vrot.slane %v342, 5
      %v345 = vor.u32 %v341, %v344
      %v346 = vrot.slane %v345, 4
      %v348 = vshll.u32 %v200, 16
      %v350 = vrot.slane %v348, 5
      %v351 = vsel %vm217, %v346, %v350
      %v352 = vshrl.u32 %v200, 16
      %v354 = vrot.slane %v352, 4
      %v355 = vor.u32 %v354, %v350
      %v356 = vrot.slane %v355, 4
      %v358 = vshll.u32 %v201, 16
      %v360 = vrot.slane %v358, 5
      %v361 = vsel %vm217, %v356, %v360
      %v363 = vshrl.u32 %v202, 16
      %v365 = vrot.slane %v363, 4
      %v366 = vshll.u32 %v202, 16
      %v368 = vrot.slane %v366, 5
      %v369 = vor.u32 %v365, %v368
      %v370 = vrot.slane %v369, 4
      %v372 = vshll.u32 %v203, 16
      %v374 = vrot.slane %v372, 5
      %v375 = vsel %vm217, %v370, %v374
      %v376 = vshrl.u32 %v203, 16
      %v378 = vrot.slane %v376, 4
      %v379 = vor.u32 %v378, %v374
      %v380 = vrot.slane %v379, 4
      %v382 = vshll.u32 %v204, 16
      %v384 = vrot.slane %v382, 5
      %v385 = vsel %vm217, %v380, %v384
      %v387 = vshrl.u32 %v205, 16
      %v389 = vrot.slane %v387, 4
      %v390 = vshll.u32 %v205, 16
      %v392 = vrot.slane %v390, 5
      %v393 = vor.u32 %v389, %v392
      %v394 = vrot.slane %v393, 4
      %v396 = vshll.u32 %v206, 16
      %v398 = vrot.slane %v396, 5
      %v399 = vsel %vm217, %v394, %v398
      %v400 = vshrl.u32 %v206, 16
      %v402 = vrot.slane %v400, 4
      %v403 = vor.u32 %v402, %v398
      %v404 = vrot.slane %v403, 4
      %v406 = vshll.u32 %v207, 16
      %v408 = vrot.slane %v406, 5
      %v409 = vsel %vm217, %v404, %v408
      %s410 = scalar_lea.vmem %s1, 2
      %v411 = vld [vmem:[%s410] sm:$0x3]
      %v412 = vunpack.c.l.b16 %v231
      %v413 = vunpack.c.l.b16 %v241
      %v414 = vunpack.c.l.b16 %v255
      %v415 = vunpack.c.l.b16 %v265
      %v416 = vunpack.c.l.b16 %v279
      %v417 = vunpack.c.l.b16 %v289
      %v418 = vunpack.c.l.b16 %v303
      %v419 = vunpack.c.l.b16 %v313
      %v420 = vunpack.c.l.b16 %v327
      %v421 = vunpack.c.l.b16 %v337
      %v422 = vunpack.c.l.b16 %v351
      %v423 = vunpack.c.l.b16 %v361
      %v424 = vunpack.c.l.b16 %v375
      %v425 = vunpack.c.l.b16 %v385
      %v426 = vunpack.c.l.b16 %v399
      %v427 = vunpack.c.l.b16 %v409
      %v428 = vpack.c.b16 %v413, %v412
      %v429 = vpack.c.b16 %v415, %v414
      %v430 = vpack.c.b16 %v417, %v416
      %v431 = vpack.c.b16 %v419, %v418
      %v432 = vpack.c.b16 %v421, %v420
      %v433 = vpack.c.b16 %v423, %v422
      %v434 = vpack.c.b16 %v425, %v424
      %v435 = vpack.c.b16 %v427, %v426
      %vm436 = vcmask 31744
      %v438 = vsel %vm436, %v428, 0
      %v441 = vsel %vm436, %v429, 0
      %v444 = vsel %vm436, %v430, 0
      %v447 = vsel %vm436, %v431, 0
      %v450 = vsel %vm436, %v432, 0
      %v453 = vsel %vm436, %v433, 0
      %v456 = vsel %vm436, %v434, 0
      %v459 = vsel %vm436, %v435, 0
      %vm461 = vcmask 1041408
      %v463 = vsel %vm461, %v411, 0
      %465 = vmatprep.subr.bf16.mxu0 0
      %466 = vmatpush1.bf16.msra.mxu0 %v463
      %467 = vmatprep.subr.bf16.mxu0 0
      %468 = vmatpush1.bf16.msra.mxu0 0
      %469 = vmatprep.subr.bf16.mxu0 0
      %470 = vmatpush1.bf16.msra.mxu0 0
      %471 = vmatprep.subr.bf16.mxu0 0
      %472 = vmatpush1.bf16.msra.mxu0 0
      %473 = vmatprep.subr.bf16.mxu0 0
      %474 = vmatpush1.bf16.msra.mxu0 0
      %475 = vmatprep.subr.bf16.mxu0 0
      %476 = vmatpush1.bf16.msra.mxu0 0
      %477 = vmatprep.subr.bf16.mxu0 0
      %478 = vmatpush1.bf16.msra.mxu0 0
      %479 = vmatprep.subr.bf16.mxu0 0
      %480 = vmatpush1.bf16.msra.mxu0 0
      %481 = vmatprep.subr.bf16.mxu0 0
      %482 = vmatpush1.bf16.msra.mxu0 0
      %483 = vmatprep.subr.bf16.mxu0 0
      %484 = vmatpush1.bf16.msra.mxu0 0
      %485 = vmatprep.subr.bf16.mxu0 0
      %486 = vmatpush1.bf16.msra.mxu0 0
      %487 = vmatprep.subr.bf16.mxu0 0
      %488 = vmatpush1.bf16.msra.mxu0 0
      %489 = vmatprep.subr.bf16.mxu0 0
      %490 = vmatpush1.bf16.msra.mxu0 0
      %491 = vmatprep.subr.bf16.mxu0 0
      %492 = vmatpush1.bf16.msra.mxu0 0
      %493 = vmatprep.subr.bf16.mxu0 0
      %494 = vmatpush1.bf16.msra.mxu0 0
      %495 = vmatprep.subr.bf16.mxu0 0
      %496 = vmatpush1.bf16.msra.mxu0 0
      %497 = vmatprep.mubr.bf16.mxu0 0
      %498 = vmatmul.mubr.bf16.gmra.mrb[0].mxu0 %v438
      %v499 = vpop.f32.mrb[0].mxu0
      %v500 = vadd.f32 0.0, %v499
      %v501 = vpop.f32.mrb[0].mxu0
      %v502 = vpop.f32.mrb[0].mxu0
      %v503 = vadd.f32 0.0, %v502
      %v504 = vpop.f32.mrb[0].mxu0
      %505 = vmatprep.mubr.bf16.mxu0 0
      %506 = vmatmul.mubr.bf16.gmra.mrb[0].mxu0 %v441
      %v507 = vpop.f32.mrb[0].mxu0
      %v508 = vadd.f32 0.0, %v507
      %v509 = vpop.f32.mrb[0].mxu0
      %v510 = vpop.f32.mrb[0].mxu0
      %v511 = vadd.f32 0.0, %v510
      %v512 = vpop.f32.mrb[0].mxu0
      %513 = vmatprep.mubr.bf16.mxu0 0
      %514 = vmatmul.mubr.bf16.gmra.mrb[0].mxu0 %v444
      %v515 = vpop.f32.mrb[0].mxu0
      %v516 = vadd.f32 0.0, %v515
      %v517 = vpop.f32.mrb[0].mxu0
      %v518 = vpop.f32.mrb[0].mxu0
      %v519 = vadd.f32 0.0, %v518
      %v520 = vpop.f32.mrb[0].mxu0
      %521 = vmatprep.mubr.bf16.mxu0 0
      %522 = vmatmul.mubr.bf16.gmra.mrb[0].mxu0 %v447
      %v523 = vpop.f32.mrb[0].mxu0
      %v524 = vadd.f32 0.0, %v523
      %v525 = vpop.f32.mrb[0].mxu0
      %v526 = vpop.f32.mrb[0].mxu0
      %v527 = vadd.f32 0.0, %v526
      %v528 = vpop.f32.mrb[0].mxu0
      %529 = vmatprep.mubr.bf16.mxu0 0
      %530 = vmatmul.mubr.bf16.gmra.mrb[0].mxu0 %v450
      %v531 = vpop.f32.mrb[0].mxu0
      %v532 = vadd.f32 0.0, %v531
      %v533 = vpop.f32.mrb[0].mxu0
      %v534 = vpop.f32.mrb[0].mxu0
      %v535 = vadd.f32 0.0, %v534
      %v536 = vpop.f32.mrb[0].mxu0
      %537 = vmatprep.mubr.bf16.mxu0 0
      %538 = vmatmul.mubr.bf16.gmra.mrb[0].mxu0 %v453
      %v539 = vpop.f32.mrb[0].mxu0
      %v540 = vadd.f32 0.0, %v539
      %v541 = vpop.f32.mrb[0].mxu0
      %v542 = vpop.f32.mrb[0].mxu0
      %v543 = vadd.f32 0.0, %v542
      %v544 = vpop.f32.mrb[0].mxu0
      %545 = vmatprep.mubr.bf16.mxu0 0
      %546 = vmatmul.mubr.bf16.gmra.mrb[0].mxu0 %v456
      %v547 = vpop.f32.mrb[0].mxu0
      %v548 = vadd.f32 0.0, %v547
      %v549 = vpop.f32.mrb[0].mxu0
      %v550 = vpop.f32.mrb[0].mxu0
      %v551 = vadd.f32 0.0, %v550
      %v552 = vpop.f32.mrb[0].mxu0
      %553 = vmatprep.mubr.bf16.mxu0 0
      %554 = vmatmul.mubr.bf16.gmra.mrb[0].mxu0 %v459
      %v555 = vpop.f32.mrb[0].mxu0
      %v556 = vadd.f32 0.0, %v555
      %v557 = vpop.f32.mrb[0].mxu0
      %v558 = vpop.f32.mrb[0].mxu0
      %v559 = vadd.f32 0.0, %v558
      %v560 = vpop.f32.mrb[0].mxu0
      %561 = vdwg.mxu0
      %v578 = vunpack.c.l.b16 %v184
      %v579 = vunpack.c.l.b16 %v185
      %v580 = vunpack.c.l.b16 %v187
      %v581 = vunpack.c.l.b16 %v188
      %v582 = vunpack.c.l.b16 %v190
      %v583 = vunpack.c.l.b16 %v191
      %v584 = vunpack.c.l.b16 %v193
      %v585 = vunpack.c.l.b16 %v194
      %v586 = vunpack.c.l.b16 %v196
      %v587 = vunpack.c.l.b16 %v197
      %v588 = vunpack.c.l.b16 %v199
      %v589 = vunpack.c.l.b16 %v200
      %v590 = vunpack.c.l.b16 %v202
      %v591 = vunpack.c.l.b16 %v203
      %v592 = vunpack.c.l.b16 %v205
      %v593 = vunpack.c.l.b16 %v206
      %v594 = vpack.c.b16 %v579, %v578
      %v595 = vpack.c.b16 %v581, %v580
      %v596 = vpack.c.b16 %v583, %v582
      %v597 = vpack.c.b16 %v585, %v584
      %v598 = vpack.c.b16 %v587, %v586
      %v599 = vpack.c.b16 %v589, %v588
      %v600 = vpack.c.b16 %v591, %v590
      %v601 = vpack.c.b16 %v593, %v592
      %v603 = vsel %vm436, %v594, 0
      %v606 = vsel %vm436, %v595, 0
      %v609 = vsel %vm436, %v596, 0
      %v612 = vsel %vm436, %v597, 0
      %v615 = vsel %vm436, %v598, 0
      %v618 = vsel %vm436, %v599, 0
      %v621 = vsel %vm436, %v600, 0
      %v624 = vsel %vm436, %v601, 0
      %v627 = vsel %vm461, %v214, 0
      %629 = vmatprep.subr.bf16.mxu0 0
      %630 = vmatpush1.bf16.msra.mxu0 %v627
      %631 = vmatprep.subr.bf16.mxu0 0
      %632 = vmatpush1.bf16.msra.mxu0 0
      %633 = vmatprep.subr.bf16.mxu0 0
      %634 = vmatpush1.bf16.msra.mxu0 0
      %635 = vmatprep.subr.bf16.mxu0 0
      %636 = vmatpush1.bf16.msra.mxu0 0
      %637 = vmatprep.subr.bf16.mxu0 0
      %638 = vmatpush1.bf16.msra.mxu0 0
      %639 = vmatprep.subr.bf16.mxu0 0
      %640 = vmatpush1.bf16.msra.mxu0 0
      %641 = vmatprep.subr.bf16.mxu0 0
      %642 = vmatpush1.bf16.msra.mxu0 0
      %643 = vmatprep.subr.bf16.mxu0 0
      %644 = vmatpush1.bf16.msra.mxu0 0
      %645 = vmatprep.subr.bf16.mxu0 0
      %646 = vmatpush1.bf16.msra.mxu0 0
      %647 = vmatprep.subr.bf16.mxu0 0
      %648 = vmatpush1.bf16.msra.mxu0 0
      %649 = vmatprep.subr.bf16.mxu0 0
      %650 = vmatpush1.bf16.msra.mxu0 0
      %651 = vmatprep.subr.bf16.mxu0 0
      %652 = vmatpush1.bf16.msra.mxu0 0
      %653 = vmatprep.subr.bf16.mxu0 0
      %654 = vmatpush1.bf16.msra.mxu0 0
      %655 = vmatprep.subr.bf16.mxu0 0
      %656 = vmatpush1.bf16.msra.mxu0 0
      %657 = vmatprep.subr.bf16.mxu0 0
      %658 = vmatpush1.bf16.msra.mxu0 0
      %659 = vmatprep.subr.bf16.mxu0 0
      %660 = vmatpush1.bf16.msra.mxu0 0
      %661 = vmatprep.mubr.bf16.mxu0 0
      %662 = vmatmul.mubr.bf16.gmra.mrb[0].mxu0 %v603
      %v663 = vpop.f32.mrb[0].mxu0
      %v664 = vadd.f32 %v500, %v663
      %v665 = vpop.f32.mrb[0].mxu0
      %v666 = vpop.f32.mrb[0].mxu0
      %v667 = vadd.f32 %v503, %v666
      %v668 = vpop.f32.mrb[0].mxu0
      %669 = vmatprep.mubr.bf16.mxu0 0
      %670 = vmatmul.mubr.bf16.gmra.mrb[0].mxu0 %v606
      %v671 = vpop.f32.mrb[0].mxu0
      %v672 = vadd.f32 %v508, %v671
      %v673 = vpop.f32.mrb[0].mxu0
      %v674 = vpop.f32.mrb[0].mxu0
      %v675 = vadd.f32 %v511, %v674
      %v676 = vpop.f32.mrb[0].mxu0
      %677 = vmatprep.mubr.bf16.mxu0 0
      %678 = vmatmul.mubr.bf16.gmra.mrb[0].mxu0 %v609
      %v679 = vpop.f32.mrb[0].mxu0
      %v680 = vadd.f32 %v516, %v679
      %v681 = vpop.f32.mrb[0].mxu0
      %v682 = vpop.f32.mrb[0].mxu0
      %v683 = vadd.f32 %v519, %v682
      %v684 = vpop.f32.mrb[0].mxu0
      %685 = vmatprep.mubr.bf16.mxu0 0
      %686 = vmatmul.mubr.bf16.gmra.mrb[0].mxu0 %v612
      %v687 = vpop.f32.mrb[0].mxu0
      %v688 = vadd.f32 %v524, %v687
      %v689 = vpop.f32.mrb[0].mxu0
      %v690 = vpop.f32.mrb[0].mxu0
      %v691 = vadd.f32 %v527, %v690
      %v692 = vpop.f32.mrb[0].mxu0
      %693 = vmatprep.mubr.bf16.mxu0 0
      %694 = vmatmul.mubr.bf16.gmra.mrb[0].mxu0 %v615
      %v695 = vpop.f32.mrb[0].mxu0
      %v696 = vadd.f32 %v532, %v695
      %v697 = vpop.f32.mrb[0].mxu0
      %v698 = vpop.f32.mrb[0].mxu0
      %v699 = vadd.f32 %v535, %v698
      %v700 = vpop.f32.mrb[0].mxu0
      %701 = vmatprep.mubr.bf16.mxu0 0
      %702 = vmatmul.mubr.bf16.gmra.mrb[0].mxu0 %v618
      %v703 = vpop.f32.mrb[0].mxu0
      %v704 = vadd.f32 %v540, %v703
      %v705 = vpop.f32.mrb[0].mxu0
      %v706 = vpop.f32.mrb[0].mxu0
      %v707 = vadd.f32 %v543, %v706
      %v708 = vpop.f32.mrb[0].mxu0
      %709 = vmatprep.mubr.bf16.mxu0 0
      %710 = vmatmul.mubr.bf16.gmra.mrb[0].mxu0 %v621
      %v711 = vpop.f32.mrb[0].mxu0
      %v712 = vadd.f32 %v548, %v711
      %v713 = vpop.f32.mrb[0].mxu0
      %v714 = vpop.f32.mrb[0].mxu0
      %v715 = vadd.f32 %v551, %v714
      %v716 = vpop.f32.mrb[0].mxu0
      %717 = vmatprep.mubr.bf16.mxu0 0
      %718 = vmatmul.mubr.bf16.gmra.mrb[0].mxu0 %v624
      %v719 = vpop.f32.mrb[0].mxu0
      %v720 = vadd.f32 %v556, %v719
      %v721 = vpop.f32.mrb[0].mxu0
      %v722 = vpop.f32.mrb[0].mxu0
      %v723 = vadd.f32 %v559, %v722
      %v724 = vpop.f32.mrb[0].mxu0
      %725 = vdwg.mxu0
      %vm734 = vcmask 1042432
      %vm735 = vcmask 1046532
      %vm736 = vmor %vm734, %vm735
      %v737 = vrot.slane %v184, 5
      %v738 = vrot.slane %v737, 4
      %v739 = vrot.slane %v185, 5
      %v740 = vsel %vm736, %v738, %v739
      %v741 = vrot.slane %v739, 4
      %v742 = vrot.slane %v186, 5
      %v743 = vsel %vm736, %v741, %v742
      %v744 = vrot.slane %v187, 5
      %v745 = vrot.slane %v744, 4
      %v746 = vrot.slane %v188, 5
      %v747 = vsel %vm736, %v745, %v746
      %v748 = vrot.slane %v746, 4
      %v749 = vrot.slane %v189, 5
      %v750 = vsel %vm736, %v748, %v749
      %v751 = vrot.slane %v190, 5
      %v752 = vrot.slane %v751, 4
      %v753 = vrot.slane %v191, 5
      %v754 = vsel %vm736, %v752, %v753
      %v755 = vrot.slane %v753, 4
      %v756 = vrot.slane %v192, 5
      %v757 = vsel %vm736, %v755, %v756
      %v758 = vrot.slane %v193, 5
      %v759 = vrot.slane %v758, 4
      %v760 = vrot.slane %v194, 5
      %v761 = vsel %vm736, %v759, %v760
      %v762 = vrot.slane %v760, 4
      %v763 = vrot.slane %v195, 5
      %v764 = vsel %vm736, %v762, %v763
      %v765 = vrot.slane %v196, 5
      %v766 = vrot.slane %v765, 4
      %v767 = vrot.slane %v197, 5
      %v768 = vsel %vm736, %v766, %v767
      %v769 = vrot.slane %v767, 4
      %v770 = vrot.slane %v198, 5
      %v771 = vsel %vm736, %v769, %v770
      %v772 = vrot.slane %v199, 5
      %v773 = vrot.slane %v772, 4
      %v774 = vrot.slane %v200, 5
      %v775 = vsel %vm736, %v773, %v774
      %v776 = vrot.slane %v774, 4
      %v777 = vrot.slane %v201, 5
      %v778 = vsel %vm736, %v776, %v777
      %v779 = vrot.slane %v202, 5
      %v780 = vrot.slane %v779, 4
      %v781 = vrot.slane %v203, 5
      %v782 = vsel %vm736, %v780, %v781
      %v783 = vrot.slane %v781, 4
      %v784 = vrot.slane %v204, 5
      %v785 = vsel %vm736, %v783, %v784
      %v786 = vrot.slane %v205, 5
      %v787 = vrot.slane %v786, 4
      %v788 = vrot.slane %v206, 5
      %v789 = vsel %vm736, %v787, %v788
      %v790 = vrot.slane %v788, 4
      %v791 = vrot.slane %v207, 5
      %v792 = vsel %vm736, %v790, %v791
      %s793 = scalar_lea.vmem %s1, 4
      %v794 = vld [vmem:[%s793] sm:$0x3]
      %v795 = vunpack.c.l.b16 %v740
      %v796 = vunpack.c.l.b16 %v743
      %v797 = vunpack.c.l.b16 %v747
      %v798 = vunpack.c.l.b16 %v750
      %v799 = vunpack.c.l.b16 %v754
      %v800 = vunpack.c.l.b16 %v757
      %v801 = vunpack.c.l.b16 %v761
      %v802 = vunpack.c.l.b16 %v764
      %v803 = vunpack.c.l.b16 %v768
      %v804 = vunpack.c.l.b16 %v771
      %v805 = vunpack.c.l.b16 %v775
      %v806 = vunpack.c.l.b16 %v778
      %v807 = vunpack.c.l.b16 %v782
      %v808 = vunpack.c.l.b16 %v785
      %v809 = vunpack.c.l.b16 %v789
      %v810 = vunpack.c.l.b16 %v792
      %v811 = vpack.c.b16 %v796, %v795
      %v812 = vpack.c.b16 %v798, %v797
      %v813 = vpack.c.b16 %v800, %v799
      %v814 = vpack.c.b16 %v802, %v801
      %v815 = vpack.c.b16 %v804, %v803
      %v816 = vpack.c.b16 %v806, %v805
      %v817 = vpack.c.b16 %v808, %v807
      %v818 = vpack.c.b16 %v810, %v809
      %v820 = vsel %vm436, %v811, 0
      %v823 = vsel %vm436, %v812, 0
      %v826 = vsel %vm436, %v813, 0
      %v829 = vsel %vm436, %v814, 0
      %v832 = vsel %vm436, %v815, 0
      %v835 = vsel %vm436, %v816, 0
      %v838 = vsel %vm436, %v817, 0
      %v841 = vsel %vm436, %v818, 0
      %v844 = vsel %vm461, %v794, 0
      %846 = vmatprep.subr.bf16.mxu0 0
      %847 = vmatpush1.bf16.msra.mxu0 %v844
      %848 = vmatprep.subr.bf16.mxu0 0
      %849 = vmatpush1.bf16.msra.mxu0 0
      %850 = vmatprep.subr.bf16.mxu0 0
      %851 = vmatpush1.bf16.msra.mxu0 0
      %852 = vmatprep.subr.bf16.mxu0 0
      %853 = vmatpush1.bf16.msra.mxu0 0
      %854 = vmatprep.subr.bf16.mxu0 0
      %855 = vmatpush1.bf16.msra.mxu0 0
      %856 = vmatprep.subr.bf16.mxu0 0
      %857 = vmatpush1.bf16.msra.mxu0 0
      %858 = vmatprep.subr.bf16.mxu0 0
      %859 = vmatpush1.bf16.msra.mxu0 0
      %860 = vmatprep.subr.bf16.mxu0 0
      %861 = vmatpush1.bf16.msra.mxu0 0
      %862 = vmatprep.subr.bf16.mxu0 0
      %863 = vmatpush1.bf16.msra.mxu0 0
      %864 = vmatprep.subr.bf16.mxu0 0
      %865 = vmatpush1.bf16.msra.mxu0 0
      %866 = vmatprep.subr.bf16.mxu0 0
      %867 = vmatpush1.bf16.msra.mxu0 0
      %868 = vmatprep.subr.bf16.mxu0 0
      %869 = vmatpush1.bf16.msra.mxu0 0
      %870 = vmatprep.subr.bf16.mxu0 0
      %871 = vmatpush1.bf16.msra.mxu0 0
      %872 = vmatprep.subr.bf16.mxu0 0
      %873 = vmatpush1.bf16.msra.mxu0 0
      %874 = vmatprep.subr.bf16.mxu0 0
      %875 = vmatpush1.bf16.msra.mxu0 0
      %876 = vmatprep.subr.bf16.mxu0 0
      %877 = vmatpush1.bf16.msra.mxu0 0
      %878 = vmatprep.mubr.bf16.mxu0 0
      %879 = vmatmul.mubr.bf16.gmra.mrb[0].mxu0 %v820
      %v880 = vpop.f32.mrb[0].mxu0
      %v881 = vadd.f32 0.0, %v880
      %v882 = vpop.f32.mrb[0].mxu0
      %v883 = vpop.f32.mrb[0].mxu0
      %v884 = vadd.f32 0.0, %v883
      %v885 = vpop.f32.mrb[0].mxu0
      %886 = vmatprep.mubr.bf16.mxu0 0
      %887 = vmatmul.mubr.bf16.gmra.mrb[0].mxu0 %v823
      %v888 = vpop.f32.mrb[0].mxu0
      %v889 = vadd.f32 0.0, %v888
      %v890 = vpop.f32.mrb[0].mxu0
      %v891 = vpop.f32.mrb[0].mxu0
      %v892 = vadd.f32 0.0, %v891
      %v893 = vpop.f32.mrb[0].mxu0
      %894 = vmatprep.mubr.bf16.mxu0 0
      %895 = vmatmul.mubr.bf16.gmra.mrb[0].mxu0 %v826
      %v896 = vpop.f32.mrb[0].mxu0
      %v897 = vadd.f32 0.0, %v896
      %v898 = vpop.f32.mrb[0].mxu0
      %v899 = vpop.f32.mrb[0].mxu0
      %v900 = vadd.f32 0.0, %v899
      %v901 = vpop.f32.mrb[0].mxu0
      %902 = vmatprep.mubr.bf16.mxu0 0
      %903 = vmatmul.mubr.bf16.gmra.mrb[0].mxu0 %v829
      %v904 = vpop.f32.mrb[0].mxu0
      %v905 = vadd.f32 0.0, %v904
      %v906 = vpop.f32.mrb[0].mxu0
      %v907 = vpop.f32.mrb[0].mxu0
      %v908 = vadd.f32 0.0, %v907
      %v909 = vpop.f32.mrb[0].mxu0
      %910 = vmatprep.mubr.bf16.mxu0 0
      %911 = vmatmul.mubr.bf16.gmra.mrb[0].mxu0 %v832
      %v912 = vpop.f32.mrb[0].mxu0
      %v913 = vadd.f32 0.0, %v912
      %v914 = vpop.f32.mrb[0].mxu0
      %v915 = vpop.f32.mrb[0].mxu0
      %v916 = vadd.f32 0.0, %v915
      %v917 = vpop.f32.mrb[0].mxu0
      %918 = vmatprep.mubr.bf16.mxu0 0
      %919 = vmatmul.mubr.bf16.gmra.mrb[0].mxu0 %v835
      %v920 = vpop.f32.mrb[0].mxu0
      %v921 = vadd.f32 0.0, %v920
      %v922 = vpop.f32.mrb[0].mxu0
      %v923 = vpop.f32.mrb[0].mxu0
      %v924 = vadd.f32 0.0, %v923
      %v925 = vpop.f32.mrb[0].mxu0
      %926 = vmatprep.mubr.bf16.mxu0 0
      %927 = vmatmul.mubr.bf16.gmra.mrb[0].mxu0 %v838
      %v928 = vpop.f32.mrb[0].mxu0
      %v929 = vadd.f32 0.0, %v928
      %v930 = vpop.f32.mrb[0].mxu0
      %v931 = vpop.f32.mrb[0].mxu0
      %v932 = vadd.f32 0.0, %v931
      %v933 = vpop.f32.mrb[0].mxu0
      %934 = vmatprep.mubr.bf16.mxu0 0
      %935 = vmatmul.mubr.bf16.gmra.mrb[0].mxu0 %v841
      %v936 = vpop.f32.mrb[0].mxu0
      %v937 = vadd.f32 0.0, %v936
      %v938 = vpop.f32.mrb[0].mxu0
      %v939 = vpop.f32.mrb[0].mxu0
      %v940 = vadd.f32 0.0, %v939
      %v941 = vpop.f32.mrb[0].mxu0
      %942 = vdwg.mxu0
      %v943 = vadd.f32 %v664, %v881
      %v944 = vadd.f32 %v667, %v884
      %v945 = vadd.f32 %v672, %v889
      %v946 = vadd.f32 %v675, %v892
      %v947 = vadd.f32 %v680, %v897
      %v948 = vadd.f32 %v683, %v900
      %v949 = vadd.f32 %v688, %v905
      %v950 = vadd.f32 %v691, %v908
      %v951 = vadd.f32 %v696, %v913
      %v952 = vadd.f32 %v699, %v916
      %v953 = vadd.f32 %v704, %v921
      %v954 = vadd.f32 %v707, %v924
      %v955 = vadd.f32 %v712, %v929
      %v956 = vadd.f32 %v715, %v932
      %v957 = vadd.f32 %v720, %v937
      %v958 = vadd.f32 %v723, %v940
      %s959 = scalar_lea.vmem %s1, 6
      %v960 = vld [vmem:[%s959] sm:$0x3]
      %v963 = vunpack.c.l.b16 %v208
      %v964 = vunpack.c.l.b16 %v209
      %v965 = vpack.c.b16 %v964, %v963
      %v967 = vsel %vm436, %v965, 0
      %v970 = vsel %vm461, %v960, 0
      %972 = vmatprep.subr.bf16.mxu0 0
      %973 = vmatpush1.bf16.msra.mxu0 %v970
      %974 = vmatprep.subr.bf16.mxu0 0
      %975 = vmatpush1.bf16.msra.mxu0 0
      %976 = vmatprep.subr.bf16.mxu0 0
      %977 = vmatpush1.bf16.msra.mxu0 0
      %978 = vmatprep.subr.bf16.mxu0 0
      %979 = vmatpush1.bf16.msra.mxu0 0
      %980 = vmatprep.subr.bf16.mxu0 0
      %981 = vmatpush1.bf16.msra.mxu0 0
      %982 = vmatprep.subr.bf16.mxu0 0
      %983 = vmatpush1.bf16.msra.mxu0 0
      %984 = vmatprep.subr.bf16.mxu0 0
      %985 = vmatpush1.bf16.msra.mxu0 0
      %986 = vmatprep.subr.bf16.mxu0 0
      %987 = vmatpush1.bf16.msra.mxu0 0
      %988 = vmatprep.subr.bf16.mxu0 0
      %989 = vmatpush1.bf16.msra.mxu0 0
      %990 = vmatprep.subr.bf16.mxu0 0
      %991 = vmatpush1.bf16.msra.mxu0 0
      %992 = vmatprep.subr.bf16.mxu0 0
      %993 = vmatpush1.bf16.msra.mxu0 0
      %994 = vmatprep.subr.bf16.mxu0 0
      %995 = vmatpush1.bf16.msra.mxu0 0
      %996 = vmatprep.subr.bf16.mxu0 0
      %997 = vmatpush1.bf16.msra.mxu0 0
      %998 = vmatprep.subr.bf16.mxu0 0
      %999 = vmatpush1.bf16.msra.mxu0 0
      %1000 = vmatprep.subr.bf16.mxu0 0
      %1001 = vmatpush1.bf16.msra.mxu0 0
      %1002 = vmatprep.subr.bf16.mxu0 0
      %1003 = vmatpush1.bf16.msra.mxu0 0
      %1004 = vmatprep.mubr.bf16.mxu0 0
      %1005 = vmatmul.mubr.bf16.gmra.mrb[0].mxu0 %v606
      %v1006 = vpop.f32.mrb[0].mxu0
      %v1007 = vadd.f32 0.0, %v1006
      %v1008 = vpop.f32.mrb[0].mxu0
      %v1009 = vpop.f32.mrb[0].mxu0
      %v1010 = vadd.f32 0.0, %v1009
      %v1011 = vpop.f32.mrb[0].mxu0
      %1012 = vmatprep.mubr.bf16.mxu0 0
      %1013 = vmatmul.mubr.bf16.gmra.mrb[0].mxu0 %v609
      %v1014 = vpop.f32.mrb[0].mxu0
      %v1015 = vadd.f32 0.0, %v1014
      %v1016 = vpop.f32.mrb[0].mxu0
      %v1017 = vpop.f32.mrb[0].mxu0
      %v1018 = vadd.f32 0.0, %v1017
      %v1019 = vpop.f32.mrb[0].mxu0
      %1020 = vmatprep.mubr.bf16.mxu0 0
      %1021 = vmatmul.mubr.bf16.gmra.mrb[0].mxu0 %v612
      %v1022 = vpop.f32.mrb[0].mxu0
      %v1023 = vadd.f32 0.0, %v1022
      %v1024 = vpop.f32.mrb[0].mxu0
      %v1025 = vpop.f32.mrb[0].mxu0
      %v1026 = vadd.f32 0.0, %v1025
      %v1027 = vpop.f32.mrb[0].mxu0
      %1028 = vmatprep.mubr.bf16.mxu0 0
      %1029 = vmatmul.mubr.bf16.gmra.mrb[0].mxu0 %v615
      %v1030 = vpop.f32.mrb[0].mxu0
      %v1031 = vadd.f32 0.0, %v1030
      %v1032 = vpop.f32.mrb[0].mxu0
      %v1033 = vpop.f32.mrb[0].mxu0
      %v1034 = vadd.f32 0.0, %v1033
      %v1035 = vpop.f32.mrb[0].mxu0
      %1036 = vmatprep.mubr.bf16.mxu0 0
      %1037 = vmatmul.mubr.bf16.gmra.mrb[0].mxu0 %v618
      %v1038 = vpop.f32.mrb[0].mxu0
      %v1039 = vadd.f32 0.0, %v1038
      %v1040 = vpop.f32.mrb[0].mxu0
      %v1041 = vpop.f32.mrb[0].mxu0
      %v1042 = vadd.f32 0.0, %v1041
      %v1043 = vpop.f32.mrb[0].mxu0
      %1044 = vmatprep.mubr.bf16.mxu0 0
      %1045 = vmatmul.mubr.bf16.gmra.mrb[0].mxu0 %v621
      %v1046 = vpop.f32.mrb[0].mxu0
      %v1047 = vadd.f32 0.0, %v1046
      %v1048 = vpop.f32.mrb[0].mxu0
      %v1049 = vpop.f32.mrb[0].mxu0
      %v1050 = vadd.f32 0.0, %v1049
      %v1051 = vpop.f32.mrb[0].mxu0
      %1052 = vmatprep.mubr.bf16.mxu0 0
      %1053 = vmatmul.mubr.bf16.gmra.mrb[0].mxu0 %v624
      %v1054 = vpop.f32.mrb[0].mxu0
      %v1055 = vadd.f32 0.0, %v1054
      %v1056 = vpop.f32.mrb[0].mxu0
      %v1057 = vpop.f32.mrb[0].mxu0
      %v1058 = vadd.f32 0.0, %v1057
      %v1059 = vpop.f32.mrb[0].mxu0
      %1060 = vmatprep.mubr.bf16.mxu0 0
      %1061 = vmatmul.mubr.bf16.gmra.mrb[0].mxu0 %v967
      %v1062 = vpop.f32.mrb[0].mxu0
      %v1063 = vadd.f32 0.0, %v1062
      %v1064 = vpop.f32.mrb[0].mxu0
      %v1065 = vpop.f32.mrb[0].mxu0
      %v1066 = vadd.f32 0.0, %v1065
      %v1067 = vpop.f32.mrb[0].mxu0
      %1068 = vdwg.mxu0
      %v1069 = vadd.f32 %v943, %v1007
      %v1070 = vadd.f32 %v944, %v1010
      %v1071 = vadd.f32 %v945, %v1015
      %v1072 = vadd.f32 %v946, %v1018
      %v1073 = vadd.f32 %v947, %v1023
      %v1074 = vadd.f32 %v948, %v1026
      %v1075 = vadd.f32 %v949, %v1031
      %v1076 = vadd.f32 %v950, %v1034
      %v1077 = vadd.f32 %v951, %v1039
      %v1078 = vadd.f32 %v952, %v1042
      %v1079 = vadd.f32 %v953, %v1047
      %v1080 = vadd.f32 %v954, %v1050
      %v1081 = vadd.f32 %v955, %v1055
      %v1082 = vadd.f32 %v956, %v1058
      %v1083 = vadd.f32 %v957, %v1063
      %v1084 = vadd.f32 %v958, %v1066
      %v1086 = vshrl.u32 %v208, 16
      %v1088 = vrot.slane %v1086, 4
      %v1089 = vshll.u32 %v208, 16
      %v1091 = vrot.slane %v1089, 5
      %v1092 = vor.u32 %v1088, %v1091
      %v1093 = vrot.slane %v1092, 4
      %v1095 = vshll.u32 %v209, 16
      %v1097 = vrot.slane %v1095, 5
      %v1098 = vsel %vm217, %v1093, %v1097
      %v1099 = vshrl.u32 %v209, 16
      %v1101 = vrot.slane %v1099, 4
      %v1102 = vor.u32 %v1101, %v1097
      %v1103 = vrot.slane %v1102, 4
      %v1105 = vshll.u32 %v210, 16
      %v1107 = vrot.slane %v1105, 5
      %v1108 = vsel %vm217, %v1103, %v1107
      %s1109 = scalar_lea.vmem %s1, 8
      %v1110 = vld [vmem:[%s1109] sm:$0x3]
      %v1111 = vunpack.c.l.b16 %v1098
      %v1112 = vunpack.c.l.b16 %v1108
      %v1113 = vpack.c.b16 %v1112, %v1111
      %v1115 = vsel %vm436, %v1113, 0
      %v1118 = vsel %vm461, %v1110, 0
      %1120 = vmatprep.subr.bf16.mxu0 0
      %1121 = vmatpush1.bf16.msra.mxu0 %v1118
      %1122 = vmatprep.subr.bf16.mxu0 0
      %1123 = vmatpush1.bf16.msra.mxu0 0
      %1124 = vmatprep.subr.bf16.mxu0 0
      %1125 = vmatpush1.bf16.msra.mxu0 0
      %1126 = vmatprep.subr.bf16.mxu0 0
      %1127 = vmatpush1.bf16.msra.mxu0 0
      %1128 = vmatprep.subr.bf16.mxu0 0
      %1129 = vmatpush1.bf16.msra.mxu0 0
      %1130 = vmatprep.subr.bf16.mxu0 0
      %1131 = vmatpush1.bf16.msra.mxu0 0
      %1132 = vmatprep.subr.bf16.mxu0 0
      %1133 = vmatpush1.bf16.msra.mxu0 0
      %1134 = vmatprep.subr.bf16.mxu0 0
      %1135 = vmatpush1.bf16.msra.mxu0 0
      %1136 = vmatprep.subr.bf16.mxu0 0
      %1137 = vmatpush1.bf16.msra.mxu0 0
      %1138 = vmatprep.subr.bf16.mxu0 0
      %1139 = vmatpush1.bf16.msra.mxu0 0
      %1140 = vmatprep.subr.bf16.mxu0 0
      %1141 = vmatpush1.bf16.msra.mxu0 0
      %1142 = vmatprep.subr.bf16.mxu0 0
      %1143 = vmatpush1.bf16.msra.mxu0 0
      %1144 = vmatprep.subr.bf16.mxu0 0
      %1145 = vmatpush1.bf16.msra.mxu0 0
      %1146 = vmatprep.subr.bf16.mxu0 0
      %1147 = vmatpush1.bf16.msra.mxu0 0
      %1148 = vmatprep.subr.bf16.mxu0 0
      %1149 = vmatpush1.bf16.msra.mxu0 0
      %1150 = vmatprep.subr.bf16.mxu0 0
      %1151 = vmatpush1.bf16.msra.mxu0 0
      %1152 = vmatprep.mubr.bf16.mxu0 0
      %1153 = vmatmul.mubr.bf16.gmra.mrb[0].mxu0 %v441
      %v1154 = vpop.f32.mrb[0].mxu0
      %v1155 = vadd.f32 0.0, %v1154
      %v1156 = vpop.f32.mrb[0].mxu0
      %v1157 = vpop.f32.mrb[0].mxu0
      %v1158 = vadd.f32 0.0, %v1157
      %v1159 = vpop.f32.mrb[0].mxu0
      %1160 = vmatprep.mubr.bf16.mxu0 0
      %1161 = vmatmul.mubr.bf16.gmra.mrb[0].mxu0 %v444
      %v1162 = vpop.f32.mrb[0].mxu0
      %v1163 = vadd.f32 0.0, %v1162
      %v1164 = vpop.f32.mrb[0].mxu0
      %v1165 = vpop.f32.mrb[0].mxu0
      %v1166 = vadd.f32 0.0, %v1165
      %v1167 = vpop.f32.mrb[0].mxu0
      %1168 = vmatprep.mubr.bf16.mxu0 0
      %1169 = vmatmul.mubr.bf16.gmra.mrb[0].mxu0 %v447
      %v1170 = vpop.f32.mrb[0].mxu0
      %v1171 = vadd.f32 0.0, %v1170
      %v1172 = vpop.f32.mrb[0].mxu0
      %v1173 = vpop.f32.mrb[0].mxu0
      %v1174 = vadd.f32 0.0, %v1173
      %v1175 = vpop.f32.mrb[0].mxu0
      %1176 = vmatprep.mubr.bf16.mxu0 0
      %1177 = vmatmul.mubr.bf16.gmra.mrb[0].mxu0 %v450
      %v1178 = vpop.f32.mrb[0].mxu0
      %v1179 = vadd.f32 0.0, %v1178
      %v1180 = vpop.f32.mrb[0].mxu0
      %v1181 = vpop.f32.mrb[0].mxu0
      %v1182 = vadd.f32 0.0, %v1181
      %v1183 = vpop.f32.mrb[0].mxu0
      %1184 = vmatprep.mubr.bf16.mxu0 0
      %1185 = vmatmul.mubr.bf16.gmra.mrb[0].mxu0 %v453
      %v1186 = vpop.f32.mrb[0].mxu0
      %v1187 = vadd.f32 0.0, %v1186
      %v1188 = vpop.f32.mrb[0].mxu0
      %v1189 = vpop.f32.mrb[0].mxu0
      %v1190 = vadd.f32 0.0, %v1189
      %v1191 = vpop.f32.mrb[0].mxu0
      %1192 = vmatprep.mubr.bf16.mxu0 0
      %1193 = vmatmul.mubr.bf16.gmra.mrb[0].mxu0 %v456
      %v1194 = vpop.f32.mrb[0].mxu0
      %v1195 = vadd.f32 0.0, %v1194
      %v1196 = vpop.f32.mrb[0].mxu0
      %v1197 = vpop.f32.mrb[0].mxu0
      %v1198 = vadd.f32 0.0, %v1197
      %v1199 = vpop.f32.mrb[0].mxu0
      %1200 = vmatprep.mubr.bf16.mxu0 0
      %1201 = vmatmul.mubr.bf16.gmra.mrb[0].mxu0 %v459
      %v1202 = vpop.f32.mrb[0].mxu0
      %v1203 = vadd.f32 0.0, %v1202
      %v1204 = vpop.f32.mrb[0].mxu0
      %v1205 = vpop.f32.mrb[0].mxu0
      %v1206 = vadd.f32 0.0, %v1205
      %v1207 = vpop.f32.mrb[0].mxu0
      %1208 = vmatprep.mubr.bf16.mxu0 0
      %1209 = vmatmul.mubr.bf16.gmra.mrb[0].mxu0 %v1115
      %v1210 = vpop.f32.mrb[0].mxu0
      %v1211 = vadd.f32 0.0, %v1210
      %v1212 = vpop.f32.mrb[0].mxu0
      %v1213 = vpop.f32.mrb[0].mxu0
      %v1214 = vadd.f32 0.0, %v1213
      %v1215 = vpop.f32.mrb[0].mxu0
      %1216 = vdwg.mxu0
      %v1217 = vadd.f32 %v1069, %v1155
      %v1218 = vadd.f32 %v1070, %v1158
      %v1219 = vadd.f32 %v1071, %v1163
      %v1220 = vadd.f32 %v1072, %v1166
      %v1221 = vadd.f32 %v1073, %v1171
      %v1222 = vadd.f32 %v1074, %v1174
      %v1223 = vadd.f32 %v1075, %v1179
      %v1224 = vadd.f32 %v1076, %v1182
      %v1225 = vadd.f32 %v1077, %v1187
      %v1226 = vadd.f32 %v1078, %v1190
      %v1227 = vadd.f32 %v1079, %v1195
      %v1228 = vadd.f32 %v1080, %v1198
      %v1229 = vadd.f32 %v1081, %v1203
      %v1230 = vadd.f32 %v1082, %v1206
      %v1231 = vadd.f32 %v1083, %v1211
      %v1232 = vadd.f32 %v1084, %v1214
      %v1234 = vrot.slane %v208, 5
      %v1235 = vrot.slane %v1234, 4
      %v1236 = vrot.slane %v209, 5
      %v1237 = vsel %vm736, %v1235, %v1236
      %v1238 = vrot.slane %v1236, 4
      %v1239 = vrot.slane %v210, 5
      %v1240 = vsel %vm736, %v1238, %v1239
      %s1241 = scalar_lea.vmem %s1, 10
      %v1242 = vld [vmem:[%s1241] sm:$0x3]
      %v1243 = vunpack.c.l.b16 %v1237
      %v1244 = vunpack.c.l.b16 %v1240
      %v1245 = vpack.c.b16 %v1244, %v1243
      %v1247 = vsel %vm436, %v1245, 0
      %v1250 = vsel %vm461, %v1242, 0
      %1252 = vmatprep.subr.bf16.mxu0 0
      %1253 = vmatpush1.bf16.msra.mxu0 %v1250
      %1254 = vmatprep.subr.bf16.mxu0 0
      %1255 = vmatpush1.bf16.msra.mxu0 0
      %1256 = vmatprep.subr.bf16.mxu0 0
      %1257 = vmatpush1.bf16.msra.mxu0 0
      %1258 = vmatprep.subr.bf16.mxu0 0
      %1259 = vmatpush1.bf16.msra.mxu0 0
      %1260 = vmatprep.subr.bf16.mxu0 0
      %1261 = vmatpush1.bf16.msra.mxu0 0
      %1262 = vmatprep.subr.bf16.mxu0 0
      %1263 = vmatpush1.bf16.msra.mxu0 0
      %1264 = vmatprep.subr.bf16.mxu0 0
      %1265 = vmatpush1.bf16.msra.mxu0 0
      %1266 = vmatprep.subr.bf16.mxu0 0
      %1267 = vmatpush1.bf16.msra.mxu0 0
      %1268 = vmatprep.subr.bf16.mxu0 0
      %1269 = vmatpush1.bf16.msra.mxu0 0
      %1270 = vmatprep.subr.bf16.mxu0 0
      %1271 = vmatpush1.bf16.msra.mxu0 0
      %1272 = vmatprep.subr.bf16.mxu0 0
      %1273 = vmatpush1.bf16.msra.mxu0 0
      %1274 = vmatprep.subr.bf16.mxu0 0
      %1275 = vmatpush1.bf16.msra.mxu0 0
      %1276 = vmatprep.subr.bf16.mxu0 0
      %1277 = vmatpush1.bf16.msra.mxu0 0
      %1278 = vmatprep.subr.bf16.mxu0 0
      %1279 = vmatpush1.bf16.msra.mxu0 0
      %1280 = vmatprep.subr.bf16.mxu0 0
      %1281 = vmatpush1.bf16.msra.mxu0 0
      %1282 = vmatprep.subr.bf16.mxu0 0
      %1283 = vmatpush1.bf16.msra.mxu0 0
      %1284 = vmatprep.mubr.bf16.mxu0 0
      %1285 = vmatmul.mubr.bf16.gmra.mrb[0].mxu0 %v823
      %v1286 = vpop.f32.mrb[0].mxu0
      %v1287 = vadd.f32 0.0, %v1286
      %v1288 = vpop.f32.mrb[0].mxu0
      %v1289 = vpop.f32.mrb[0].mxu0
      %v1290 = vadd.f32 0.0, %v1289
      %v1291 = vpop.f32.mrb[0].mxu0
      %1292 = vmatprep.mubr.bf16.mxu0 0
      %1293 = vmatmul.mubr.bf16.gmra.mrb[0].mxu0 %v826
      %v1294 = vpop.f32.mrb[0].mxu0
      %v1295 = vadd.f32 0.0, %v1294
      %v1296 = vpop.f32.mrb[0].mxu0
      %v1297 = vpop.f32.mrb[0].mxu0
      %v1298 = vadd.f32 0.0, %v1297
      %v1299 = vpop.f32.mrb[0].mxu0
      %1300 = vmatprep.mubr.bf16.mxu0 0
      %1301 = vmatmul.mubr.bf16.gmra.mrb[0].mxu0 %v829
      %v1302 = vpop.f32.mrb[0].mxu0
      %v1303 = vadd.f32 0.0, %v1302
      %v1304 = vpop.f32.mrb[0].mxu0
      %v1305 = vpop.f32.mrb[0].mxu0
      %v1306 = vadd.f32 0.0, %v1305
      %v1307 = vpop.f32.mrb[0].mxu0
      %1308 = vmatprep.mubr.bf16.mxu0 0
      %1309 = vmatmul.mubr.bf16.gmra.mrb[0].mxu0 %v832
      %v1310 = vpop.f32.mrb[0].mxu0
      %v1311 = vadd.f32 0.0, %v1310
      %v1312 = vpop.f32.mrb[0].mxu0
      %v1313 = vpop.f32.mrb[0].mxu0
      %v1314 = vadd.f32 0.0, %v1313
      %v1315 = vpop.f32.mrb[0].mxu0
      %1316 = vmatprep.mubr.bf16.mxu0 0
      %1317 = vmatmul.mubr.bf16.gmra.mrb[0].mxu0 %v835
      %v1318 = vpop.f32.mrb[0].mxu0
      %v1319 = vadd.f32 0.0, %v1318
      %v1320 = vpop.f32.mrb[0].mxu0
      %v1321 = vpop.f32.mrb[0].mxu0
      %v1322 = vadd.f32 0.0, %v1321
      %v1323 = vpop.f32.mrb[0].mxu0
      %1324 = vmatprep.mubr.bf16.mxu0 0
      %1325 = vmatmul.mubr.bf16.gmra.mrb[0].mxu0 %v838
      %v1326 = vpop.f32.mrb[0].mxu0
      %v1327 = vadd.f32 0.0, %v1326
      %v1328 = vpop.f32.mrb[0].mxu0
      %v1329 = vpop.f32.mrb[0].mxu0
      %v1330 = vadd.f32 0.0, %v1329
      %v1331 = vpop.f32.mrb[0].mxu0
      %1332 = vmatprep.mubr.bf16.mxu0 0
      %1333 = vmatmul.mubr.bf16.gmra.mrb[0].mxu0 %v841
      %v1334 = vpop.f32.mrb[0].mxu0
      %v1335 = vadd.f32 0.0, %v1334
      %v1336 = vpop.f32.mrb[0].mxu0
      %v1337 = vpop.f32.mrb[0].mxu0
      %v1338 = vadd.f32 0.0, %v1337
      %v1339 = vpop.f32.mrb[0].mxu0
      %1340 = vmatprep.mubr.bf16.mxu0 0
      %1341 = vmatmul.mubr.bf16.gmra.mrb[0].mxu0 %v1247
      %v1342 = vpop.f32.mrb[0].mxu0
      %v1343 = vadd.f32 0.0, %v1342
      %v1344 = vpop.f32.mrb[0].mxu0
      %v1345 = vpop.f32.mrb[0].mxu0
      %v1346 = vadd.f32 0.0, %v1345
      %v1347 = vpop.f32.mrb[0].mxu0
      %1348 = vdwg.mxu0
      %v1349 = vadd.f32 %v1217, %v1287
      %v1350 = vadd.f32 %v1218, %v1290
      %v1351 = vadd.f32 %v1219, %v1295
      %v1352 = vadd.f32 %v1220, %v1298
      %v1353 = vadd.f32 %v1221, %v1303
      %v1354 = vadd.f32 %v1222, %v1306
      %v1355 = vadd.f32 %v1223, %v1311
      %v1356 = vadd.f32 %v1224, %v1314
      %v1357 = vadd.f32 %v1225, %v1319
      %v1358 = vadd.f32 %v1226, %v1322
      %v1359 = vadd.f32 %v1227, %v1327
      %v1360 = vadd.f32 %v1228, %v1330
      %v1361 = vadd.f32 %v1229, %v1335
      %v1362 = vadd.f32 %v1230, %v1338
      %v1363 = vadd.f32 %v1231, %v1343
      %v1364 = vadd.f32 %v1232, %v1346
      %s1365 = scalar_lea.vmem %s1, 12
      %v1366 = vld [vmem:[%s1365] sm:$0x3]
      %v1369 = vunpack.c.l.b16 %v211
      %v1370 = vunpack.c.l.b16 %v212
      %v1371 = vpack.c.b16 %v1370, %v1369
      %v1373 = vsel %vm436, %v1371, 0
      %v1376 = vsel %vm461, %v1366, 0
      %1378 = vmatprep.subr.bf16.mxu0 0
      %1379 = vmatpush1.bf16.msra.mxu0 %v1376
      %1380 = vmatprep.subr.bf16.mxu0 0
      %1381 = vmatpush1.bf16.msra.mxu0 0
      %1382 = vmatprep.subr.bf16.mxu0 0
      %1383 = vmatpush1.bf16.msra.mxu0 0
      %1384 = vmatprep.subr.bf16.mxu0 0
      %1385 = vmatpush1.bf16.msra.mxu0 0
      %1386 = vmatprep.subr.bf16.mxu0 0
      %1387 = vmatpush1.bf16.msra.mxu0 0
      %1388 = vmatprep.subr.bf16.mxu0 0
      %1389 = vmatpush1.bf16.msra.mxu0 0
      %1390 = vmatprep.subr.bf16.mxu0 0
      %1391 = vmatpush1.bf16.msra.mxu0 0
      %1392 = vmatprep.subr.bf16.mxu0 0
      %1393 = vmatpush1.bf16.msra.mxu0 0
      %1394 = vmatprep.subr.bf16.mxu0 0
      %1395 = vmatpush1.bf16.msra.mxu0 0
      %1396 = vmatprep.subr.bf16.mxu0 0
      %1397 = vmatpush1.bf16.msra.mxu0 0
      %1398 = vmatprep.subr.bf16.mxu0 0
      %1399 = vmatpush1.bf16.msra.mxu0 0
      %1400 = vmatprep.subr.bf16.mxu0 0
      %1401 = vmatpush1.bf16.msra.mxu0 0
      %1402 = vmatprep.subr.bf16.mxu0 0
      %1403 = vmatpush1.bf16.msra.mxu0 0
      %1404 = vmatprep.subr.bf16.mxu0 0
      %1405 = vmatpush1.bf16.msra.mxu0 0
      %1406 = vmatprep.subr.bf16.mxu0 0
      %1407 = vmatpush1.bf16.msra.mxu0 0
      %1408 = vmatprep.subr.bf16.mxu0 0
      %1409 = vmatpush1.bf16.msra.mxu0 0
      %1410 = vmatprep.mubr.bf16.mxu0 0
      %1411 = vmatmul.mubr.bf16.gmra.mrb[0].mxu0 %v609
      %v1412 = vpop.f32.mrb[0].mxu0
      %v1413 = vadd.f32 0.0, %v1412
      %v1414 = vpop.f32.mrb[0].mxu0
      %v1415 = vpop.f32.mrb[0].mxu0
      %v1416 = vadd.f32 0.0, %v1415
      %v1417 = vpop.f32.mrb[0].mxu0
      %1418 = vmatprep.mubr.bf16.mxu0 0
      %1419 = vmatmul.mubr.bf16.gmra.mrb[0].mxu0 %v612
      %v1420 = vpop.f32.mrb[0].mxu0
      %v1421 = vadd.f32 0.0, %v1420
      %v1422 = vpop.f32.mrb[0].mxu0
      %v1423 = vpop.f32.mrb[0].mxu0
      %v1424 = vadd.f32 0.0, %v1423
      %v1425 = vpop.f32.mrb[0].mxu0
      %1426 = vmatprep.mubr.bf16.mxu0 0
      %1427 = vmatmul.mubr.bf16.gmra.mrb[0].mxu0 %v615
      %v1428 = vpop.f32.mrb[0].mxu0
      %v1429 = vadd.f32 0.0, %v1428
      %v1430 = vpop.f32.mrb[0].mxu0
      %v1431 = vpop.f32.mrb[0].mxu0
      %v1432 = vadd.f32 0.0, %v1431
      %v1433 = vpop.f32.mrb[0].mxu0
      %1434 = vmatprep.mubr.bf16.mxu0 0
      %1435 = vmatmul.mubr.bf16.gmra.mrb[0].mxu0 %v618
      %v1436 = vpop.f32.mrb[0].mxu0
      %v1437 = vadd.f32 0.0, %v1436
      %v1438 = vpop.f32.mrb[0].mxu0
      %v1439 = vpop.f32.mrb[0].mxu0
      %v1440 = vadd.f32 0.0, %v1439
      %v1441 = vpop.f32.mrb[0].mxu0
      %1442 = vmatprep.mubr.bf16.mxu0 0
      %1443 = vmatmul.mubr.bf16.gmra.mrb[0].mxu0 %v621
      %v1444 = vpop.f32.mrb[0].mxu0
      %v1445 = vadd.f32 0.0, %v1444
      %v1446 = vpop.f32.mrb[0].mxu0
      %v1447 = vpop.f32.mrb[0].mxu0
      %v1448 = vadd.f32 0.0, %v1447
      %v1449 = vpop.f32.mrb[0].mxu0
      %1450 = vmatprep.mubr.bf16.mxu0 0
      %1451 = vmatmul.mubr.bf16.gmra.mrb[0].mxu0 %v624
      %v1452 = vpop.f32.mrb[0].mxu0
      %v1453 = vadd.f32 0.0, %v1452
      %v1454 = vpop.f32.mrb[0].mxu0
      %v1455 = vpop.f32.mrb[0].mxu0
      %v1456 = vadd.f32 0.0, %v1455
      %v1457 = vpop.f32.mrb[0].mxu0
      %1458 = vmatprep.mubr.bf16.mxu0 0
      %1459 = vmatmul.mubr.bf16.gmra.mrb[0].mxu0 %v967
      %v1460 = vpop.f32.mrb[0].mxu0
      %v1461 = vadd.f32 0.0, %v1460
      %v1462 = vpop.f32.mrb[0].mxu0
      %v1463 = vpop.f32.mrb[0].mxu0
      %v1464 = vadd.f32 0.0, %v1463
      %v1465 = vpop.f32.mrb[0].mxu0
      %1466 = vmatprep.mubr.bf16.mxu0 0
      %1467 = vmatmul.mubr.bf16.gmra.mrb[0].mxu0 %v1373
      %v1468 = vpop.f32.mrb[0].mxu0
      %v1469 = vadd.f32 0.0, %v1468
      %v1470 = vpop.f32.mrb[0].mxu0
      %v1471 = vpop.f32.mrb[0].mxu0
      %v1472 = vadd.f32 0.0, %v1471
      %v1473 = vpop.f32.mrb[0].mxu0
      %1474 = vdwg.mxu0
      %v1475 = vadd.f32 %v1349, %v1413
      %v1476 = vadd.f32 %v1350, %v1416
      %v1477 = vadd.f32 %v1351, %v1421
      %v1478 = vadd.f32 %v1352, %v1424
      %v1479 = vadd.f32 %v1353, %v1429
      %v1480 = vadd.f32 %v1354, %v1432
      %v1481 = vadd.f32 %v1355, %v1437
      %v1482 = vadd.f32 %v1356, %v1440
      %v1483 = vadd.f32 %v1357, %v1445
      %v1484 = vadd.f32 %v1358, %v1448
      %v1485 = vadd.f32 %v1359, %v1453
      %v1486 = vadd.f32 %v1360, %v1456
      %v1487 = vadd.f32 %v1361, %v1461
      %v1488 = vadd.f32 %v1362, %v1464
      %v1489 = vadd.f32 %v1363, %v1469
      %v1490 = vadd.f32 %v1364, %v1472
      %v1492 = vshrl.u32 %v211, 16
      %v1494 = vrot.slane %v1492, 4
      %v1495 = vshll.u32 %v211, 16
      %v1497 = vrot.slane %v1495, 5
      %v1498 = vor.u32 %v1494, %v1497
      %v1499 = vrot.slane %v1498, 4
      %v1501 = vshll.u32 %v212, 16
      %v1503 = vrot.slane %v1501, 5
      %v1504 = vsel %vm217, %v1499, %v1503
      %v1505 = vshrl.u32 %v212, 16
      %v1507 = vrot.slane %v1505, 4
      %v1508 = vor.u32 %v1507, %v1503
      %v1509 = vrot.slane %v1508, 4
      %v1511 = vshll.u32 %v213, 16
      %v1513 = vrot.slane %v1511, 5
      %v1514 = vsel %vm217, %v1509, %v1513
      %s1515 = scalar_lea.vmem %s1, 14
      %v1516 = vld [vmem:[%s1515] sm:$0x3]
      %v1517 = vunpack.c.l.b16 %v1504
      %v1518 = vunpack.c.l.b16 %v1514
      %v1519 = vpack.c.b16 %v1518, %v1517
      %v1521 = vsel %vm436, %v1519, 0
      %v1524 = vsel %vm461, %v1516, 0
      %1526 = vmatprep.subr.bf16.mxu0 0
      %1527 = vmatpush1.bf16.msra.mxu0 %v1524
      %1528 = vmatprep.subr.bf16.mxu0 0
      %1529 = vmatpush1.bf16.msra.mxu0 0
      %1530 = vmatprep.subr.bf16.mxu0 0
      %1531 = vmatpush1.bf16.msra.mxu0 0
      %1532 = vmatprep.subr.bf16.mxu0 0
      %1533 = vmatpush1.bf16.msra.mxu0 0
      %1534 = vmatprep.subr.bf16.mxu0 0
      %1535 = vmatpush1.bf16.msra.mxu0 0
      %1536 = vmatprep.subr.bf16.mxu0 0
      %1537 = vmatpush1.bf16.msra.mxu0 0
      %1538 = vmatprep.subr.bf16.mxu0 0
      %1539 = vmatpush1.bf16.msra.mxu0 0
      %1540 = vmatprep.subr.bf16.mxu0 0
      %1541 = vmatpush1.bf16.msra.mxu0 0
      %1542 = vmatprep.subr.bf16.mxu0 0
      %1543 = vmatpush1.bf16.msra.mxu0 0
      %1544 = vmatprep.subr.bf16.mxu0 0
      %1545 = vmatpush1.bf16.msra.mxu0 0
      %1546 = vmatprep.subr.bf16.mxu0 0
      %1547 = vmatpush1.bf16.msra.mxu0 0
      %1548 = vmatprep.subr.bf16.mxu0 0
      %1549 = vmatpush1.bf16.msra.mxu0 0
      %1550 = vmatprep.subr.bf16.mxu0 0
      %1551 = vmatpush1.bf16.msra.mxu0 0
      %1552 = vmatprep.subr.bf16.mxu0 0
      %1553 = vmatpush1.bf16.msra.mxu0 0
      %1554 = vmatprep.subr.bf16.mxu0 0
      %1555 = vmatpush1.bf16.msra.mxu0 0
      %1556 = vmatprep.subr.bf16.mxu0 0
      %1557 = vmatpush1.bf16.msra.mxu0 0
      %1558 = vmatprep.mubr.bf16.mxu0 0
      %1559 = vmatmul.mubr.bf16.gmra.mrb[0].mxu0 %v444
      %v1560 = vpop.f32.mrb[0].mxu0
      %v1561 = vadd.f32 0.0, %v1560
      %v1562 = vpop.f32.mrb[0].mxu0
      %v1563 = vpop.f32.mrb[0].mxu0
      %v1564 = vadd.f32 0.0, %v1563
      %v1565 = vpop.f32.mrb[0].mxu0
      %1566 = vmatprep.mubr.bf16.mxu0 0
      %1567 = vmatmul.mubr.bf16.gmra.mrb[0].mxu0 %v447
      %v1568 = vpop.f32.mrb[0].mxu0
      %v1569 = vadd.f32 0.0, %v1568
      %v1570 = vpop.f32.mrb[0].mxu0
      %v1571 = vpop.f32.mrb[0].mxu0
      %v1572 = vadd.f32 0.0, %v1571
      %v1573 = vpop.f32.mrb[0].mxu0
      %1574 = vmatprep.mubr.bf16.mxu0 0
      %1575 = vmatmul.mubr.bf16.gmra.mrb[0].mxu0 %v450
      %v1576 = vpop.f32.mrb[0].mxu0
      %v1577 = vadd.f32 0.0, %v1576
      %v1578 = vpop.f32.mrb[0].mxu0
      %v1579 = vpop.f32.mrb[0].mxu0
      %v1580 = vadd.f32 0.0, %v1579
      %v1581 = vpop.f32.mrb[0].mxu0
      %1582 = vmatprep.mubr.bf16.mxu0 0
      %1583 = vmatmul.mubr.bf16.gmra.mrb[0].mxu0 %v453
      %v1584 = vpop.f32.mrb[0].mxu0
      %v1585 = vadd.f32 0.0, %v1584
      %v1586 = vpop.f32.mrb[0].mxu0
      %v1587 = vpop.f32.mrb[0].mxu0
      %v1588 = vadd.f32 0.0, %v1587
      %v1589 = vpop.f32.mrb[0].mxu0
      %1590 = vmatprep.mubr.bf16.mxu0 0
      %1591 = vmatmul.mubr.bf16.gmra.mrb[0].mxu0 %v456
      %v1592 = vpop.f32.mrb[0].mxu0
      %v1593 = vadd.f32 0.0, %v1592
      %v1594 = vpop.f32.mrb[0].mxu0
      %v1595 = vpop.f32.mrb[0].mxu0
      %v1596 = vadd.f32 0.0, %v1595
      %v1597 = vpop.f32.mrb[0].mxu0
      %1598 = vmatprep.mubr.bf16.mxu0 0
      %1599 = vmatmul.mubr.bf16.gmra.mrb[0].mxu0 %v459
      %v1600 = vpop.f32.mrb[0].mxu0
      %v1601 = vadd.f32 0.0, %v1600
      %v1602 = vpop.f32.mrb[0].mxu0
      %v1603 = vpop.f32.mrb[0].mxu0
      %v1604 = vadd.f32 0.0, %v1603
      %v1605 = vpop.f32.mrb[0].mxu0
      %1606 = vmatprep.mubr.bf16.mxu0 0
      %1607 = vmatmul.mubr.bf16.gmra.mrb[0].mxu0 %v1115
      %v1608 = vpop.f32.mrb[0].mxu0
      %v1609 = vadd.f32 0.0, %v1608
      %v1610 = vpop.f32.mrb[0].mxu0
      %v1611 = vpop.f32.mrb[0].mxu0
      %v1612 = vadd.f32 0.0, %v1611
      %v1613 = vpop.f32.mrb[0].mxu0
      %1614 = vmatprep.mubr.bf16.mxu0 0
      %1615 = vmatmul.mubr.bf16.gmra.mrb[0].mxu0 %v1521
      %v1616 = vpop.f32.mrb[0].mxu0
      %v1617 = vadd.f32 0.0, %v1616
      %v1618 = vpop.f32.mrb[0].mxu0
      %v1619 = vpop.f32.mrb[0].mxu0
      %v1620 = vadd.f32 0.0, %v1619
      %v1621 = vpop.f32.mrb[0].mxu0
      %1622 = vdwg.mxu0
      %v1623 = vadd.f32 %v1475, %v1561
      %v1624 = vadd.f32 %v1476, %v1564
      %v1625 = vadd.f32 %v1477, %v1569
      %v1626 = vadd.f32 %v1478, %v1572
      %v1627 = vadd.f32 %v1479, %v1577
      %v1628 = vadd.f32 %v1480, %v1580
      %v1629 = vadd.f32 %v1481, %v1585
      %v1630 = vadd.f32 %v1482, %v1588
      %v1631 = vadd.f32 %v1483, %v1593
      %v1632 = vadd.f32 %v1484, %v1596
      %v1633 = vadd.f32 %v1485, %v1601
      %v1634 = vadd.f32 %v1486, %v1604
      %v1635 = vadd.f32 %v1487, %v1609
      %v1636 = vadd.f32 %v1488, %v1612
      %v1637 = vadd.f32 %v1489, %v1617
      %v1638 = vadd.f32 %v1490, %v1620
      %v1640 = vrot.slane %v211, 5
      %v1641 = vrot.slane %v1640, 4
      %v1642 = vrot.slane %v212, 5
      %v1643 = vsel %vm736, %v1641, %v1642
      %v1644 = vrot.slane %v1642, 4
      %v1645 = vrot.slane %v213, 5
      %v1646 = vsel %vm736, %v1644, %v1645
      %s1647 = scalar_lea.vmem %s1, 16
      %v1648 = vld [vmem:[%s1647] sm:$0x3]
      %v1649 = vunpack.c.l.b16 %v1643
      %v1650 = vunpack.c.l.b16 %v1646
      %v1651 = vpack.c.b16 %v1650, %v1649
      %v1653 = vsel %vm436, %v1651, 0
      %v1656 = vsel %vm461, %v1648, 0
      %1658 = vmatprep.subr.bf16.mxu0 0
      %1659 = vmatpush1.bf16.msra.mxu0 %v1656
      %1660 = vmatprep.subr.bf16.mxu0 0
      %1661 = vmatpush1.bf16.msra.mxu0 0
      %1662 = vmatprep.subr.bf16.mxu0 0
      %1663 = vmatpush1.bf16.msra.mxu0 0
      %1664 = vmatprep.subr.bf16.mxu0 0
      %1665 = vmatpush1.bf16.msra.mxu0 0
      %1666 = vmatprep.subr.bf16.mxu0 0
      %1667 = vmatpush1.bf16.msra.mxu0 0
      %1668 = vmatprep.subr.bf16.mxu0 0
      %1669 = vmatpush1.bf16.msra.mxu0 0
      %1670 = vmatprep.subr.bf16.mxu0 0
      %1671 = vmatpush1.bf16.msra.mxu0 0
      %1672 = vmatprep.subr.bf16.mxu0 0
      %1673 = vmatpush1.bf16.msra.mxu0 0
      %1674 = vmatprep.subr.bf16.mxu0 0
      %1675 = vmatpush1.bf16.msra.mxu0 0
      %1676 = vmatprep.subr.bf16.mxu0 0
      %1677 = vmatpush1.bf16.msra.mxu0 0
      %1678 = vmatprep.subr.bf16.mxu0 0
      %1679 = vmatpush1.bf16.msra.mxu0 0
      %1680 = vmatprep.subr.bf16.mxu0 0
      %1681 = vmatpush1.bf16.msra.mxu0 0
      %1682 = vmatprep.subr.bf16.mxu0 0
      %1683 = vmatpush1.bf16.msra.mxu0 0
      %1684 = vmatprep.subr.bf16.mxu0 0
      %1685 = vmatpush1.bf16.msra.mxu0 0
      %1686 = vmatprep.subr.bf16.mxu0 0
      %1687 = vmatpush1.bf16.msra.mxu0 0
      %1688 = vmatprep.subr.bf16.mxu0 0
      %1689 = vmatpush1.bf16.msra.mxu0 0
      %1690 = vmatprep.mubr.bf16.mxu0 0
      %1691 = vmatmul.mubr.bf16.gmra.mrb[0].mxu0 %v826
      %v1692 = vpop.f32.mrb[0].mxu0
      %v1693 = vadd.f32 0.0, %v1692
      %v1694 = vpop.f32.mrb[0].mxu0
      %v1695 = vpop.f32.mrb[0].mxu0
      %v1696 = vadd.f32 0.0, %v1695
      %v1697 = vpop.f32.mrb[0].mxu0
      %1698 = vmatprep.mubr.bf16.mxu0 0
      %1699 = vmatmul.mubr.bf16.gmra.mrb[0].mxu0 %v829
      %v1700 = vpop.f32.mrb[0].mxu0
      %v1701 = vadd.f32 0.0, %v1700
      %v1702 = vpop.f32.mrb[0].mxu0
      %v1703 = vpop.f32.mrb[0].mxu0
      %v1704 = vadd.f32 0.0, %v1703
      %v1705 = vpop.f32.mrb[0].mxu0
      %1706 = vmatprep.mubr.bf16.mxu0 0
      %1707 = vmatmul.mubr.bf16.gmra.mrb[0].mxu0 %v832
      %v1708 = vpop.f32.mrb[0].mxu0
      %v1709 = vadd.f32 0.0, %v1708
      %v1710 = vpop.f32.mrb[0].mxu0
      %v1711 = vpop.f32.mrb[0].mxu0
      %v1712 = vadd.f32 0.0, %v1711
      %v1713 = vpop.f32.mrb[0].mxu0
      %1714 = vmatprep.mubr.bf16.mxu0 0
      %1715 = vmatmul.mubr.bf16.gmra.mrb[0].mxu0 %v835
      %v1716 = vpop.f32.mrb[0].mxu0
      %v1717 = vadd.f32 0.0, %v1716
      %v1718 = vpop.f32.mrb[0].mxu0
      %v1719 = vpop.f32.mrb[0].mxu0
      %v1720 = vadd.f32 0.0, %v1719
      %v1721 = vpop.f32.mrb[0].mxu0
      %1722 = vmatprep.mubr.bf16.mxu0 0
      %1723 = vmatmul.mubr.bf16.gmra.mrb[0].mxu0 %v838
      %v1724 = vpop.f32.mrb[0].mxu0
      %v1725 = vadd.f32 0.0, %v1724
      %v1726 = vpop.f32.mrb[0].mxu0
      %v1727 = vpop.f32.mrb[0].mxu0
      %v1728 = vadd.f32 0.0, %v1727
      %v1729 = vpop.f32.mrb[0].mxu0
      %1730 = vmatprep.mubr.bf16.mxu0 0
      %1731 = vmatmul.mubr.bf16.gmra.mrb[0].mxu0 %v841
      %v1732 = vpop.f32.mrb[0].mxu0
      %v1733 = vadd.f32 0.0, %v1732
      %v1734 = vpop.f32.mrb[0].mxu0
      %v1735 = vpop.f32.mrb[0].mxu0
      %v1736 = vadd.f32 0.0, %v1735
      %v1737 = vpop.f32.mrb[0].mxu0
      %1738 = vmatprep.mubr.bf16.mxu0 0
      %1739 = vmatmul.mubr.bf16.gmra.mrb[0].mxu0 %v1247
      %v1740 = vpop.f32.mrb[0].mxu0
      %v1741 = vadd.f32 0.0, %v1740
      %v1742 = vpop.f32.mrb[0].mxu0
      %v1743 = vpop.f32.mrb[0].mxu0
      %v1744 = vadd.f32 0.0, %v1743
      %v1745 = vpop.f32.mrb[0].mxu0
      %1746 = vmatprep.mubr.bf16.mxu0 0
      %1747 = vmatmul.mubr.bf16.gmra.mrb[0].mxu0 %v1653
      %v1748 = vpop.f32.mrb[0].mxu0
      %v1749 = vadd.f32 0.0, %v1748
      %v1750 = vpop.f32.mrb[0].mxu0
      %v1751 = vpop.f32.mrb[0].mxu0
      %v1752 = vadd.f32 0.0, %v1751
      %v1753 = vpop.f32.mrb[0].mxu0
      %1754 = vdwg.mxu0
      %v1755 = vadd.f32 %v1623, %v1693
      %v1756 = vadd.f32 %v1624, %v1696
      %v1757 = vadd.f32 %v1625, %v1701
      %v1758 = vadd.f32 %v1626, %v1704
      %v1759 = vadd.f32 %v1627, %v1709
      %v1760 = vadd.f32 %v1628, %v1712
      %v1761 = vadd.f32 %v1629, %v1717
      %v1762 = vadd.f32 %v1630, %v1720
      %v1763 = vadd.f32 %v1631, %v1725
      %v1764 = vadd.f32 %v1632, %v1728
      %v1765 = vadd.f32 %v1633, %v1733
      %v1766 = vadd.f32 %v1634, %v1736
      %v1767 = vadd.f32 %v1635, %v1741
      %v1768 = vadd.f32 %v1636, %v1744
      %v1769 = vadd.f32 %v1637, %v1749
      %v1770 = vadd.f32 %v1638, %v1752
      %1771 = vst [vmem:[%s177] sm:$0xff] %v1755
      %1772 = vst [vmem:[%s177 + $0x8] sm:$0xff] %v1756
      %1773 = vst [vmem:[%s177 + $0x10] sm:$0xff] %v1757
      %1774 = vst [vmem:[%s177 + $0x18] sm:$0xff] %v1758
      %1775 = vst [vmem:[%s177 + $0x20] sm:$0xff] %v1759
      %1776 = vst [vmem:[%s177 + $0x28] sm:$0xff] %v1760
      %1777 = vst [vmem:[%s177 + $0x30] sm:$0xff] %v1761
      %1778 = vst [vmem:[%s177 + $0x38] sm:$0xff] %v1762
      %1779 = vst [vmem:[%s177 + $0x40] sm:$0xff] %v1763
      %1780 = vst [vmem:[%s177 + $0x48] sm:$0xff] %v1764
      %1781 = vst [vmem:[%s177 + $0x50] sm:$0xff] %v1765
      %1782 = vst [vmem:[%s177 + $0x58] sm:$0xff] %v1766
      %1783 = vst [vmem:[%s177 + $0x60] sm:$0xff] %v1767
      %1784 = vst [vmem:[%s177 + $0x68] sm:$0xff] %v1768
      %1785 = vst [vmem:[%s177 + $0x70] sm:$0xff] %v1769
      %1786 = vst [vmem:[%s177 + $0x78] sm:$0xff] %v1770
      %v1787 = vadd.f32 %v1755, %v1756
      %v1788 = vadd.f32 %v1787, %v1757
      %v1789 = vadd.f32 %v1788, %v1758
      %v1790 = vadd.f32 %v1789, %v1759
      %v1791 = vadd.f32 %v1790, %v1760
      %v1792 = vadd.f32 %v1791, %v1761
      %v1793 = vadd.f32 %v1792, %v1762
      %v1794 = vadd.f32 %v1793, %v1763
      %v1795 = vadd.f32 %v1794, %v1764
      %v1796 = vadd.f32 %v1795, %v1765
      %v1797 = vadd.f32 %v1796, %v1766
      %v1798 = vadd.f32 %v1797, %v1767
      %v1799 = vadd.f32 %v1798, %v1768
      %v1800 = vadd.f32 %v1799, %v1769
      %v1801 = vadd.f32 %v1800, %v1770
      %v1802 = vrot.slane %v1801, 4
      %v1803 = vadd.f32 %v1801, %v1802
      %v1804 = vrot.slane %v1803, 2
      %v1805 = vadd.f32 %v1803, %v1804
      %v1806 = vrot.slane %v1805, 1
      %v1807 = vadd.f32 %v1805, %v1806
      %v1808 = vmul.f32 %v1755, %v1755
      %v1809 = vmul.f32 %v1756, %v1756
      %v1810 = vmul.f32 %v1757, %v1757
      %v1811 = vmul.f32 %v1758, %v1758
      %v1812 = vmul.f32 %v1759, %v1759
      %v1813 = vmul.f32 %v1760, %v1760
      %v1814 = vmul.f32 %v1761, %v1761
      %v1815 = vmul.f32 %v1762, %v1762
      %v1816 = vmul.f32 %v1763, %v1763
      %v1817 = vmul.f32 %v1764, %v1764
      %v1818 = vmul.f32 %v1765, %v1765
      %v1819 = vmul.f32 %v1766, %v1766
      %v1820 = vmul.f32 %v1767, %v1767
      %v1821 = vmul.f32 %v1768, %v1768
      %v1822 = vmul.f32 %v1769, %v1769
      %v1823 = vmul.f32 %v1770, %v1770
      %v1824 = vadd.f32 %v1808, %v1809
      %v1825 = vadd.f32 %v1824, %v1810
      %v1826 = vadd.f32 %v1825, %v1811
      %v1827 = vadd.f32 %v1826, %v1812
      %v1828 = vadd.f32 %v1827, %v1813
      %v1829 = vadd.f32 %v1828, %v1814
      %v1830 = vadd.f32 %v1829, %v1815
      %v1831 = vadd.f32 %v1830, %v1816
      %v1832 = vadd.f32 %v1831, %v1817
      %v1833 = vadd.f32 %v1832, %v1818
      %v1834 = vadd.f32 %v1833, %v1819
      %v1835 = vadd.f32 %v1834, %v1820
      %v1836 = vadd.f32 %v1835, %v1821
      %v1837 = vadd.f32 %v1836, %v1822
      %v1838 = vadd.f32 %v1837, %v1823
      %v1839 = vrot.slane %v1838, 4
      %v1840 = vadd.f32 %v1838, %v1839
      %v1841 = vrot.slane %v1840, 2
      %v1842 = vadd.f32 %v1840, %v1841
      %v1843 = vrot.slane %v1842, 1
      %v1844 = vadd.f32 %v1842, %v1843
      %vm1845 = vcmask 1040384
      %v1846 = vsel %vm1845, %v1807, %v1844
      %1847 = vst [vmem:[%s182] sm:$0x3] %v1846
      %s1848 = smul.u32 16, %s15
      %p1849 = scmp.lt.s32.totalorder %s1848, 63
      %s1850 = scalar_select %p1849, %s1848, 63
      %s1851 = smul.addr %s1850, 8
      %s1852 = scalar_lea.vmem %s2, %s1851
      %p1853 = scmp.lt.s32.totalorder %s15, 3
      %s1854 = scalar_select %p1853, %s15, 3
      %s1855 = smul.addr %s1854, 2
      %s1856 = scalar_lea.vmem %s3, %s1855
      // Predicated region
      $region29: #{conv_block_forward.4} parent=27 // pred_check
        %p1857 = pneg %p80
      $region30: #{conv_block_forward.4} parent=27 // pred_check_branch
        %1859 = sbr.rel (%p1857) target = $region32
      $region31: #{conv_block_forward.4} parent=27 // pred_region
        %s1860 = smul.u32 16, %s15
      $region32: #{conv_block_forward.4} parent=27 // pred_fallthru
        _
      // Predicated region
      $region33: #{conv_block_forward.4} parent=27 // pred_check
        %p1861 = pneg %p106
      $region34: #{conv_block_forward.4} parent=27 // pred_check_branch
        %1863 = sbr.rel (%p1861) target = $region36
      $region35: #{conv_block_forward.4} parent=27 // pred_region
        _
      $region36: #{conv_block_forward.4} parent=27 // pred_fallthru
        _
    $region28: #{conv_block_forward.4} parent=5 // pred_fallthru
      _
    %p1864 = scmp.le.s32.totalorder 2, %s10
    // Predicated region
    $region37: #{conv_block_forward.4} parent=5 // pred_check
      %p1865 = pneg %p1864
    $region38: #{conv_block_forward.4} parent=5 // pred_check_branch
      %1867 = sbr.rel (%p1865) target = $region40
    $region39: #{conv_block_forward.4} parent=5 // pred_region
      %s1868 = ssub.s32 %s10, 2
      // Predicated region
      $region41: #{conv_block_forward.4} parent=39 // pred_check
        %p1869 = pneg %p86
      $region42: #{conv_block_forward.4} parent=39 // pred_check_branch
        %1871 = sbr.rel (%p1869) target = $region44
      $region43: #{conv_block_forward.4} parent=39 // pred_region
        %s1872 = smul.u32 16, %s16
        %p1873 = scmp.lt.s32.totalorder %s1872, 63
        %s1874 = scalar_select %p1873, %s1872, 63
        %s1875 = smul.addr %s1874, 8
        %s1876 = scalar_lea.vmem %s2, %s1875
      $region44: #{conv_block_forward.4} parent=39 // pred_fallthru
        _
      // Predicated region
      $region45: #{conv_block_forward.4} parent=39 // pred_check
        %p1877 = pneg %p112
      $region46: #{conv_block_forward.4} parent=39 // pred_check_branch
        %1879 = sbr.rel (%p1877) target = $region48
      $region47: #{conv_block_forward.4} parent=39 // pred_region
        %p1880 = scmp.lt.s32.totalorder %s16, 3
        %s1881 = scalar_select %p1880, %s16, 3
        %s1882 = smul.addr %s1881, 2
        %s1883 = scalar_lea.vmem %s3, %s1882
      $region48: #{conv_block_forward.4} parent=39 // pred_fallthru
        _
    $region40: #{conv_block_forward.4} parent=5 // pred_fallthru
      _
  $region6: #{conv_block_forward.4} parent=0 // loop_footer
    %s14 = sadd.s32 1, %s10
  $region7: #{conv_block_forward.4} parent=0 // loop_footer_branch
    %9 = sbr.rel target = $region3
  $region8: #{conv_block_forward.4} parent=0 // loop_exit
    _

// kernel: conv_block_forward.6
$region0: #{conv_block_forward.6}
  #allocation0 [shape = 'u32[]', space=smem, size = 0x4, offset = 0x4, fixed_abs, tag = 'smem constant byte address 0x4 - core index']
  #allocation1 [shape = 'u32[144,128]{1,0:T(1,128)}', space=vmem, size = 0x12000, scoped, tag = 'internal scratch']
  %s0 = inlined_call_operand.vmem [shape: bf16[4,10,18,8], index: 0, kind: input, shape index: {}]
  %s1 = inlined_call_operand.vmem [shape: bf16[9,8,128], index: 1, kind: input, shape index: {}]
  %s2 = inlined_call_operand.vmem [shape: f32[512,128], index: 2, kind: output, shape index: {0}]
  %s3 = inlined_call_operand.vmem [shape: f32[4,2,128], index: 3, kind: output, shape index: {1}]
  %4 = xla_tuple %s2, %s3
  %s5 = sld [smem:[#allocation0]]
  $region49: #{conv_block_forward.6} parent=0
    _
  %s7 = ssub.s32 1, %s5
  %s8 = scalar_select 0, %s7, %s5
  loop: start=0, step=1, limit=6
  $region2: #{conv_block_forward.6} parent=0 // loop_pre_header
    _
  $region3: #{conv_block_forward.6} parent=0 // loop_header
    %s10 = sphi 0, %s14
    %p11 = scmp.ge.s32.totalorder %s10, 6
    %s20 = sphi 0, %s22
    %s23 = sphi 0, %s20
    %s24 = sphi 0, %s23
    %s40 = sphi 0, %s24
    %s44 = sphi 0, %s44
    %s46 = sphi 0, %s44
    %s47 = sphi 0, %s46
    %s61 = sphi 0, %s47
    %s67 = sphi 0, %s69
    %s70 = sphi 0, %s67
    %s71 = sphi 0, %s70
    %s87 = sphi 0, %s71
    %s93 = sphi 0, %s95
    %s96 = sphi 0, %s93
    %s97 = sphi 0, %s96
    %s113 = sphi 0, %s97
  $region4: #{conv_block_forward.6} parent=0 // loop_header_branch
    %13 = sbr.rel (%p11) target = $region8
  $region5: #{conv_block_forward.6} parent=0 // loop_body
    %s15 = ssub.s32 %s10, 1
    %s16 = ssub.s32 %s10, 2
    %s17 = sadd.s32 %s10, 1
    %s18 = ssub.s32 %s10, %s17
    %p19 = scmp.eq.s32.totalorder %s18, 0
    %s21 = sadd.s32 %s20, 1
    %s22 = scalar_select %p19, %s20, %s21
    %p25 = pneg %p19
    %p26 = scmp.eq.s32.totalorder %s10, 3
    %p27 = por %p25, %p26
    %p28 = scmp.ne.s32.totalorder %s20, %s23
    %p29 = scmp.eq.s32.totalorder %s10, 0
    %p30 = por %p28, %p29
    %p31 = scmp.ne.s32.totalorder %s20, %s23
    %p32 = scmp.eq.s32.totalorder %s15, 3
    %p33 = por %p31, %p32
    %p34 = scmp.ne.s32.totalorder %s23, %s24
    %p35 = scmp.eq.s32.totalorder %s15, 0
    %p36 = por %p34, %p35
    %p37 = scmp.ne.s32.totalorder %s23, %s24
    %p38 = scmp.eq.s32.totalorder %s16, 3
    %p39 = por %p37, %p38
    %p41 = scmp.ne.s32.totalorder %s24, %s40
    %p42 = scmp.eq.s32.totalorder %s16, 0
    %p43 = por %p41, %p42
    %s45 = sadd.s32 %s44, 1
    %p48 = scmp.eq.s32.totalorder %s10, 3
    %p49 = scmp.ne.s32.totalorder %s44, %s46
    %p50 = scmp.eq.s32.totalorder %s10, 0
    %p51 = por %p49, %p50
    %p52 = scmp.ne.s32.totalorder %s44, %s46
    %p53 = scmp.eq.s32.totalorder %s15, 3
    %p54 = por %p52, %p53
    %p55 = scmp.ne.s32.totalorder %s46, %s47
    %p56 = scmp.eq.s32.totalorder %s15, 0
    %p57 = por %p55, %p56
    %p58 = scmp.ne.s32.totalorder %s46, %s47
    %p59 = scmp.eq.s32.totalorder %s16, 3
    %p60 = por %p58, %p59
    %p62 = scmp.ne.s32.totalorder %s47, %s61
    %p63 = scmp.eq.s32.totalorder %s16, 0
    %p64 = por %p62, %p63
    %s65 = ssub.s32 %s10, %s17
    %p66 = scmp.eq.s32.totalorder %s65, 0
    %s68 = sadd.s32 %s67, 1
    %s69 = scalar_select %p66, %s67, %s68
    %p72 = pneg %p66
    %p73 = scmp.eq.s32.totalorder %s10, 3
    %p74 = por %p72, %p73
    %p75 = scmp.ne.s32.totalorder %s67, %s70
    %p76 = scmp.eq.s32.totalorder %s10, 0
    %p77 = por %p75, %p76
    %p78 = scmp.ne.s32.totalorder %s67, %s70
    %p79 = scmp.eq.s32.totalorder %s15, 3
    %p80 = por %p78, %p79
    %p81 = scmp.ne.s32.totalorder %s70, %s71
    %p82 = scmp.eq.s32.totalorder %s15, 0
    %p83 = por %p81, %p82
    %p84 = scmp.ne.s32.totalorder %s70, %s71
    %p85 = scmp.eq.s32.totalorder %s16, 3
    %p86 = por %p84, %p85
    %p88 = scmp.ne.s32.totalorder %s71, %s87
    %p89 = scmp.eq.s32.totalorder %s16, 0
    %p90 = por %p88, %p89
    %s91 = ssub.s32 %s10, %s17
    %p92 = scmp.eq.s32.totalorder %s91, 0
    %s94 = sadd.s32 %s93, 1
    %s95 = scalar_select %p92, %s93, %s94
    %p98 = pneg %p92
    %p99 = scmp.eq.s32.totalorder %s10, 3
    %p100 = por %p98, %p99
    %p101 = scmp.ne.s32.totalorder %s93, %s96
    %p102 = scmp.eq.s32.totalorder %s10, 0
    %p103 = por %p101, %p102
    %p104 = scmp.ne.s32.totalorder %s93, %s96
    %p105 = scmp.eq.s32.totalorder %s15, 3
    %p106 = por %p104, %p105
    %p107 = scmp.ne.s32.totalorder %s96, %s97
    %p108 = scmp.eq.s32.totalorder %s15, 0
    %p109 = por %p107, %p108
    %p110 = scmp.ne.s32.totalorder %s96, %s97
    %p111 = scmp.eq.s32.totalorder %s16, 3
    %p112 = por %p110, %p111
    %p114 = scmp.ne.s32.totalorder %s97, %s113
    %p115 = scmp.eq.s32.totalorder %s16, 0
    %p116 = por %p114, %p115
    %p117 = scmp.le.s32.totalorder 1, %s10
    %p118 = scmp.lt.s32.totalorder %s10, 5
    %p119 = pnand %p117, %p118
    %p120 = pneg %p119
    // Predicated region
    $region9: #{conv_block_forward.6} parent=5 // pred_check
      _
    $region10: #{conv_block_forward.6} parent=5 // pred_check_branch
      %122 = sbr.rel (%p119) target = $region12
    $region11: #{conv_block_forward.6} parent=5 // pred_region
      %s123 = ssub.s32 %s10, 1
      // Predicated region
      $region13: #{conv_block_forward.6} parent=11 // pred_check
        %p124 = pneg %p57
      $region14: #{conv_block_forward.6} parent=11 // pred_check_branch
        %126 = sbr.rel (%p124) target = $region16
      $region15: #{conv_block_forward.6} parent=11 // pred_region
        _
      $region16: #{conv_block_forward.6} parent=11 // pred_fallthru
        _
    $region12: #{conv_block_forward.6} parent=5 // pred_fallthru
      _
    %p127 = scmp.lt.s32.totalorder %s10, 4
    // Predicated region
    $region17: #{conv_block_forward.6} parent=5 // pred_check
      %p128 = pneg %p127
    $region18: #{conv_block_forward.6} parent=5 // pred_check_branch
      %130 = sbr.rel (%p128) target = $region20
    $region19: #{conv_block_forward.6} parent=5 // pred_region
      // Predicated region
      $region21: #{conv_block_forward.6} parent=19 // pred_check
        %p131 = pneg %p30
      $region22: #{conv_block_forward.6} parent=19 // pred_check_branch
        %133 = sbr.rel (%p131) target = $region24
      $region23: #{conv_block_forward.6} parent=19 // pred_region
        %p134 = scmp.lt.s32.totalorder %s10, 3
        %s135 = scalar_select %p134, %s10, 3
        %s136 = smul.addr %s135, 30
        %s137 = smul.addr %s136, 4
        %s138 = scalar_lea.vmem %s0, %s137
      $region24: #{conv_block_forward.6} parent=19 // pred_fallthru
        _
    $region20: #{conv_block_forward.6} parent=5 // pred_fallthru
      _
    %p139 = scmp.le.s32.totalorder 1, %s10
    %p140 = scmp.lt.s32.totalorder %s10, 5
    %p141 = pnand %p139, %p140
    %p142 = pneg %p141
    // Predicated region
    $region25: #{conv_block_forward.6} parent=5 // pred_check
      _
    $region26: #{conv_block_forward.6} parent=5 // pred_check_branch
      %144 = sbr.rel (%p141) target = $region28
    $region27: #{conv_block_forward.6} parent=5 // pred_region
      %s145 = ssub.s32 %s10, 1
      %p146 = scmp.lt.s32.totalorder %s15, 3
      %s147 = scalar_select %p146, %s15, 3
      %s148 = smul.addr %s147, 30
      %s149 = smul.addr %s148, 4
      %s150 = scalar_lea.vmem %s0, %s149
      %p151 = pneg %p36
      %p152 = pneg %p33
      %p153 = pneg %p57
      %p154 = pneg %p54
      %p155 = pneg %p83
      %p156 = pneg %p80
      %s157 = smul.u32 16, %s15
      %p158 = scmp.lt.s32.totalorder %s157, 63
      %s159 = scalar_select %p158, %s157, 63
      %s160 = smul.addr %s159, 8
      %s161 = scalar_lea.vmem %s2, %s160
      %p162 = pneg %p109
      %p163 = pneg %p106
      %p164 = scmp.lt.s32.totalorder %s15, 3
      %s165 = scalar_select %p164, %s15, 3
      %s166 = smul.addr %s165, 2
      %s167 = scalar_lea.vmem %s3, %s166
      %p168 = scmp.lt.s32.totalorder %s15, 3
      %s169 = scalar_select %p168, %s15, 3
      %s170 = smul.addr %s169, 30
      %s171 = smul.addr %s170, 4
      %s172 = scalar_lea.vmem %s0, %s171
      %s173 = smul.u32 16, %s15
      %p174 = scmp.lt.s32.totalorder %s173, 63
      %s175 = scalar_select %p174, %s173, 63
      %s176 = smul.addr %s175, 8
      %s177 = scalar_lea.vmem %s2, %s176
      %s178 = smul.u32 16, %s15
      %p179 = scmp.lt.s32.totalorder %s15, 3
      %s180 = scalar_select %p179, %s15, 3
      %s181 = smul.addr %s180, 2
      %s182 = scalar_lea.vmem %s3, %s181
      %v184 = vld [vmem:[%s172] sm:$0xf]
      %v185 = vld [vmem:[%s172 + $0x4] sm:$0xf]
      %v186 = vld [vmem:[%s172 + $0x8] sm:$0x1]
      %v187 = vld [vmem:[%s172 + $0xc] sm:$0xf]
      %v188 = vld [vmem:[%s172 + $0x10] sm:$0xf]
      %v189 = vld [vmem:[%s172 + $0x14] sm:$0x1]
      %v190 = vld [vmem:[%s172 + $0x18] sm:$0xf]
      %v191 = vld [vmem:[%s172 + $0x1c] sm:$0xf]
      %v192 = vld [vmem:[%s172 + $0x20] sm:$0x1]
      %v193 = vld [vmem:[%s172 + $0x24] sm:$0xf]
      %v194 = vld [vmem:[%s172 + $0x28] sm:$0xf]
      %v195 = vld [vmem:[%s172 + $0x2c] sm:$0x1]
      %v196 = vld [vmem:[%s172 + $0x30] sm:$0xf]
      %v197 = vld [vmem:[%s172 + $0x34] sm:$0xf]
      %v198 = vld [vmem:[%s172 + $0x38] sm:$0x1]
      %v199 = vld [vmem:[%s172 + $0x3c] sm:$0xf]
      %v200 = vld [vmem:[%s172 + $0x40] sm:$0xf]
      %v201 = vld [vmem:[%s172 + $0x44] sm:$0x1]
      %v202 = vld [vmem:[%s172 + $0x48] sm:$0xf]
      %v203 = vld [vmem:[%s172 + $0x4c] sm:$0xf]
      %v204 = vld [vmem:[%s172 + $0x50] sm:$0x1]
      %v205 = vld [vmem:[%s172 + $0x54] sm:$0xf]
      %v206 = vld [vmem:[%s172 + $0x58] sm:$0xf]
      %v207 = vld [vmem:[%s172 + $0x5c] sm:$0x1]
      %v208 = vld [vmem:[%s172 + $0x60] sm:$0xf]
      %v209 = vld [vmem:[%s172 + $0x64] sm:$0xf]
      %v210 = vld [vmem:[%s172 + $0x68] sm:$0x1]
      %v211 = vld [vmem:[%s172 + $0x6c] sm:$0xf]
      %v212 = vld [vmem:[%s172 + $0x70] sm:$0xf]
      %v213 = vld [vmem:[%s172 + $0x74] sm:$0x1]
      %v214 = vld [vmem:[%s1] sm:$0xf]
      %vm215 = vsmask.f32 3328
      %vm216 = vsmask.f32 7440
      %vm217 = vmor %vm215, %vm216
      %v219 = vshrl.u32 %v184, 16
      %v221 = vrot.slane %v219, 4
      %v222 = vshll.u32 %v184, 16
      %v224 = vrot.slane %v222, 5
      %v225 = vor.u32 %v221, %v224
      %v226 = vrot.slane %v225, 4
      %v228 = vshll.u32 %v185, 16
      %v230 = vrot.slane %v228, 5
      %v231 = vsel %vm217, %v226, %v230
      %v232 = vshrl.u32 %v185, 16
      %v234 = vrot.slane %v232, 4
      %v235 = vor.u32 %v234, %v230
      %v236 = vrot.slane %v235, 4
      %v238 = vshll.u32 %v186, 16
      %v240 = vrot.slane %v238, 5
      %v241 = vsel %vm217, %v236, %v240
      %v243 = vshrl.u32 %v187, 16
      %v245 = vrot.slane %v243, 4
      %v246 = vshll.u32 %v187, 16
      %v248 = vrot.slane %v246, 5
      %v249 = vor.u32 %v245, %v248
      %v250 = vrot.slane %v249, 4
      %v252 = vshll.u32 %v188, 16
      %v254 = vrot.slane %v252, 5
      %v255 = vsel %vm217, %v250, %v254
      %v256 = vshrl.u32 %v188, 16
      %v258 = vrot.slane %v256, 4
      %v259 = vor.u32 %v258, %v254
      %v260 = vrot.slane %v259, 4
      %v262 = vshll.u32 %v189, 16
      %v264 = vrot.slane %v262, 5
      %v265 = vsel %vm217, %v260, %v264
      %v267 = vshrl.u32 %v190, 16
      %v269 = vrot.slane %v267, 4
      %v270 = vshll.u32 %v190, 16
      %v272 = vrot.slane %v270, 5
      %v273 = vor.u32 %v269, %v272
      %v274 = vrot.slane %v273, 4
      %v276 = vshll.u32 %v191, 16
      %v278 = vrot.slane %v276, 5
      %v279 = vsel %vm217, %v274, %v278
      %v280 = vshrl.u32 %v191, 16
      %v282 = vrot.slane %v280, 4
      %v283 = vor.u32 %v282, %v278
      %v284 = vrot.slane %v283, 4
      %v286 = vshll.u32 %v192, 16
      %v288 = vrot.slane %v286, 5
      %v289 = vsel %vm217, %v284, %v288
      %v291 = vshrl.u32 %v193, 16
      %v293 = vrot.slane %v291, 4
      %v294 = vshll.u32 %v193, 16
      %v296 = vrot.slane %v294, 5
      %v297 = vor.u32 %v293, %v296
      %v298 = vrot.slane %v297, 4
      %v300 = vshll.u32 %v194, 16
      %v302 = vrot.slane %v300, 5
      %v303 = vsel %vm217, %v298, %v302
      %v304 = vshrl.u32 %v194, 16
      %v306 = vrot.slane %v304, 4
      %v307 = vor.u32 %v306, %v302
      %v308 = vrot.slane %v307, 4
      %v310 = vshll.u32 %v195, 16
      %v312 = vrot.slane %v310, 5
      %v313 = vsel %vm217, %v308, %v312
      %v315 = vshrl.u32 %v196, 16
      %v317 = vrot.slane %v315, 4
      %v318 = vshll.u32 %v196, 16
      %v320 = vrot.slane %v318, 5
      %v321 = vor.u32 %v317, %v320
      %v322 = vrot.slane %v321, 4
      %v324 = vshll.u32 %v197, 16
      %v326 = vrot.slane %v324, 5
      %v327 = vsel %vm217, %v322, %v326
      %v328 = vshrl.u32 %v197, 16
      %v330 = vrot.slane %v328, 4
      %v331 = vor.u32 %v330, %v326
      %v332 = vrot.slane %v331, 4
      %v334 = vshll.u32 %v198, 16
      %v336 = vrot.slane %v334, 5
      %v337 = vsel %vm217, %v332, %v336
      %v339 = vshrl.u32 %v199, 16
      %v341 = vrot.slane %v339, 4
      %v342 = vshll.u32 %v199, 16
      %v344 = vrot.slane %v342, 5
      %v345 = vor.u32 %v341, %v344
      %v346 = vrot.slane %v345, 4
      %v348 = vshll.u32 %v200, 16
      %v350 = vrot.slane %v348, 5
      %v351 = vsel %vm217, %v346, %v350
      %v352 = vshrl.u32 %v200, 16
      %v354 = vrot.slane %v352, 4
      %v355 = vor.u32 %v354, %v350
      %v356 = vrot.slane %v355, 4
      %v358 = vshll.u32 %v201, 16
      %v360 = vrot.slane %v358, 5
      %v361 = vsel %vm217, %v356, %v360
      %v363 = vshrl.u32 %v202, 16
      %v365 = vrot.slane %v363, 4
      %v366 = vshll.u32 %v202, 16
      %v368 = vrot.slane %v366, 5
      %v369 = vor.u32 %v365, %v368
      %v370 = vrot.slane %v369, 4
      %v372 = vshll.u32 %v203, 16
      %v374 = vrot.slane %v372, 5
      %v375 = vsel %vm217, %v370, %v374
      %v376 = vshrl.u32 %v203, 16
      %v378 = vrot.slane %v376, 4
      %v379 = vor.u32 %v378, %v374
      %v380 = vrot.slane %v379, 4
      %v382 = vshll.u32 %v204, 16
      %v384 = vrot.slane %v382, 5
      %v385 = vsel %vm217, %v380, %v384
      %v387 = vshrl.u32 %v205, 16
      %v389 = vrot.slane %v387, 4
      %v390 = vshll.u32 %v205, 16
      %v392 = vrot.slane %v390, 5
      %v393 = vor.u32 %v389, %v392
      %v394 = vrot.slane %v393, 4
      %v396 = vshll.u32 %v206, 16
      %v398 = vrot.slane %v396, 5
      %v399 = vsel %vm217, %v394, %v398
      %v400 = vshrl.u32 %v206, 16
      %v402 = vrot.slane %v400, 4
      %v403 = vor.u32 %v402, %v398
      %v404 = vrot.slane %v403, 4
      %v406 = vshll.u32 %v207, 16
      %v408 = vrot.slane %v406, 5
      %v409 = vsel %vm217, %v404, %v408
      %s410 = scalar_lea.vmem %s1, 4
      %v411 = vld [vmem:[%s410] sm:$0xf]
      %v412 = vunpack.c.l.b16 %v231
      %v413 = vunpack.c.l.b16 %v241
      %v414 = vunpack.c.l.b16 %v255
      %v415 = vunpack.c.l.b16 %v265
      %v416 = vunpack.c.l.b16 %v279
      %v417 = vunpack.c.l.b16 %v289
      %v418 = vunpack.c.l.b16 %v303
      %v419 = vunpack.c.l.b16 %v313
      %v420 = vunpack.c.l.b16 %v327
      %v421 = vunpack.c.l.b16 %v337
      %v422 = vunpack.c.l.b16 %v351
      %v423 = vunpack.c.l.b16 %v361
      %v424 = vunpack.c.l.b16 %v375
      %v425 = vunpack.c.l.b16 %v385
      %v426 = vunpack.c.l.b16 %v399
      %v427 = vunpack.c.l.b16 %v409
      %v428 = vpack.c.b16 %v413, %v412
      %v429 = vpack.c.b16 %v415, %v414
      %v430 = vpack.c.b16 %v417, %v416
      %v431 = vpack.c.b16 %v419, %v418
      %v432 = vpack.c.b16 %v421, %v420
      %v433 = vpack.c.b16 %v423, %v422
      %v434 = vpack.c.b16 %v425, %v424
      %v435 = vpack.c.b16 %v427, %v426
      %vm436 = vcmask 64512
      %v438 = vsel %vm436, %v428, 0
      %v441 = vsel %vm436, %v429, 0
      %v444 = vsel %vm436, %v430, 0
      %v447 = vsel %vm436, %v431, 0
      %v450 = vsel %vm436, %v432, 0
      %v453 = vsel %vm436, %v433, 0
      %v456 = vsel %vm436, %v434, 0
      %v459 = vsel %vm436, %v435, 0
      %vm461 = vcmask 1043456
      %v463 = vsel %vm461, %v411, 0
      %465 = vmatprep.subr.bf16.mxu0 0
      %466 = vmatpush1.bf16.msra.mxu0 %v463
      %467 = vmatprep.subr.bf16.mxu0 0
      %468 = vmatpush1.bf16.msra.mxu0 0
      %469 = vmatprep.subr.bf16.mxu0 0
      %470 = vmatpush1.bf16.msra.mxu0 0
      %471 = vmatprep.subr.bf16.mxu0 0
      %472 = vmatpush1.bf16.msra.mxu0 0
      %473 = vmatprep.subr.bf16.mxu0 0
      %474 = vmatpush1.bf16.msra.mxu0 0
      %475 = vmatprep.subr.bf16.mxu0 0
      %476 = vmatpush1.bf16.msra.mxu0 0
      %477 = vmatprep.subr.bf16.mxu0 0
      %478 = vmatpush1.bf16.msra.mxu0 0
      %479 = vmatprep.subr.bf16.mxu0 0
      %480 = vmatpush1.bf16.msra.mxu0 0
      %481 = vmatprep.subr.bf16.mxu0 0
      %482 = vmatpush1.bf16.msra.mxu0 0
      %483 = vmatprep.subr.bf16.mxu0 0
      %484 = vmatpush1.bf16.msra.mxu0 0
      %485 = vmatprep.subr.bf16.mxu0 0
      %486 = vmatpush1.bf16.msra.mxu0 0
      %487 = vmatprep.subr.bf16.mxu0 0
      %488 = vmatpush1.bf16.msra.mxu0 0
      %489 = vmatprep.subr.bf16.mxu0 0
      %490 = vmatpush1.bf16.msra.mxu0 0
      %491 = vmatprep.subr.bf16.mxu0 0
      %492 = vmatpush1.bf16.msra.mxu0 0
      %493 = vmatprep.subr.bf16.mxu0 0
      %494 = vmatpush1.bf16.msra.mxu0 0
      %495 = vmatprep.subr.bf16.mxu0 0
      %496 = vmatpush1.bf16.msra.mxu0 0
      %497 = vmatprep.mubr.bf16.mxu0 0
      %498 = vmatmul.mubr.bf16.gmra.mrb[0].mxu0 %v438
      %v499 = vpop.f32.mrb[0].mxu0
      %v500 = vadd.f32 0.0, %v499
      %v501 = vpop.f32.mrb[0].mxu0
      %v502 = vpop.f32.mrb[0].mxu0
      %v503 = vadd.f32 0.0, %v502
      %v504 = vpop.f32.mrb[0].mxu0
      %505 = vmatprep.mubr.bf16.mxu0 0
      %506 = vmatmul.mubr.bf16.gmra.mrb[0].mxu0 %v441
      %v507 = vpop.f32.mrb[0].mxu0
      %v508 = vadd.f32 0.0, %v507
      %v509 = vpop.f32.mrb[0].mxu0
      %v510 = vpop.f32.mrb[0].mxu0
      %v511 = vadd.f32 0.0, %v510
      %v512 = vpop.f32.mrb[0].mxu0
      %513 = vmatprep.mubr.bf16.mxu0 0
      %514 = vmatmul.mubr.bf16.gmra.mrb[0].mxu0 %v444
      %v515 = vpop.f32.mrb[0].mxu0
      %v516 = vadd.f32 0.0, %v515
      %v517 = vpop.f32.mrb[0].mxu0
      %v518 = vpop.f32.mrb[0].mxu0
      %v519 = vadd.f32 0.0, %v518
      %v520 = vpop.f32.mrb[0].mxu0
      %521 = vmatprep.mubr.bf16.mxu0 0
      %522 = vmatmul.mubr.bf16.gmra.mrb[0].mxu0 %v447
      %v523 = vpop.f32.mrb[0].mxu0
      %v524 = vadd.f32 0.0, %v523
      %v525 = vpop.f32.mrb[0].mxu0
      %v526 = vpop.f32.mrb[0].mxu0
      %v527 = vadd.f32 0.0, %v526
      %v528 = vpop.f32.mrb[0].mxu0
      %529 = vmatprep.mubr.bf16.mxu0 0
      %530 = vmatmul.mubr.bf16.gmra.mrb[0].mxu0 %v450
      %v531 = vpop.f32.mrb[0].mxu0
      %v532 = vadd.f32 0.0, %v531
      %v533 = vpop.f32.mrb[0].mxu0
      %v534 = vpop.f32.mrb[0].mxu0
      %v535 = vadd.f32 0.0, %v534
      %v536 = vpop.f32.mrb[0].mxu0
      %537 = vmatprep.mubr.bf16.mxu0 0
      %538 = vmatmul.mubr.bf16.gmra.mrb[0].mxu0 %v453
      %v539 = vpop.f32.mrb[0].mxu0
      %v540 = vadd.f32 0.0, %v539
      %v541 = vpop.f32.mrb[0].mxu0
      %v542 = vpop.f32.mrb[0].mxu0
      %v543 = vadd.f32 0.0, %v542
      %v544 = vpop.f32.mrb[0].mxu0
      %545 = vmatprep.mubr.bf16.mxu0 0
      %546 = vmatmul.mubr.bf16.gmra.mrb[0].mxu0 %v456
      %v547 = vpop.f32.mrb[0].mxu0
      %v548 = vadd.f32 0.0, %v547
      %v549 = vpop.f32.mrb[0].mxu0
      %v550 = vpop.f32.mrb[0].mxu0
      %v551 = vadd.f32 0.0, %v550
      %v552 = vpop.f32.mrb[0].mxu0
      %553 = vmatprep.mubr.bf16.mxu0 0
      %554 = vmatmul.mubr.bf16.gmra.mrb[0].mxu0 %v459
      %v555 = vpop.f32.mrb[0].mxu0
      %v556 = vadd.f32 0.0, %v555
      %v557 = vpop.f32.mrb[0].mxu0
      %v558 = vpop.f32.mrb[0].mxu0
      %v559 = vadd.f32 0.0, %v558
      %v560 = vpop.f32.mrb[0].mxu0
      %561 = vdwg.mxu0
      %v578 = vunpack.c.l.b16 %v184
      %v579 = vunpack.c.l.b16 %v185
      %v580 = vunpack.c.l.b16 %v187
      %v581 = vunpack.c.l.b16 %v188
      %v582 = vunpack.c.l.b16 %v190
      %v583 = vunpack.c.l.b16 %v191
      %v584 = vunpack.c.l.b16 %v193
      %v585 = vunpack.c.l.b16 %v194
      %v586 = vunpack.c.l.b16 %v196
      %v587 = vunpack.c.l.b16 %v197
      %v588 = vunpack.c.l.b16 %v199
      %v589 = vunpack.c.l.b16 %v200
      %v590 = vunpack.c.l.b16 %v202
      %v591 = vunpack.c.l.b16 %v203
      %v592 = vunpack.c.l.b16 %v205
      %v593 = vunpack.c.l.b16 %v206
      %v594 = vpack.c.b16 %v579, %v578
      %v595 = vpack.c.b16 %v581, %v580
      %v596 = vpack.c.b16 %v583, %v582
      %v597 = vpack.c.b16 %v585, %v584
      %v598 = vpack.c.b16 %v587, %v586
      %v599 = vpack.c.b16 %v589, %v588
      %v600 = vpack.c.b16 %v591, %v590
      %v601 = vpack.c.b16 %v593, %v592
      %v603 = vsel %vm436, %v594, 0
      %v606 = vsel %vm436, %v595, 0
      %v609 = vsel %vm436, %v596, 0
      %v612 = vsel %vm436, %v597, 0
      %v615 = vsel %vm436, %v598, 0
      %v618 = vsel %vm436, %v599, 0
      %v621 = vsel %vm436, %v600, 0
      %v624 = vsel %vm436, %v601, 0
      %v627 = vsel %vm461, %v214, 0
      %629 = vmatprep.subr.bf16.mxu0 0
      %630 = vmatpush1.bf16.msra.mxu0 %v627
      %631 = vmatprep.subr.bf16.mxu0 0
      %632 = vmatpush1.bf16.msra.mxu0 0
      %633 = vmatprep.subr.bf16.mxu0 0
      %634 = vmatpush1.bf16.msra.mxu0 0
      %635 = vmatprep.subr.bf16.mxu0 0
      %636 = vmatpush1.bf16.msra.mxu0 0
      %637 = vmatprep.subr.bf16.mxu0 0
      %638 = vmatpush1.bf16.msra.mxu0 0
      %639 = vmatprep.subr.bf16.mxu0 0
      %640 = vmatpush1.bf16.msra.mxu0 0
      %641 = vmatprep.subr.bf16.mxu0 0
      %642 = vmatpush1.bf16.msra.mxu0 0
      %643 = vmatprep.subr.bf16.mxu0 0
      %644 = vmatpush1.bf16.msra.mxu0 0
      %645 = vmatprep.subr.bf16.mxu0 0
      %646 = vmatpush1.bf16.msra.mxu0 0
      %647 = vmatprep.subr.bf16.mxu0 0
      %648 = vmatpush1.bf16.msra.mxu0 0
      %649 = vmatprep.subr.bf16.mxu0 0
      %650 = vmatpush1.bf16.msra.mxu0 0
      %651 = vmatprep.subr.bf16.mxu0 0
      %652 = vmatpush1.bf16.msra.mxu0 0
      %653 = vmatprep.subr.bf16.mxu0 0
      %654 = vmatpush1.bf16.msra.mxu0 0
      %655 = vmatprep.subr.bf16.mxu0 0
      %656 = vmatpush1.bf16.msra.mxu0 0
      %657 = vmatprep.subr.bf16.mxu0 0
      %658 = vmatpush1.bf16.msra.mxu0 0
      %659 = vmatprep.subr.bf16.mxu0 0
      %660 = vmatpush1.bf16.msra.mxu0 0
      %661 = vmatprep.mubr.bf16.mxu0 0
      %662 = vmatmul.mubr.bf16.gmra.mrb[0].mxu0 %v603
      %v663 = vpop.f32.mrb[0].mxu0
      %v664 = vadd.f32 %v500, %v663
      %v665 = vpop.f32.mrb[0].mxu0
      %v666 = vpop.f32.mrb[0].mxu0
      %v667 = vadd.f32 %v503, %v666
      %v668 = vpop.f32.mrb[0].mxu0
      %669 = vmatprep.mubr.bf16.mxu0 0
      %670 = vmatmul.mubr.bf16.gmra.mrb[0].mxu0 %v606
      %v671 = vpop.f32.mrb[0].mxu0
      %v672 = vadd.f32 %v508, %v671
      %v673 = vpop.f32.mrb[0].mxu0
      %v674 = vpop.f32.mrb[0].mxu0
      %v675 = vadd.f32 %v511, %v674
      %v676 = vpop.f32.mrb[0].mxu0
      %677 = vmatprep.mubr.bf16.mxu0 0
      %678 = vmatmul.mubr.bf16.gmra.mrb[0].mxu0 %v609
      %v679 = vpop.f32.mrb[0].mxu0
      %v680 = vadd.f32 %v516, %v679
      %v681 = vpop.f32.mrb[0].mxu0
      %v682 = vpop.f32.mrb[0].mxu0
      %v683 = vadd.f32 %v519, %v682
      %v684 = vpop.f32.mrb[0].mxu0
      %685 = vmatprep.mubr.bf16.mxu0 0
      %686 = vmatmul.mubr.bf16.gmra.mrb[0].mxu0 %v612
      %v687 = vpop.f32.mrb[0].mxu0
      %v688 = vadd.f32 %v524, %v687
      %v689 = vpop.f32.mrb[0].mxu0
      %v690 = vpop.f32.mrb[0].mxu0
      %v691 = vadd.f32 %v527, %v690
      %v692 = vpop.f32.mrb[0].mxu0
      %693 = vmatprep.mubr.bf16.mxu0 0
      %694 = vmatmul.mubr.bf16.gmra.mrb[0].mxu0 %v615
      %v695 = vpop.f32.mrb[0].mxu0
      %v696 = vadd.f32 %v532, %v695
      %v697 = vpop.f32.mrb[0].mxu0
      %v698 = vpop.f32.mrb[0].mxu0
      %v699 = vadd.f32 %v535, %v698
      %v700 = vpop.f32.mrb[0].mxu0
      %701 = vmatprep.mubr.bf16.mxu0 0
      %702 = vmatmul.mubr.bf16.gmra.mrb[0].mxu0 %v618
      %v703 = vpop.f32.mrb[0].mxu0
      %v704 = vadd.f32 %v540, %v703
      %v705 = vpop.f32.mrb[0].mxu0
      %v706 = vpop.f32.mrb[0].mxu0
      %v707 = vadd.f32 %v543, %v706
      %v708 = vpop.f32.mrb[0].mxu0
      %709 = vmatprep.mubr.bf16.mxu0 0
      %710 = vmatmul.mubr.bf16.gmra.mrb[0].mxu0 %v621
      %v711 = vpop.f32.mrb[0].mxu0
      %v712 = vadd.f32 %v548, %v711
      %v713 = vpop.f32.mrb[0].mxu0
      %v714 = vpop.f32.mrb[0].mxu0
      %v715 = vadd.f32 %v551, %v714
      %v716 = vpop.f32.mrb[0].mxu0
      %717 = vmatprep.mubr.bf16.mxu0 0
      %718 = vmatmul.mubr.bf16.gmra.mrb[0].mxu0 %v624
      %v719 = vpop.f32.mrb[0].mxu0
      %v720 = vadd.f32 %v556, %v719
      %v721 = vpop.f32.mrb[0].mxu0
      %v722 = vpop.f32.mrb[0].mxu0
      %v723 = vadd.f32 %v559, %v722
      %v724 = vpop.f32.mrb[0].mxu0
      %725 = vdwg.mxu0
      %vm734 = vcmask 1042432
      %vm735 = vcmask 1046532
      %vm736 = vmor %vm734, %vm735
      %v737 = vrot.slane %v184, 5
      %v738 = vrot.slane %v737, 4
      %v739 = vrot.slane %v185, 5
      %v740 = vsel %vm736, %v738, %v739
      %v741 = vrot.slane %v739, 4
      %v742 = vrot.slane %v186, 5
      %v743 = vsel %vm736, %v741, %v742
      %v744 = vrot.slane %v187, 5
      %v745 = vrot.slane %v744, 4
      %v746 = vrot.slane %v188, 5
      %v747 = vsel %vm736, %v745, %v746
      %v748 = vrot.slane %v746, 4
      %v749 = vrot.slane %v189, 5
      %v750 = vsel %vm736, %v748, %v749
      %v751 = vrot.slane %v190, 5
      %v752 = vrot.slane %v751, 4
      %v753 = vrot.slane %v191, 5
      %v754 = vsel %vm736, %v752, %v753
      %v755 = vrot.slane %v753, 4
      %v756 = vrot.slane %v192, 5
      %v757 = vsel %vm736, %v755, %v756
      %v758 = vrot.slane %v193, 5
      %v759 = vrot.slane %v758, 4
      %v760 = vrot.slane %v194, 5
      %v761 = vsel %vm736, %v759, %v760
      %v762 = vrot.slane %v760, 4
      %v763 = vrot.slane %v195, 5
      %v764 = vsel %vm736, %v762, %v763
      %v765 = vrot.slane %v196, 5
      %v766 = vrot.slane %v765, 4
      %v767 = vrot.slane %v197, 5
      %v768 = vsel %vm736, %v766, %v767
      %v769 = vrot.slane %v767, 4
      %v770 = vrot.slane %v198, 5
      %v771 = vsel %vm736, %v769, %v770
      %v772 = vrot.slane %v199, 5
      %v773 = vrot.slane %v772, 4
      %v774 = vrot.slane %v200, 5
      %v775 = vsel %vm736, %v773, %v774
      %v776 = vrot.slane %v774, 4
      %v777 = vrot.slane %v201, 5
      %v778 = vsel %vm736, %v776, %v777
      %v779 = vrot.slane %v202, 5
      %v780 = vrot.slane %v779, 4
      %v781 = vrot.slane %v203, 5
      %v782 = vsel %vm736, %v780, %v781
      %v783 = vrot.slane %v781, 4
      %v784 = vrot.slane %v204, 5
      %v785 = vsel %vm736, %v783, %v784
      %v786 = vrot.slane %v205, 5
      %v787 = vrot.slane %v786, 4
      %v788 = vrot.slane %v206, 5
      %v789 = vsel %vm736, %v787, %v788
      %v790 = vrot.slane %v788, 4
      %v791 = vrot.slane %v207, 5
      %v792 = vsel %vm736, %v790, %v791
      %s793 = scalar_lea.vmem %s1, 8
      %v794 = vld [vmem:[%s793] sm:$0xf]
      %v795 = vunpack.c.l.b16 %v740
      %v796 = vunpack.c.l.b16 %v743
      %v797 = vunpack.c.l.b16 %v747
      %v798 = vunpack.c.l.b16 %v750
      %v799 = vunpack.c.l.b16 %v754
      %v800 = vunpack.c.l.b16 %v757
      %v801 = vunpack.c.l.b16 %v761
      %v802 = vunpack.c.l.b16 %v764
      %v803 = vunpack.c.l.b16 %v768
      %v804 = vunpack.c.l.b16 %v771
      %v805 = vunpack.c.l.b16 %v775
      %v806 = vunpack.c.l.b16 %v778
      %v807 = vunpack.c.l.b16 %v782
      %v808 = vunpack.c.l.b16 %v785
      %v809 = vunpack.c.l.b16 %v789
      %v810 = vunpack.c.l.b16 %v792
      %v811 = vpack.c.b16 %v796, %v795
      %v812 = vpack.c.b16 %v798, %v797
      %v813 = vpack.c.b16 %v800, %v799
      %v814 = vpack.c.b16 %v802, %v801
      %v815 = vpack.c.b16 %v804, %v803
      %v816 = vpack.c.b16 %v806, %v805
      %v817 = vpack.c.b16 %v808, %v807
      %v818 = vpack.c.b16 %v810, %v809
      %v820 = vsel %vm436, %v811, 0
      %v823 = vsel %vm436, %v812, 0
      %v826 = vsel %vm436, %v813, 0
      %v829 = vsel %vm436, %v814, 0
      %v832 = vsel %vm436, %v815, 0
      %v835 = vsel %vm436, %v816, 0
      %v838 = vsel %vm436, %v817, 0
      %v841 = vsel %vm436, %v818, 0
      %v844 = vsel %vm461, %v794, 0
      %846 = vmatprep.subr.bf16.mxu0 0
      %847 = vmatpush1.bf16.msra.mxu0 %v844
      %848 = vmatprep.subr.bf16.mxu0 0
      %849 = vmatpush1.bf16.msra.mxu0 0
      %850 = vmatprep.subr.bf16.mxu0 0
      %851 = vmatpush1.bf16.msra.mxu0 0
      %852 = vmatprep.subr.bf16.mxu0 0
      %853 = vmatpush1.bf16.msra.mxu0 0
      %854 = vmatprep.subr.bf16.mxu0 0
      %855 = vmatpush1.bf16.msra.mxu0 0
      %856 = vmatprep.subr.bf16.mxu0 0
      %857 = vmatpush1.bf16.msra.mxu0 0
      %858 = vmatprep.subr.bf16.mxu0 0
      %859 = vmatpush1.bf16.msra.mxu0 0
      %860 = vmatprep.subr.bf16.mxu0 0
      %861 = vmatpush1.bf16.msra.mxu0 0
      %862 = vmatprep.subr.bf16.mxu0 0
      %863 = vmatpush1.bf16.msra.mxu0 0
      %864 = vmatprep.subr.bf16.mxu0 0
      %865 = vmatpush1.bf16.msra.mxu0 0
      %866 = vmatprep.subr.bf16.mxu0 0
      %867 = vmatpush1.bf16.msra.mxu0 0
      %868 = vmatprep.subr.bf16.mxu0 0
      %869 = vmatpush1.bf16.msra.mxu0 0
      %870 = vmatprep.subr.bf16.mxu0 0
      %871 = vmatpush1.bf16.msra.mxu0 0
      %872 = vmatprep.subr.bf16.mxu0 0
      %873 = vmatpush1.bf16.msra.mxu0 0
      %874 = vmatprep.subr.bf16.mxu0 0
      %875 = vmatpush1.bf16.msra.mxu0 0
      %876 = vmatprep.subr.bf16.mxu0 0
      %877 = vmatpush1.bf16.msra.mxu0 0
      %878 = vmatprep.mubr.bf16.mxu0 0
      %879 = vmatmul.mubr.bf16.gmra.mrb[0].mxu0 %v820
      %v880 = vpop.f32.mrb[0].mxu0
      %v881 = vadd.f32 0.0, %v880
      %v882 = vpop.f32.mrb[0].mxu0
      %v883 = vpop.f32.mrb[0].mxu0
      %v884 = vadd.f32 0.0, %v883
      %v885 = vpop.f32.mrb[0].mxu0
      %886 = vmatprep.mubr.bf16.mxu0 0
      %887 = vmatmul.mubr.bf16.gmra.mrb[0].mxu0 %v823
      %v888 = vpop.f32.mrb[0].mxu0
      %v889 = vadd.f32 0.0, %v888
      %v890 = vpop.f32.mrb[0].mxu0
      %v891 = vpop.f32.mrb[0].mxu0
      %v892 = vadd.f32 0.0, %v891
      %v893 = vpop.f32.mrb[0].mxu0
      %894 = vmatprep.mubr.bf16.mxu0 0
      %895 = vmatmul.mubr.bf16.gmra.mrb[0].mxu0 %v826
      %v896 = vpop.f32.mrb[0].mxu0
      %v897 = vadd.f32 0.0, %v896
      %v898 = vpop.f32.mrb[0].mxu0
      %v899 = vpop.f32.mrb[0].mxu0
      %v900 = vadd.f32 0.0, %v899
      %v901 = vpop.f32.mrb[0].mxu0
      %902 = vmatprep.mubr.bf16.mxu0 0
      %903 = vmatmul.mubr.bf16.gmra.mrb[0].mxu0 %v829
      %v904 = vpop.f32.mrb[0].mxu0
      %v905 = vadd.f32 0.0, %v904
      %v906 = vpop.f32.mrb[0].mxu0
      %v907 = vpop.f32.mrb[0].mxu0
      %v908 = vadd.f32 0.0, %v907
      %v909 = vpop.f32.mrb[0].mxu0
      %910 = vmatprep.mubr.bf16.mxu0 0
      %911 = vmatmul.mubr.bf16.gmra.mrb[0].mxu0 %v832
      %v912 = vpop.f32.mrb[0].mxu0
      %v913 = vadd.f32 0.0, %v912
      %v914 = vpop.f32.mrb[0].mxu0
      %v915 = vpop.f32.mrb[0].mxu0
      %v916 = vadd.f32 0.0, %v915
      %v917 = vpop.f32.mrb[0].mxu0
      %918 = vmatprep.mubr.bf16.mxu0 0
      %919 = vmatmul.mubr.bf16.gmra.mrb[0].mxu0 %v835
      %v920 = vpop.f32.mrb[0].mxu0
      %v921 = vadd.f32 0.0, %v920
      %v922 = vpop.f32.mrb[0].mxu0
      %v923 = vpop.f32.mrb[0].mxu0
      %v924 = vadd.f32 0.0, %v923
      %v925 = vpop.f32.mrb[0].mxu0
      %926 = vmatprep.mubr.bf16.mxu0 0
      %927 = vmatmul.mubr.bf16.gmra.mrb[0].mxu0 %v838
      %v928 = vpop.f32.mrb[0].mxu0
      %v929 = vadd.f32 0.0, %v928
      %v930 = vpop.f32.mrb[0].mxu0
      %v931 = vpop.f32.mrb[0].mxu0
      %v932 = vadd.f32 0.0, %v931
      %v933 = vpop.f32.mrb[0].mxu0
      %934 = vmatprep.mubr.bf16.mxu0 0
      %935 = vmatmul.mubr.bf16.gmra.mrb[0].mxu0 %v841
      %v936 = vpop.f32.mrb[0].mxu0
      %v937 = vadd.f32 0.0, %v936
      %v938 = vpop.f32.mrb[0].mxu0
      %v939 = vpop.f32.mrb[0].mxu0
      %v940 = vadd.f32 0.0, %v939
      %v941 = vpop.f32.mrb[0].mxu0
      %942 = vdwg.mxu0
      %v943 = vadd.f32 %v664, %v881
      %v944 = vadd.f32 %v667, %v884
      %v945 = vadd.f32 %v672, %v889
      %v946 = vadd.f32 %v675, %v892
      %v947 = vadd.f32 %v680, %v897
      %v948 = vadd.f32 %v683, %v900
      %v949 = vadd.f32 %v688, %v905
      %v950 = vadd.f32 %v691, %v908
      %v951 = vadd.f32 %v696, %v913
      %v952 = vadd.f32 %v699, %v916
      %v953 = vadd.f32 %v704, %v921
      %v954 = vadd.f32 %v707, %v924
      %v955 = vadd.f32 %v712, %v929
      %v956 = vadd.f32 %v715, %v932
      %v957 = vadd.f32 %v720, %v937
      %v958 = vadd.f32 %v723, %v940
      %s959 = scalar_lea.vmem %s1, 12
      %v960 = vld [vmem:[%s959] sm:$0xf]
      %v963 = vunpack.c.l.b16 %v208
      %v964 = vunpack.c.l.b16 %v209
      %v965 = vpack.c.b16 %v964, %v963
      %v967 = vsel %vm436, %v965, 0
      %v970 = vsel %vm461, %v960, 0
      %972 = vmatprep.subr.bf16.mxu0 0
      %973 = vmatpush1.bf16.msra.mxu0 %v970
      %974 = vmatprep.subr.bf16.mxu0 0
      %975 = vmatpush1.bf16.msra.mxu0 0
      %976 = vmatprep.subr.bf16.mxu0 0
      %977 = vmatpush1.bf16.msra.mxu0 0
      %978 = vmatprep.subr.bf16.mxu0 0
      %979 = vmatpush1.bf16.msra.mxu0 0
      %980 = vmatprep.subr.bf16.mxu0 0
      %981 = vmatpush1.bf16.msra.mxu0 0
      %982 = vmatprep.subr.bf16.mxu0 0
      %983 = vmatpush1.bf16.msra.mxu0 0
      %984 = vmatprep.subr.bf16.mxu0 0
      %985 = vmatpush1.bf16.msra.mxu0 0
      %986 = vmatprep.subr.bf16.mxu0 0
      %987 = vmatpush1.bf16.msra.mxu0 0
      %988 = vmatprep.subr.bf16.mxu0 0
      %989 = vmatpush1.bf16.msra.mxu0 0
      %990 = vmatprep.subr.bf16.mxu0 0
      %991 = vmatpush1.bf16.msra.mxu0 0
      %992 = vmatprep.subr.bf16.mxu0 0
      %993 = vmatpush1.bf16.msra.mxu0 0
      %994 = vmatprep.subr.bf16.mxu0 0
      %995 = vmatpush1.bf16.msra.mxu0 0
      %996 = vmatprep.subr.bf16.mxu0 0
      %997 = vmatpush1.bf16.msra.mxu0 0
      %998 = vmatprep.subr.bf16.mxu0 0
      %999 = vmatpush1.bf16.msra.mxu0 0
      %1000 = vmatprep.subr.bf16.mxu0 0
      %1001 = vmatpush1.bf16.msra.mxu0 0
      %1002 = vmatprep.subr.bf16.mxu0 0
      %1003 = vmatpush1.bf16.msra.mxu0 0
      %1004 = vmatprep.mubr.bf16.mxu0 0
      %1005 = vmatmul.mubr.bf16.gmra.mrb[0].mxu0 %v606
      %v1006 = vpop.f32.mrb[0].mxu0
      %v1007 = vadd.f32 0.0, %v1006
      %v1008 = vpop.f32.mrb[0].mxu0
      %v1009 = vpop.f32.mrb[0].mxu0
      %v1010 = vadd.f32 0.0, %v1009
      %v1011 = vpop.f32.mrb[0].mxu0
      %1012 = vmatprep.mubr.bf16.mxu0 0
      %1013 = vmatmul.mubr.bf16.gmra.mrb[0].mxu0 %v609
      %v1014 = vpop.f32.mrb[0].mxu0
      %v1015 = vadd.f32 0.0, %v1014
      %v1016 = vpop.f32.mrb[0].mxu0
      %v1017 = vpop.f32.mrb[0].mxu0
      %v1018 = vadd.f32 0.0, %v1017
      %v1019 = vpop.f32.mrb[0].mxu0
      %1020 = vmatprep.mubr.bf16.mxu0 0
      %1021 = vmatmul.mubr.bf16.gmra.mrb[0].mxu0 %v612
      %v1022 = vpop.f32.mrb[0].mxu0
      %v1023 = vadd.f32 0.0, %v1022
      %v1024 = vpop.f32.mrb[0].mxu0
      %v1025 = vpop.f32.mrb[0].mxu0
      %v1026 = vadd.f32 0.0, %v1025
      %v1027 = vpop.f32.mrb[0].mxu0
      %1028 = vmatprep.mubr.bf16.mxu0 0
      %1029 = vmatmul.mubr.bf16.gmra.mrb[0].mxu0 %v615
      %v1030 = vpop.f32.mrb[0].mxu0
      %v1031 = vadd.f32 0.0, %v1030
      %v1032 = vpop.f32.mrb[0].mxu0
      %v1033 = vpop.f32.mrb[0].mxu0
      %v1034 = vadd.f32 0.0, %v1033
      %v1035 = vpop.f32.mrb[0].mxu0
      %1036 = vmatprep.mubr.bf16.mxu0 0
      %1037 = vmatmul.mubr.bf16.gmra.mrb[0].mxu0 %v618
      %v1038 = vpop.f32.mrb[0].mxu0
      %v1039 = vadd.f32 0.0, %v1038
      %v1040 = vpop.f32.mrb[0].mxu0
      %v1041 = vpop.f32.mrb[0].mxu0
      %v1042 = vadd.f32 0.0, %v1041
      %v1043 = vpop.f32.mrb[0].mxu0
      %1044 = vmatprep.mubr.bf16.mxu0 0
      %1045 = vmatmul.mubr.bf16.gmra.mrb[0].mxu0 %v621
      %v1046 = vpop.f32.mrb[0].mxu0
      %v1047 = vadd.f32 0.0, %v1046
      %v1048 = vpop.f32.mrb[0].mxu0
      %v1049 = vpop.f32.mrb[0].mxu0
      %v1050 = vadd.f32 0.0, %v1049
      %v1051 = vpop.f32.mrb[0].mxu0
      %1052 = vmatprep.mubr.bf16.mxu0 0
      %1053 = vmatmul.mubr.bf16.gmra.mrb[0].mxu0 %v624
      %v1054 = vpop.f32.mrb[0].mxu0
      %v1055 = vadd.f32 0.0, %v1054
      %v1056 = vpop.f32.mrb[0].mxu0
      %v1057 = vpop.f32.mrb[0].mxu0
      %v1058 = vadd.f32 0.0, %v1057
      %v1059 = vpop.f32.mrb[0].mxu0
      %1060 = vmatprep.mubr.bf16.mxu0 0
      %1061 = vmatmul.mubr.bf16.gmra.mrb[0].mxu0 %v967
      %v1062 = vpop.f32.mrb[0].mxu0
      %v1063 = vadd.f32 0.0, %v1062
      %v1064 = vpop.f32.mrb[0].mxu0
      %v1065 = vpop.f32.mrb[0].mxu0
      %v1066 = vadd.f32 0.0, %v1065
      %v1067 = vpop.f32.mrb[0].mxu0
      %1068 = vdwg.mxu0
      %v1069 = vadd.f32 %v943, %v1007
      %v1070 = vadd.f32 %v944, %v1010
      %v1071 = vadd.f32 %v945, %v1015
      %v1072 = vadd.f32 %v946, %v1018
      %v1073 = vadd.f32 %v947, %v1023
      %v1074 = vadd.f32 %v948, %v1026
      %v1075 = vadd.f32 %v949, %v1031
      %v1076 = vadd.f32 %v950, %v1034
      %v1077 = vadd.f32 %v951, %v1039
      %v1078 = vadd.f32 %v952, %v1042
      %v1079 = vadd.f32 %v953, %v1047
      %v1080 = vadd.f32 %v954, %v1050
      %v1081 = vadd.f32 %v955, %v1055
      %v1082 = vadd.f32 %v956, %v1058
      %v1083 = vadd.f32 %v957, %v1063
      %v1084 = vadd.f32 %v958, %v1066
      %v1086 = vshrl.u32 %v208, 16
      %v1088 = vrot.slane %v1086, 4
      %v1089 = vshll.u32 %v208, 16
      %v1091 = vrot.slane %v1089, 5
      %v1092 = vor.u32 %v1088, %v1091
      %v1093 = vrot.slane %v1092, 4
      %v1095 = vshll.u32 %v209, 16
      %v1097 = vrot.slane %v1095, 5
      %v1098 = vsel %vm217, %v1093, %v1097
      %v1099 = vshrl.u32 %v209, 16
      %v1101 = vrot.slane %v1099, 4
      %v1102 = vor.u32 %v1101, %v1097
      %v1103 = vrot.slane %v1102, 4
      %v1105 = vshll.u32 %v210, 16
      %v1107 = vrot.slane %v1105, 5
      %v1108 = vsel %vm217, %v1103, %v1107
      %s1109 = scalar_lea.vmem %s1, 16
      %v1110 = vld [vmem:[%s1109] sm:$0xf]
      %v1111 = vunpack.c.l.b16 %v1098
      %v1112 = vunpack.c.l.b16 %v1108
      %v1113 = vpack.c.b16 %v1112, %v1111
      %v1115 = vsel %vm436, %v1113, 0
      %v1118 = vsel %vm461, %v1110, 0
      %1120 = vmatprep.subr.bf16.mxu0 0
      %1121 = vmatpush1.bf16.msra.mxu0 %v1118
      %1122 = vmatprep.subr.bf16.mxu0 0
      %1123 = vmatpush1.bf16.msra.mxu0 0
      %1124 = vmatprep.subr.bf16.mxu0 0
      %1125 = vmatpush1.bf16.msra.mxu0 0
      %1126 = vmatprep.subr.bf16.mxu0 0
      %1127 = vmatpush1.bf16.msra.mxu0 0
      %1128 = vmatprep.subr.bf16.mxu0 0
      %1129 = vmatpush1.bf16.msra.mxu0 0
      %1130 = vmatprep.subr.bf16.mxu0 0
      %1131 = vmatpush1.bf16.msra.mxu0 0
      %1132 = vmatprep.subr.bf16.mxu0 0
      %1133 = vmatpush1.bf16.msra.mxu0 0
      %1134 = vmatprep.subr.bf16.mxu0 0
      %1135 = vmatpush1.bf16.msra.mxu0 0
      %1136 = vmatprep.subr.bf16.mxu0 0
      %1137 = vmatpush1.bf16.msra.mxu0 0
      %1138 = vmatprep.subr.bf16.mxu0 0
      %1139 = vmatpush1.bf16.msra.mxu0 0
      %1140 = vmatprep.subr.bf16.mxu0 0
      %1141 = vmatpush1.bf16.msra.mxu0 0
      %1142 = vmatprep.subr.bf16.mxu0 0
      %1143 = vmatpush1.bf16.msra.mxu0 0
      %1144 = vmatprep.subr.bf16.mxu0 0
      %1145 = vmatpush1.bf16.msra.mxu0 0
      %1146 = vmatprep.subr.bf16.mxu0 0
      %1147 = vmatpush1.bf16.msra.mxu0 0
      %1148 = vmatprep.subr.bf16.mxu0 0
      %1149 = vmatpush1.bf16.msra.mxu0 0
      %1150 = vmatprep.subr.bf16.mxu0 0
      %1151 = vmatpush1.bf16.msra.mxu0 0
      %1152 = vmatprep.mubr.bf16.mxu0 0
      %1153 = vmatmul.mubr.bf16.gmra.mrb[0].mxu0 %v441
      %v1154 = vpop.f32.mrb[0].mxu0
      %v1155 = vadd.f32 0.0, %v1154
      %v1156 = vpop.f32.mrb[0].mxu0
      %v1157 = vpop.f32.mrb[0].mxu0
      %v1158 = vadd.f32 0.0, %v1157
      %v1159 = vpop.f32.mrb[0].mxu0
      %1160 = vmatprep.mubr.bf16.mxu0 0
      %1161 = vmatmul.mubr.bf16.gmra.mrb[0].mxu0 %v444
      %v1162 = vpop.f32.mrb[0].mxu0
      %v1163 = vadd.f32 0.0, %v1162
      %v1164 = vpop.f32.mrb[0].mxu0
      %v1165 = vpop.f32.mrb[0].mxu0
      %v1166 = vadd.f32 0.0, %v1165
      %v1167 = vpop.f32.mrb[0].mxu0
      %1168 = vmatprep.mubr.bf16.mxu0 0
      %1169 = vmatmul.mubr.bf16.gmra.mrb[0].mxu0 %v447
      %v1170 = vpop.f32.mrb[0].mxu0
      %v1171 = vadd.f32 0.0, %v1170
      %v1172 = vpop.f32.mrb[0].mxu0
      %v1173 = vpop.f32.mrb[0].mxu0
      %v1174 = vadd.f32 0.0, %v1173
      %v1175 = vpop.f32.mrb[0].mxu0
      %1176 = vmatprep.mubr.bf16.mxu0 0
      %1177 = vmatmul.mubr.bf16.gmra.mrb[0].mxu0 %v450
      %v1178 = vpop.f32.mrb[0].mxu0
      %v1179 = vadd.f32 0.0, %v1178
      %v1180 = vpop.f32.mrb[0].mxu0
      %v1181 = vpop.f32.mrb[0].mxu0
      %v1182 = vadd.f32 0.0, %v1181
      %v1183 = vpop.f32.mrb[0].mxu0
      %1184 = vmatprep.mubr.bf16.mxu0 0
      %1185 = vmatmul.mubr.bf16.gmra.mrb[0].mxu0 %v453
      %v1186 = vpop.f32.mrb[0].mxu0
      %v1187 = vadd.f32 0.0, %v1186
      %v1188 = vpop.f32.mrb[0].mxu0
      %v1189 = vpop.f32.mrb[0].mxu0
      %v1190 = vadd.f32 0.0, %v1189
      %v1191 = vpop.f32.mrb[0].mxu0
      %1192 = vmatprep.mubr.bf16.mxu0 0
      %1193 = vmatmul.mubr.bf16.gmra.mrb[0].mxu0 %v456
      %v1194 = vpop.f32.mrb[0].mxu0
      %v1195 = vadd.f32 0.0, %v1194
      %v1196 = vpop.f32.mrb[0].mxu0
      %v1197 = vpop.f32.mrb[0].mxu0
      %v1198 = vadd.f32 0.0, %v1197
      %v1199 = vpop.f32.mrb[0].mxu0
      %1200 = vmatprep.mubr.bf16.mxu0 0
      %1201 = vmatmul.mubr.bf16.gmra.mrb[0].mxu0 %v459
      %v1202 = vpop.f32.mrb[0].mxu0
      %v1203 = vadd.f32 0.0, %v1202
      %v1204 = vpop.f32.mrb[0].mxu0
      %v1205 = vpop.f32.mrb[0].mxu0
      %v1206 = vadd.f32 0.0, %v1205
      %v1207 = vpop.f32.mrb[0].mxu0
      %1208 = vmatprep.mubr.bf16.mxu0 0
      %1209 = vmatmul.mubr.bf16.gmra.mrb[0].mxu0 %v1115
      %v1210 = vpop.f32.mrb[0].mxu0
      %v1211 = vadd.f32 0.0, %v1210
      %v1212 = vpop.f32.mrb[0].mxu0
      %v1213 = vpop.f32.mrb[0].mxu0
      %v1214 = vadd.f32 0.0, %v1213
      %v1215 = vpop.f32.mrb[0].mxu0
      %1216 = vdwg.mxu0
      %v1217 = vadd.f32 %v1069, %v1155
      %v1218 = vadd.f32 %v1070, %v1158
      %v1219 = vadd.f32 %v1071, %v1163
      %v1220 = vadd.f32 %v1072, %v1166
      %v1221 = vadd.f32 %v1073, %v1171
      %v1222 = vadd.f32 %v1074, %v1174
      %v1223 = vadd.f32 %v1075, %v1179
      %v1224 = vadd.f32 %v1076, %v1182
      %v1225 = vadd.f32 %v1077, %v1187
      %v1226 = vadd.f32 %v1078, %v1190
      %v1227 = vadd.f32 %v1079, %v1195
      %v1228 = vadd.f32 %v1080, %v1198
      %v1229 = vadd.f32 %v1081, %v1203
      %v1230 = vadd.f32 %v1082, %v1206
      %v1231 = vadd.f32 %v1083, %v1211
      %v1232 = vadd.f32 %v1084, %v1214
      %v1234 = vrot.slane %v208, 5
      %v1235 = vrot.slane %v1234, 4
      %v1236 = vrot.slane %v209, 5
      %v1237 = vsel %vm736, %v1235, %v1236
      %v1238 = vrot.slane %v1236, 4
      %v1239 = vrot.slane %v210, 5
      %v1240 = vsel %vm736, %v1238, %v1239
      %s1241 = scalar_lea.vmem %s1, 20
      %v1242 = vld [vmem:[%s1241] sm:$0xf]
      %v1243 = vunpack.c.l.b16 %v1237
      %v1244 = vunpack.c.l.b16 %v1240
      %v1245 = vpack.c.b16 %v1244, %v1243
      %v1247 = vsel %vm436, %v1245, 0
      %v1250 = vsel %vm461, %v1242, 0
      %1252 = vmatprep.subr.bf16.mxu0 0
      %1253 = vmatpush1.bf16.msra.mxu0 %v1250
      %1254 = vmatprep.subr.bf16.mxu0 0
      %1255 = vmatpush1.bf16.msra.mxu0 0
      %1256 = vmatprep.subr.bf16.mxu0 0
      %1257 = vmatpush1.bf16.msra.mxu0 0
      %1258 = vmatprep.subr.bf16.mxu0 0
      %1259 = vmatpush1.bf16.msra.mxu0 0
      %1260 = vmatprep.subr.bf16.mxu0 0
      %1261 = vmatpush1.bf16.msra.mxu0 0
      %1262 = vmatprep.subr.bf16.mxu0 0
      %1263 = vmatpush1.bf16.msra.mxu0 0
      %1264 = vmatprep.subr.bf16.mxu0 0
      %1265 = vmatpush1.bf16.msra.mxu0 0
      %1266 = vmatprep.subr.bf16.mxu0 0
      %1267 = vmatpush1.bf16.msra.mxu0 0
      %1268 = vmatprep.subr.bf16.mxu0 0
      %1269 = vmatpush1.bf16.msra.mxu0 0
      %1270 = vmatprep.subr.bf16.mxu0 0
      %1271 = vmatpush1.bf16.msra.mxu0 0
      %1272 = vmatprep.subr.bf16.mxu0 0
      %1273 = vmatpush1.bf16.msra.mxu0 0
      %1274 = vmatprep.subr.bf16.mxu0 0
      %1275 = vmatpush1.bf16.msra.mxu0 0
      %1276 = vmatprep.subr.bf16.mxu0 0
      %1277 = vmatpush1.bf16.msra.mxu0 0
      %1278 = vmatprep.subr.bf16.mxu0 0
      %1279 = vmatpush1.bf16.msra.mxu0 0
      %1280 = vmatprep.subr.bf16.mxu0 0
      %1281 = vmatpush1.bf16.msra.mxu0 0
      %1282 = vmatprep.subr.bf16.mxu0 0
      %1283 = vmatpush1.bf16.msra.mxu0 0
      %1284 = vmatprep.mubr.bf16.mxu0 0
      %1285 = vmatmul.mubr.bf16.gmra.mrb[0].mxu0 %v823
      %v1286 = vpop.f32.mrb[0].mxu0
      %v1287 = vadd.f32 0.0, %v1286
      %v1288 = vpop.f32.mrb[0].mxu0
      %v1289 = vpop.f32.mrb[0].mxu0
      %v1290 = vadd.f32 0.0, %v1289
      %v1291 = vpop.f32.mrb[0].mxu0
      %1292 = vmatprep.mubr.bf16.mxu0 0
      %1293 = vmatmul.mubr.bf16.gmra.mrb[0].mxu0 %v826
      %v1294 = vpop.f32.mrb[0].mxu0
      %v1295 = vadd.f32 0.0, %v1294
      %v1296 = vpop.f32.mrb[0].mxu0
      %v1297 = vpop.f32.mrb[0].mxu0
      %v1298 = vadd.f32 0.0, %v1297
      %v1299 = vpop.f32.mrb[0].mxu0
      %1300 = vmatprep.mubr.bf16.mxu0 0
      %1301 = vmatmul.mubr.bf16.gmra.mrb[0].mxu0 %v829
      %v1302 = vpop.f32.mrb[0].mxu0
      %v1303 = vadd.f32 0.0, %v1302
      %v1304 = vpop.f32.mrb[0].mxu0
      %v1305 = vpop.f32.mrb[0].mxu0
      %v1306 = vadd.f32 0.0, %v1305
      %v1307 = vpop.f32.mrb[0].mxu0
      %1308 = vmatprep.mubr.bf16.mxu0 0
      %1309 = vmatmul.mubr.bf16.gmra.mrb[0].mxu0 %v832
      %v1310 = vpop.f32.mrb[0].mxu0
      %v1311 = vadd.f32 0.0, %v1310
      %v1312 = vpop.f32.mrb[0].mxu0
      %v1313 = vpop.f32.mrb[0].mxu0
      %v1314 = vadd.f32 0.0, %v1313
      %v1315 = vpop.f32.mrb[0].mxu0
      %1316 = vmatprep.mubr.bf16.mxu0 0
      %1317 = vmatmul.mubr.bf16.gmra.mrb[0].mxu0 %v835
      %v1318 = vpop.f32.mrb[0].mxu0
      %v1319 = vadd.f32 0.0, %v1318
      %v1320 = vpop.f32.mrb[0].mxu0
      %v1321 = vpop.f32.mrb[0].mxu0
      %v1322 = vadd.f32 0.0, %v1321
      %v1323 = vpop.f32.mrb[0].mxu0
      %1324 = vmatprep.mubr.bf16.mxu0 0
      %1325 = vmatmul.mubr.bf16.gmra.mrb[0].mxu0 %v838
      %v1326 = vpop.f32.mrb[0].mxu0
      %v1327 = vadd.f32 0.0, %v1326
      %v1328 = vpop.f32.mrb[0].mxu0
      %v1329 = vpop.f32.mrb[0].mxu0
      %v1330 = vadd.f32 0.0, %v1329
      %v1331 = vpop.f32.mrb[0].mxu0
      %1332 = vmatprep.mubr.bf16.mxu0 0
      %1333 = vmatmul.mubr.bf16.gmra.mrb[0].mxu0 %v841
      %v1334 = vpop.f32.mrb[0].mxu0
      %v1335 = vadd.f32 0.0, %v1334
      %v1336 = vpop.f32.mrb[0].mxu0
      %v1337 = vpop.f32.mrb[0].mxu0
      %v1338 = vadd.f32 0.0, %v1337
      %v1339 = vpop.f32.mrb[0].mxu0
      %1340 = vmatprep.mubr.bf16.mxu0 0
      %1341 = vmatmul.mubr.bf16.gmra.mrb[0].mxu0 %v1247
      %v1342 = vpop.f32.mrb[0].mxu0
      %v1343 = vadd.f32 0.0, %v1342
      %v1344 = vpop.f32.mrb[0].mxu0
      %v1345 = vpop.f32.mrb[0].mxu0
      %v1346 = vadd.f32 0.0, %v1345
      %v1347 = vpop.f32.mrb[0].mxu0
      %1348 = vdwg.mxu0
      %v1349 = vadd.f32 %v1217, %v1287
      %v1350 = vadd.f32 %v1218, %v1290
      %v1351 = vadd.f32 %v1219, %v1295
      %v1352 = vadd.f32 %v1220, %v1298
      %v1353 = vadd.f32 %v1221, %v1303
      %v1354 = vadd.f32 %v1222, %v1306
      %v1355 = vadd.f32 %v1223, %v1311
      %v1356 = vadd.f32 %v1224, %v1314
      %v1357 = vadd.f32 %v1225, %v1319
      %v1358 = vadd.f32 %v1226, %v1322
      %v1359 = vadd.f32 %v1227, %v1327
      %v1360 = vadd.f32 %v1228, %v1330
      %v1361 = vadd.f32 %v1229, %v1335
      %v1362 = vadd.f32 %v1230, %v1338
      %v1363 = vadd.f32 %v1231, %v1343
      %v1364 = vadd.f32 %v1232, %v1346
      %s1365 = scalar_lea.vmem %s1, 24
      %v1366 = vld [vmem:[%s1365] sm:$0xf]
      %v1369 = vunpack.c.l.b16 %v211
      %v1370 = vunpack.c.l.b16 %v212
      %v1371 = vpack.c.b16 %v1370, %v1369
      %v1373 = vsel %vm436, %v1371, 0
      %v1376 = vsel %vm461, %v1366, 0
      %1378 = vmatprep.subr.bf16.mxu0 0
      %1379 = vmatpush1.bf16.msra.mxu0 %v1376
      %1380 = vmatprep.subr.bf16.mxu0 0
      %1381 = vmatpush1.bf16.msra.mxu0 0
      %1382 = vmatprep.subr.bf16.mxu0 0
      %1383 = vmatpush1.bf16.msra.mxu0 0
      %1384 = vmatprep.subr.bf16.mxu0 0
      %1385 = vmatpush1.bf16.msra.mxu0 0
      %1386 = vmatprep.subr.bf16.mxu0 0
      %1387 = vmatpush1.bf16.msra.mxu0 0
      %1388 = vmatprep.subr.bf16.mxu0 0
      %1389 = vmatpush1.bf16.msra.mxu0 0
      %1390 = vmatprep.subr.bf16.mxu0 0
      %1391 = vmatpush1.bf16.msra.mxu0 0
      %1392 = vmatprep.subr.bf16.mxu0 0
      %1393 = vmatpush1.bf16.msra.mxu0 0
      %1394 = vmatprep.subr.bf16.mxu0 0
      %1395 = vmatpush1.bf16.msra.mxu0 0
      %1396 = vmatprep.subr.bf16.mxu0 0
      %1397 = vmatpush1.bf16.msra.mxu0 0
      %1398 = vmatprep.subr.bf16.mxu0 0
      %1399 = vmatpush1.bf16.msra.mxu0 0
      %1400 = vmatprep.subr.bf16.mxu0 0
      %1401 = vmatpush1.bf16.msra.mxu0 0
      %1402 = vmatprep.subr.bf16.mxu0 0
      %1403 = vmatpush1.bf16.msra.mxu0 0
      %1404 = vmatprep.subr.bf16.mxu0 0
      %1405 = vmatpush1.bf16.msra.mxu0 0
      %1406 = vmatprep.subr.bf16.mxu0 0
      %1407 = vmatpush1.bf16.msra.mxu0 0
      %1408 = vmatprep.subr.bf16.mxu0 0
      %1409 = vmatpush1.bf16.msra.mxu0 0
      %1410 = vmatprep.mubr.bf16.mxu0 0
      %1411 = vmatmul.mubr.bf16.gmra.mrb[0].mxu0 %v609
      %v1412 = vpop.f32.mrb[0].mxu0
      %v1413 = vadd.f32 0.0, %v1412
      %v1414 = vpop.f32.mrb[0].mxu0
      %v1415 = vpop.f32.mrb[0].mxu0
      %v1416 = vadd.f32 0.0, %v1415
      %v1417 = vpop.f32.mrb[0].mxu0
      %1418 = vmatprep.mubr.bf16.mxu0 0
      %1419 = vmatmul.mubr.bf16.gmra.mrb[0].mxu0 %v612
      %v1420 = vpop.f32.mrb[0].mxu0
      %v1421 = vadd.f32 0.0, %v1420
      %v1422 = vpop.f32.mrb[0].mxu0
      %v1423 = vpop.f32.mrb[0].mxu0
      %v1424 = vadd.f32 0.0, %v1423
      %v1425 = vpop.f32.mrb[0].mxu0
      %1426 = vmatprep.mubr.bf16.mxu0 0
      %1427 = vmatmul.mubr.bf16.gmra.mrb[0].mxu0 %v615
      %v1428 = vpop.f32.mrb[0].mxu0
      %v1429 = vadd.f32 0.0, %v1428
      %v1430 = vpop.f32.mrb[0].mxu0
      %v1431 = vpop.f32.mrb[0].mxu0
      %v1432 = vadd.f32 0.0, %v1431
      %v1433 = vpop.f32.mrb[0].mxu0
      %1434 = vmatprep.mubr.bf16.mxu0 0
      %1435 = vmatmul.mubr.bf16.gmra.mrb[0].mxu0 %v618
      %v1436 = vpop.f32.mrb[0].mxu0
      %v1437 = vadd.f32 0.0, %v1436
      %v1438 = vpop.f32.mrb[0].mxu0
      %v1439 = vpop.f32.mrb[0].mxu0
      %v1440 = vadd.f32 0.0, %v1439
      %v1441 = vpop.f32.mrb[0].mxu0
      %1442 = vmatprep.mubr.bf16.mxu0 0
      %1443 = vmatmul.mubr.bf16.gmra.mrb[0].mxu0 %v621
      %v1444 = vpop.f32.mrb[0].mxu0
      %v1445 = vadd.f32 0.0, %v1444
      %v1446 = vpop.f32.mrb[0].mxu0
      %v1447 = vpop.f32.mrb[0].mxu0
      %v1448 = vadd.f32 0.0, %v1447
      %v1449 = vpop.f32.mrb[0].mxu0
      %1450 = vmatprep.mubr.bf16.mxu0 0
      %1451 = vmatmul.mubr.bf16.gmra.mrb[0].mxu0 %v624
      %v1452 = vpop.f32.mrb[0].mxu0
      %v1453 = vadd.f32 0.0, %v1452
      %v1454 = vpop.f32.mrb[0].mxu0
      %v1455 = vpop.f32.mrb[0].mxu0
      %v1456 = vadd.f32 0.0, %v1455
      %v1457 = vpop.f32.mrb[0].mxu0
      %1458 = vmatprep.mubr.bf16.mxu0 0
      %1459 = vmatmul.mubr.bf16.gmra.mrb[0].mxu0 %v967
      %v1460 = vpop.f32.mrb[0].mxu0
      %v1461 = vadd.f32 0.0, %v1460
      %v1462 = vpop.f32.mrb[0].mxu0
      %v1463 = vpop.f32.mrb[0].mxu0
      %v1464 = vadd.f32 0.0, %v1463
      %v1465 = vpop.f32.mrb[0].mxu0
      %1466 = vmatprep.mubr.bf16.mxu0 0
      %1467 = vmatmul.mubr.bf16.gmra.mrb[0].mxu0 %v1373
      %v1468 = vpop.f32.mrb[0].mxu0
      %v1469 = vadd.f32 0.0, %v1468
      %v1470 = vpop.f32.mrb[0].mxu0
      %v1471 = vpop.f32.mrb[0].mxu0
      %v1472 = vadd.f32 0.0, %v1471
      %v1473 = vpop.f32.mrb[0].mxu0
      %1474 = vdwg.mxu0
      %v1475 = vadd.f32 %v1349, %v1413
      %v1476 = vadd.f32 %v1350, %v1416
      %v1477 = vadd.f32 %v1351, %v1421
      %v1478 = vadd.f32 %v1352, %v1424
      %v1479 = vadd.f32 %v1353, %v1429
      %v1480 = vadd.f32 %v1354, %v1432
      %v1481 = vadd.f32 %v1355, %v1437
      %v1482 = vadd.f32 %v1356, %v1440
      %v1483 = vadd.f32 %v1357, %v1445
      %v1484 = vadd.f32 %v1358, %v1448
      %v1485 = vadd.f32 %v1359, %v1453
      %v1486 = vadd.f32 %v1360, %v1456
      %v1487 = vadd.f32 %v1361, %v1461
      %v1488 = vadd.f32 %v1362, %v1464
      %v1489 = vadd.f32 %v1363, %v1469
      %v1490 = vadd.f32 %v1364, %v1472
      %v1492 = vshrl.u32 %v211, 16
      %v1494 = vrot.slane %v1492, 4
      %v1495 = vshll.u32 %v211, 16
      %v1497 = vrot.slane %v1495, 5
      %v1498 = vor.u32 %v1494, %v1497
      %v1499 = vrot.slane %v1498, 4
      %v1501 = vshll.u32 %v212, 16
      %v1503 = vrot.slane %v1501, 5
      %v1504 = vsel %vm217, %v1499, %v1503
      %v1505 = vshrl.u32 %v212, 16
      %v1507 = vrot.slane %v1505, 4
      %v1508 = vor.u32 %v1507, %v1503
      %v1509 = vrot.slane %v1508, 4
      %v1511 = vshll.u32 %v213, 16
      %v1513 = vrot.slane %v1511, 5
      %v1514 = vsel %vm217, %v1509, %v1513
      %s1515 = scalar_lea.vmem %s1, 28
      %v1516 = vld [vmem:[%s1515] sm:$0xf]
      %v1517 = vunpack.c.l.b16 %v1504
      %v1518 = vunpack.c.l.b16 %v1514
      %v1519 = vpack.c.b16 %v1518, %v1517
      %v1521 = vsel %vm436, %v1519, 0
      %v1524 = vsel %vm461, %v1516, 0
      %1526 = vmatprep.subr.bf16.mxu0 0
      %1527 = vmatpush1.bf16.msra.mxu0 %v1524
      %1528 = vmatprep.subr.bf16.mxu0 0
      %1529 = vmatpush1.bf16.msra.mxu0 0
      %1530 = vmatprep.subr.bf16.mxu0 0
      %1531 = vmatpush1.bf16.msra.mxu0 0
      %1532 = vmatprep.subr.bf16.mxu0 0
      %1533 = vmatpush1.bf16.msra.mxu0 0
      %1534 = vmatprep.subr.bf16.mxu0 0
      %1535 = vmatpush1.bf16.msra.mxu0 0
      %1536 = vmatprep.subr.bf16.mxu0 0
      %1537 = vmatpush1.bf16.msra.mxu0 0
      %1538 = vmatprep.subr.bf16.mxu0 0
      %1539 = vmatpush1.bf16.msra.mxu0 0
      %1540 = vmatprep.subr.bf16.mxu0 0
      %1541 = vmatpush1.bf16.msra.mxu0 0
      %1542 = vmatprep.subr.bf16.mxu0 0
      %1543 = vmatpush1.bf16.msra.mxu0 0
      %1544 = vmatprep.subr.bf16.mxu0 0
      %1545 = vmatpush1.bf16.msra.mxu0 0
      %1546 = vmatprep.subr.bf16.mxu0 0
      %1547 = vmatpush1.bf16.msra.mxu0 0
      %1548 = vmatprep.subr.bf16.mxu0 0
      %1549 = vmatpush1.bf16.msra.mxu0 0
      %1550 = vmatprep.subr.bf16.mxu0 0
      %1551 = vmatpush1.bf16.msra.mxu0 0
      %1552 = vmatprep.subr.bf16.mxu0 0
      %1553 = vmatpush1.bf16.msra.mxu0 0
      %1554 = vmatprep.subr.bf16.mxu0 0
      %1555 = vmatpush1.bf16.msra.mxu0 0
      %1556 = vmatprep.subr.bf16.mxu0 0
      %1557 = vmatpush1.bf16.msra.mxu0 0
      %1558 = vmatprep.mubr.bf16.mxu0 0
      %1559 = vmatmul.mubr.bf16.gmra.mrb[0].mxu0 %v444
      %v1560 = vpop.f32.mrb[0].mxu0
      %v1561 = vadd.f32 0.0, %v1560
      %v1562 = vpop.f32.mrb[0].mxu0
      %v1563 = vpop.f32.mrb[0].mxu0
      %v1564 = vadd.f32 0.0, %v1563
      %v1565 = vpop.f32.mrb[0].mxu0
      %1566 = vmatprep.mubr.bf16.mxu0 0
      %1567 = vmatmul.mubr.bf16.gmra.mrb[0].mxu0 %v447
      %v1568 = vpop.f32.mrb[0].mxu0
      %v1569 = vadd.f32 0.0, %v1568
      %v1570 = vpop.f32.mrb[0].mxu0
      %v1571 = vpop.f32.mrb[0].mxu0
      %v1572 = vadd.f32 0.0, %v1571
      %v1573 = vpop.f32.mrb[0].mxu0
      %1574 = vmatprep.mubr.bf16.mxu0 0
      %1575 = vmatmul.mubr.bf16.gmra.mrb[0].mxu0 %v450
      %v1576 = vpop.f32.mrb[0].mxu0
      %v1577 = vadd.f32 0.0, %v1576
      %v1578 = vpop.f32.mrb[0].mxu0
      %v1579 = vpop.f32.mrb[0].mxu0
      %v1580 = vadd.f32 0.0, %v1579
      %v1581 = vpop.f32.mrb[0].mxu0
      %1582 = vmatprep.mubr.bf16.mxu0 0
      %1583 = vmatmul.mubr.bf16.gmra.mrb[0].mxu0 %v453
      %v1584 = vpop.f32.mrb[0].mxu0
      %v1585 = vadd.f32 0.0, %v1584
      %v1586 = vpop.f32.mrb[0].mxu0
      %v1587 = vpop.f32.mrb[0].mxu0
      %v1588 = vadd.f32 0.0, %v1587
      %v1589 = vpop.f32.mrb[0].mxu0
      %1590 = vmatprep.mubr.bf16.mxu0 0
      %1591 = vmatmul.mubr.bf16.gmra.mrb[0].mxu0 %v456
      %v1592 = vpop.f32.mrb[0].mxu0
      %v1593 = vadd.f32 0.0, %v1592
      %v1594 = vpop.f32.mrb[0].mxu0
      %v1595 = vpop.f32.mrb[0].mxu0
      %v1596 = vadd.f32 0.0, %v1595
      %v1597 = vpop.f32.mrb[0].mxu0
      %1598 = vmatprep.mubr.bf16.mxu0 0
      %1599 = vmatmul.mubr.bf16.gmra.mrb[0].mxu0 %v459
      %v1600 = vpop.f32.mrb[0].mxu0
      %v1601 = vadd.f32 0.0, %v1600
      %v1602 = vpop.f32.mrb[0].mxu0
      %v1603 = vpop.f32.mrb[0].mxu0
      %v1604 = vadd.f32 0.0, %v1603
      %v1605 = vpop.f32.mrb[0].mxu0
      %1606 = vmatprep.mubr.bf16.mxu0 0
      %1607 = vmatmul.mubr.bf16.gmra.mrb[0].mxu0 %v1115
      %v1608 = vpop.f32.mrb[0].mxu0
      %v1609 = vadd.f32 0.0, %v1608
      %v1610 = vpop.f32.mrb[0].mxu0
      %v1611 = vpop.f32.mrb[0].mxu0
      %v1612 = vadd.f32 0.0, %v1611
      %v1613 = vpop.f32.mrb[0].mxu0
      %1614 = vmatprep.mubr.bf16.mxu0 0
      %1615 = vmatmul.mubr.bf16.gmra.mrb[0].mxu0 %v1521
      %v1616 = vpop.f32.mrb[0].mxu0
      %v1617 = vadd.f32 0.0, %v1616
      %v1618 = vpop.f32.mrb[0].mxu0
      %v1619 = vpop.f32.mrb[0].mxu0
      %v1620 = vadd.f32 0.0, %v1619
      %v1621 = vpop.f32.mrb[0].mxu0
      %1622 = vdwg.mxu0
      %v1623 = vadd.f32 %v1475, %v1561
      %v1624 = vadd.f32 %v1476, %v1564
      %v1625 = vadd.f32 %v1477, %v1569
      %v1626 = vadd.f32 %v1478, %v1572
      %v1627 = vadd.f32 %v1479, %v1577
      %v1628 = vadd.f32 %v1480, %v1580
      %v1629 = vadd.f32 %v1481, %v1585
      %v1630 = vadd.f32 %v1482, %v1588
      %v1631 = vadd.f32 %v1483, %v1593
      %v1632 = vadd.f32 %v1484, %v1596
      %v1633 = vadd.f32 %v1485, %v1601
      %v1634 = vadd.f32 %v1486, %v1604
      %v1635 = vadd.f32 %v1487, %v1609
      %v1636 = vadd.f32 %v1488, %v1612
      %v1637 = vadd.f32 %v1489, %v1617
      %v1638 = vadd.f32 %v1490, %v1620
      %v1640 = vrot.slane %v211, 5
      %v1641 = vrot.slane %v1640, 4
      %v1642 = vrot.slane %v212, 5
      %v1643 = vsel %vm736, %v1641, %v1642
      %v1644 = vrot.slane %v1642, 4
      %v1645 = vrot.slane %v213, 5
      %v1646 = vsel %vm736, %v1644, %v1645
      %s1647 = scalar_lea.vmem %s1, 32
      %v1648 = vld [vmem:[%s1647] sm:$0xf]
      %v1649 = vunpack.c.l.b16 %v1643
      %v1650 = vunpack.c.l.b16 %v1646
      %v1651 = vpack.c.b16 %v1650, %v1649
      %v1653 = vsel %vm436, %v1651, 0
      %v1656 = vsel %vm461, %v1648, 0
      %1658 = vmatprep.subr.bf16.mxu0 0
      %1659 = vmatpush1.bf16.msra.mxu0 %v1656
      %1660 = vmatprep.subr.bf16.mxu0 0
      %1661 = vmatpush1.bf16.msra.mxu0 0
      %1662 = vmatprep.subr.bf16.mxu0 0
      %1663 = vmatpush1.bf16.msra.mxu0 0
      %1664 = vmatprep.subr.bf16.mxu0 0
      %1665 = vmatpush1.bf16.msra.mxu0 0
      %1666 = vmatprep.subr.bf16.mxu0 0
      %1667 = vmatpush1.bf16.msra.mxu0 0
      %1668 = vmatprep.subr.bf16.mxu0 0
      %1669 = vmatpush1.bf16.msra.mxu0 0
      %1670 = vmatprep.subr.bf16.mxu0 0
      %1671 = vmatpush1.bf16.msra.mxu0 0
      %1672 = vmatprep.subr.bf16.mxu0 0
      %1673 = vmatpush1.bf16.msra.mxu0 0
      %1674 = vmatprep.subr.bf16.mxu0 0
      %1675 = vmatpush1.bf16.msra.mxu0 0
      %1676 = vmatprep.subr.bf16.mxu0 0
      %1677 = vmatpush1.bf16.msra.mxu0 0
      %1678 = vmatprep.subr.bf16.mxu0 0
      %1679 = vmatpush1.bf16.msra.mxu0 0
      %1680 = vmatprep.subr.bf16.mxu0 0
      %1681 = vmatpush1.bf16.msra.mxu0 0
      %1682 = vmatprep.subr.bf16.mxu0 0
      %1683 = vmatpush1.bf16.msra.mxu0 0
      %1684 = vmatprep.subr.bf16.mxu0 0
      %1685 = vmatpush1.bf16.msra.mxu0 0
      %1686 = vmatprep.subr.bf16.mxu0 0
      %1687 = vmatpush1.bf16.msra.mxu0 0
      %1688 = vmatprep.subr.bf16.mxu0 0
      %1689 = vmatpush1.bf16.msra.mxu0 0
      %1690 = vmatprep.mubr.bf16.mxu0 0
      %1691 = vmatmul.mubr.bf16.gmra.mrb[0].mxu0 %v826
      %v1692 = vpop.f32.mrb[0].mxu0
      %v1693 = vadd.f32 0.0, %v1692
      %v1694 = vpop.f32.mrb[0].mxu0
      %v1695 = vpop.f32.mrb[0].mxu0
      %v1696 = vadd.f32 0.0, %v1695
      %v1697 = vpop.f32.mrb[0].mxu0
      %1698 = vmatprep.mubr.bf16.mxu0 0
      %1699 = vmatmul.mubr.bf16.gmra.mrb[0].mxu0 %v829
      %v1700 = vpop.f32.mrb[0].mxu0
      %v1701 = vadd.f32 0.0, %v1700
      %v1702 = vpop.f32.mrb[0].mxu0
      %v1703 = vpop.f32.mrb[0].mxu0
      %v1704 = vadd.f32 0.0, %v1703
      %v1705 = vpop.f32.mrb[0].mxu0
      %1706 = vmatprep.mubr.bf16.mxu0 0
      %1707 = vmatmul.mubr.bf16.gmra.mrb[0].mxu0 %v832
      %v1708 = vpop.f32.mrb[0].mxu0
      %v1709 = vadd.f32 0.0, %v1708
      %v1710 = vpop.f32.mrb[0].mxu0
      %v1711 = vpop.f32.mrb[0].mxu0
      %v1712 = vadd.f32 0.0, %v1711
      %v1713 = vpop.f32.mrb[0].mxu0
      %1714 = vmatprep.mubr.bf16.mxu0 0
      %1715 = vmatmul.mubr.bf16.gmra.mrb[0].mxu0 %v835
      %v1716 = vpop.f32.mrb[0].mxu0
      %v1717 = vadd.f32 0.0, %v1716
      %v1718 = vpop.f32.mrb[0].mxu0
      %v1719 = vpop.f32.mrb[0].mxu0
      %v1720 = vadd.f32 0.0, %v1719
      %v1721 = vpop.f32.mrb[0].mxu0
      %1722 = vmatprep.mubr.bf16.mxu0 0
      %1723 = vmatmul.mubr.bf16.gmra.mrb[0].mxu0 %v838
      %v1724 = vpop.f32.mrb[0].mxu0
      %v1725 = vadd.f32 0.0, %v1724
      %v1726 = vpop.f32.mrb[0].mxu0
      %v1727 = vpop.f32.mrb[0].mxu0
      %v1728 = vadd.f32 0.0, %v1727
      %v1729 = vpop.f32.mrb[0].mxu0
      %1730 = vmatprep.mubr.bf16.mxu0 0
      %1731 = vmatmul.mubr.bf16.gmra.mrb[0].mxu0 %v841
      %v1732 = vpop.f32.mrb[0].mxu0
      %v1733 = vadd.f32 0.0, %v1732
      %v1734 = vpop.f32.mrb[0].mxu0
      %v1735 = vpop.f32.mrb[0].mxu0
      %v1736 = vadd.f32 0.0, %v1735
      %v1737 = vpop.f32.mrb[0].mxu0
      %1738 = vmatprep.mubr.bf16.mxu0 0
      %1739 = vmatmul.mubr.bf16.gmra.mrb[0].mxu0 %v1247
      %v1740 = vpop.f32.mrb[0].mxu0
      %v1741 = vadd.f32 0.0, %v1740
      %v1742 = vpop.f32.mrb[0].mxu0
      %v1743 = vpop.f32.mrb[0].mxu0
      %v1744 = vadd.f32 0.0, %v1743
      %v1745 = vpop.f32.mrb[0].mxu0
      %1746 = vmatprep.mubr.bf16.mxu0 0
      %1747 = vmatmul.mubr.bf16.gmra.mrb[0].mxu0 %v1653
      %v1748 = vpop.f32.mrb[0].mxu0
      %v1749 = vadd.f32 0.0, %v1748
      %v1750 = vpop.f32.mrb[0].mxu0
      %v1751 = vpop.f32.mrb[0].mxu0
      %v1752 = vadd.f32 0.0, %v1751
      %v1753 = vpop.f32.mrb[0].mxu0
      %1754 = vdwg.mxu0
      %v1755 = vadd.f32 %v1623, %v1693
      %v1756 = vadd.f32 %v1624, %v1696
      %v1757 = vadd.f32 %v1625, %v1701
      %v1758 = vadd.f32 %v1626, %v1704
      %v1759 = vadd.f32 %v1627, %v1709
      %v1760 = vadd.f32 %v1628, %v1712
      %v1761 = vadd.f32 %v1629, %v1717
      %v1762 = vadd.f32 %v1630, %v1720
      %v1763 = vadd.f32 %v1631, %v1725
      %v1764 = vadd.f32 %v1632, %v1728
      %v1765 = vadd.f32 %v1633, %v1733
      %v1766 = vadd.f32 %v1634, %v1736
      %v1767 = vadd.f32 %v1635, %v1741
      %v1768 = vadd.f32 %v1636, %v1744
      %v1769 = vadd.f32 %v1637, %v1749
      %v1770 = vadd.f32 %v1638, %v1752
      %1771 = vst [vmem:[%s177] sm:$0xff] %v1755
      %1772 = vst [vmem:[%s177 + $0x8] sm:$0xff] %v1756
      %1773 = vst [vmem:[%s177 + $0x10] sm:$0xff] %v1757
      %1774 = vst [vmem:[%s177 + $0x18] sm:$0xff] %v1758
      %1775 = vst [vmem:[%s177 + $0x20] sm:$0xff] %v1759
      %1776 = vst [vmem:[%s177 + $0x28] sm:$0xff] %v1760
      %1777 = vst [vmem:[%s177 + $0x30] sm:$0xff] %v1761
      %1778 = vst [vmem:[%s177 + $0x38] sm:$0xff] %v1762
      %1779 = vst [vmem:[%s177 + $0x40] sm:$0xff] %v1763
      %1780 = vst [vmem:[%s177 + $0x48] sm:$0xff] %v1764
      %1781 = vst [vmem:[%s177 + $0x50] sm:$0xff] %v1765
      %1782 = vst [vmem:[%s177 + $0x58] sm:$0xff] %v1766
      %1783 = vst [vmem:[%s177 + $0x60] sm:$0xff] %v1767
      %1784 = vst [vmem:[%s177 + $0x68] sm:$0xff] %v1768
      %1785 = vst [vmem:[%s177 + $0x70] sm:$0xff] %v1769
      %1786 = vst [vmem:[%s177 + $0x78] sm:$0xff] %v1770
      %v1787 = vadd.f32 %v1755, %v1756
      %v1788 = vadd.f32 %v1787, %v1757
      %v1789 = vadd.f32 %v1788, %v1758
      %v1790 = vadd.f32 %v1789, %v1759
      %v1791 = vadd.f32 %v1790, %v1760
      %v1792 = vadd.f32 %v1791, %v1761
      %v1793 = vadd.f32 %v1792, %v1762
      %v1794 = vadd.f32 %v1793, %v1763
      %v1795 = vadd.f32 %v1794, %v1764
      %v1796 = vadd.f32 %v1795, %v1765
      %v1797 = vadd.f32 %v1796, %v1766
      %v1798 = vadd.f32 %v1797, %v1767
      %v1799 = vadd.f32 %v1798, %v1768
      %v1800 = vadd.f32 %v1799, %v1769
      %v1801 = vadd.f32 %v1800, %v1770
      %v1802 = vrot.slane %v1801, 4
      %v1803 = vadd.f32 %v1801, %v1802
      %v1804 = vrot.slane %v1803, 2
      %v1805 = vadd.f32 %v1803, %v1804
      %v1806 = vrot.slane %v1805, 1
      %v1807 = vadd.f32 %v1805, %v1806
      %v1808 = vmul.f32 %v1755, %v1755
      %v1809 = vmul.f32 %v1756, %v1756
      %v1810 = vmul.f32 %v1757, %v1757
      %v1811 = vmul.f32 %v1758, %v1758
      %v1812 = vmul.f32 %v1759, %v1759
      %v1813 = vmul.f32 %v1760, %v1760
      %v1814 = vmul.f32 %v1761, %v1761
      %v1815 = vmul.f32 %v1762, %v1762
      %v1816 = vmul.f32 %v1763, %v1763
      %v1817 = vmul.f32 %v1764, %v1764
      %v1818 = vmul.f32 %v1765, %v1765
      %v1819 = vmul.f32 %v1766, %v1766
      %v1820 = vmul.f32 %v1767, %v1767
      %v1821 = vmul.f32 %v1768, %v1768
      %v1822 = vmul.f32 %v1769, %v1769
      %v1823 = vmul.f32 %v1770, %v1770
      %v1824 = vadd.f32 %v1808, %v1809
      %v1825 = vadd.f32 %v1824, %v1810
      %v1826 = vadd.f32 %v1825, %v1811
      %v1827 = vadd.f32 %v1826, %v1812
      %v1828 = vadd.f32 %v1827, %v1813
      %v1829 = vadd.f32 %v1828, %v1814
      %v1830 = vadd.f32 %v1829, %v1815
      %v1831 = vadd.f32 %v1830, %v1816
      %v1832 = vadd.f32 %v1831, %v1817
      %v1833 = vadd.f32 %v1832, %v1818
      %v1834 = vadd.f32 %v1833, %v1819
      %v1835 = vadd.f32 %v1834, %v1820
      %v1836 = vadd.f32 %v1835, %v1821
      %v1837 = vadd.f32 %v1836, %v1822
      %v1838 = vadd.f32 %v1837, %v1823
      %v1839 = vrot.slane %v1838, 4
      %v1840 = vadd.f32 %v1838, %v1839
      %v1841 = vrot.slane %v1840, 2
      %v1842 = vadd.f32 %v1840, %v1841
      %v1843 = vrot.slane %v1842, 1
      %v1844 = vadd.f32 %v1842, %v1843
      %vm1845 = vcmask 1040384
      %v1846 = vsel %vm1845, %v1807, %v1844
      %1847 = vst [vmem:[%s182] sm:$0x3] %v1846
      %s1848 = smul.u32 16, %s15
      %p1849 = scmp.lt.s32.totalorder %s1848, 63
      %s1850 = scalar_select %p1849, %s1848, 63
      %s1851 = smul.addr %s1850, 8
      %s1852 = scalar_lea.vmem %s2, %s1851
      %p1853 = scmp.lt.s32.totalorder %s15, 3
      %s1854 = scalar_select %p1853, %s15, 3
      %s1855 = smul.addr %s1854, 2
      %s1856 = scalar_lea.vmem %s3, %s1855
      // Predicated region
      $region29: #{conv_block_forward.6} parent=27 // pred_check
        %p1857 = pneg %p80
      $region30: #{conv_block_forward.6} parent=27 // pred_check_branch
        %1859 = sbr.rel (%p1857) target = $region32
      $region31: #{conv_block_forward.6} parent=27 // pred_region
        %s1860 = smul.u32 16, %s15
      $region32: #{conv_block_forward.6} parent=27 // pred_fallthru
        _
      // Predicated region
      $region33: #{conv_block_forward.6} parent=27 // pred_check
        %p1861 = pneg %p106
      $region34: #{conv_block_forward.6} parent=27 // pred_check_branch
        %1863 = sbr.rel (%p1861) target = $region36
      $region35: #{conv_block_forward.6} parent=27 // pred_region
        _
      $region36: #{conv_block_forward.6} parent=27 // pred_fallthru
        _
    $region28: #{conv_block_forward.6} parent=5 // pred_fallthru
      _
    %p1864 = scmp.le.s32.totalorder 2, %s10
    // Predicated region
    $region37: #{conv_block_forward.6} parent=5 // pred_check
      %p1865 = pneg %p1864
    $region38: #{conv_block_forward.6} parent=5 // pred_check_branch
      %1867 = sbr.rel (%p1865) target = $region40
    $region39: #{conv_block_forward.6} parent=5 // pred_region
      %s1868 = ssub.s32 %s10, 2
      // Predicated region
      $region41: #{conv_block_forward.6} parent=39 // pred_check
        %p1869 = pneg %p86
      $region42: #{conv_block_forward.6} parent=39 // pred_check_branch
        %1871 = sbr.rel (%p1869) target = $region44
      $region43: #{conv_block_forward.6} parent=39 // pred_region
        %s1872 = smul.u32 16, %s16
        %p1873 = scmp.lt.s32.totalorder %s1872, 63
        %s1874 = scalar_select %p1873, %s1872, 63
        %s1875 = smul.addr %s1874, 8
        %s1876 = scalar_lea.vmem %s2, %s1875
      $region44: #{conv_block_forward.6} parent=39 // pred_fallthru
        _
      // Predicated region
      $region45: #{conv_block_forward.6} parent=39 // pred_check
        %p1877 = pneg %p112
      $region46: #{conv_block_forward.6} parent=39 // pred_check_branch
        %1879 = sbr.rel (%p1877) target = $region48
      $region47: #{conv_block_forward.6} parent=39 // pred_region
        %p1880 = scmp.lt.s32.totalorder %s16, 3
        %s1881 = scalar_select %p1880, %s16, 3
        %s1882 = smul.addr %s1881, 2
        %s1883 = scalar_lea.vmem %s3, %s1882
      $region48: #{conv_block_forward.6} parent=39 // pred_fallthru
        _
    $region40: #{conv_block_forward.6} parent=5 // pred_fallthru
      _
  $region6: #{conv_block_forward.6} parent=0 // loop_footer
    %s14 = sadd.s32 1, %s10
  $region7: #{conv_block_forward.6} parent=0 // loop_footer_branch
    %9 = sbr.rel target = $region3
  $region8: #{conv_block_forward.6} parent=0 // loop_exit
    _

</llo_original>
